<compile_context>
chip_gen: v7x
topology: tpu7x:2x2x1
jax: 0.10.0
libtpu: 0.0.40
codegen_flags: <defaults>
</compile_context>

<pallas_src>
import functools
import math

import jax
import jax.numpy as jnp
from jax.experimental import pallas as pl
from jax.experimental.pallas import tpu as pltpu

_LN_EPS = 1e-5   # torch.nn.LayerNorm default


# ------------------------------ tiling helpers -------------------------------

def _largest_divisor(n, target, align=1):
    """Largest divisor of n that is <= target and a multiple of `align`.
    Falls back to n (full extent) if no such divisor exists."""
    target = min(n, max(align, target))
    for cand in range(target, 0, -1):
        if n % cand == 0 and cand % align == 0:
            return cand
    return n


def _pick_block_m(m, target=512, align=8):
    """M tile: big (512-target, mem-bound roofline) but keep >=2 grid steps on
    the parallel axis so v7x's two TensorCores both get work."""
    if m >= 2 * align:
        target = min(target, m // 2)
    return _largest_divisor(m, target, align)


@functools.lru_cache(maxsize=None)
def _vmem_limit_bytes():
    """Generation-aware VMEM budget: ~48 MiB on v7x (64 MiB physical),
    ~96-100 MiB on v5e/v6e (128 MiB physical)."""
    cap = 128 * 1024 * 1024
    try:
        info = pltpu.get_tpu_info()
        cap = int(getattr(info, "vmem_capacity_bytes", cap))
    except Exception:
        pass
    return int(max(32 * 1024 * 1024,
                   min(cap - 16 * 1024 * 1024, 100 * 1024 * 1024)))


def _compiler_params(semantics):
    return pltpu.CompilerParams(dimension_semantics=semantics,
                                vmem_limit_bytes=_vmem_limit_bytes())


# ----------------------- fused QKV projection (one matmul) -------------------

def _linear_bias_kernel(x_ref, w_ref, b_ref, o_ref):
    x = x_ref[...].astype(w_ref.dtype)
    o_ref[...] = (jnp.dot(x, w_ref[...], preferred_element_type=jnp.float32)
                  + b_ref[...]).astype(o_ref.dtype)


def qkv_proj(x, w_qkv, b_qkv, *, block_m=None):
    """x:(M,D); w_qkv:(D,3D) = [wq^T | wk^T | wv^T]; b_qkv:(1,3D). -> (M,3D)."""
    M, D = x.shape
    N = w_qkv.shape[1]
    tm = block_m if block_m is not None else _pick_block_m(M)
    assert M % tm == 0, f"block_m={tm} must divide M={M}"
    return pl.pallas_call(
        _linear_bias_kernel,
        out_shape=jax.ShapeDtypeStruct((M, N), x.dtype),
        grid=(M // tm,),
        in_specs=[pl.BlockSpec((tm, D), lambda i: (i, 0)),
                  pl.BlockSpec((D, N), lambda i: (0, 0)),   # resident weight
                  pl.BlockSpec((1, N), lambda i: (0, 0))],  # resident bias
        out_specs=pl.BlockSpec((tm, N), lambda i: (i, 0)),  # lane-dense 3D-wide
        compiler_params=_compiler_params(("parallel",)),
    )(x, w_qkv, b_qkv)


# -------------------- flash attention (multi-head blocks) --------------------

def _flash_attn_kernel(q_ref, k_ref, v_ref, o_ref, m_sc, l_sc, acc_sc, *, scale):
    kv = pl.program_id(2)

    @pl.when(kv == 0)
    def _():
        m_sc[...] = jnp.full_like(m_sc, -jnp.inf)
        l_sc[...] = jnp.zeros_like(l_sc)
        acc_sc[...] = jnp.zeros_like(acc_sc)

    q = q_ref[...]
    k = k_ref[...]
    v = v_ref[...]
    # scores for a (heads, q_tile, kv_tile) block; accumulate in f32.
    s = jnp.einsum("bqd,bkd->bqk", q, k,
                   preferred_element_type=jnp.float32) * scale
    m_prev = m_sc[...]
    m_new = jnp.maximum(m_prev, jnp.max(s, axis=-1, keepdims=True))
    alpha = jnp.exp(m_prev - m_new)
    p = jnp.exp(s - m_new)
    l_sc[...] = alpha * l_sc[...] + jnp.sum(p, axis=-1, keepdims=True)
    acc_sc[...] = alpha * acc_sc[...] + jnp.einsum(
        "bqk,bkd->bqd", p.astype(v.dtype), v,
        preferred_element_type=jnp.float32)
    m_sc[...] = m_new

    @pl.when(kv == pl.num_programs(2) - 1)
    def _():
        # approx reciprocal (EUP slot); ~1e-3 rel err, fine for this tolerance.
        inv_l = pl.reciprocal(l_sc[...], approx=True)
        o_ref[...] = (acc_sc[...] * inv_l).astype(o_ref.dtype)


def flash_attention(q, k, v, *, block_q=None, block_kv=None):
    """q,k,v: (B*H, S, dph) -> softmax(q k^T / sqrt(dph)) v, online-softmax."""
    BH, S, DPH = q.shape
    # 256-wide tiles fill the v6e/v7x MXU (use 128 on v5e via block_q/block_kv).
    tq = block_q if block_q is not None else _largest_divisor(S, 256, 8)
    tk = block_kv if block_kv is not None else _largest_divisor(S, 256, 8)
    assert S % tq == 0 and S % tk == 0, f"block_q/kv must divide S={S}"
    # Bound the f32 score tile (hb, tq, tk) to ~512 KiB; keep >=2 parallel steps.
    max_hb = max(1, (512 * 1024) // (tq * tk * 4))
    if BH >= 2:
        max_hb = min(max_hb, BH // 2)
    hb = _largest_divisor(BH, max_hb, 1)
    assert BH % hb == 0

    kern = functools.partial(_flash_attn_kernel, scale=1.0 / math.sqrt(DPH))
    q_spec = pl.BlockSpec((hb, tq, DPH), lambda b, qi, ki: (b, qi, 0))
    kv_spec = pl.BlockSpec((hb, tk, DPH), lambda b, qi, ki: (b, ki, 0))
    return pl.pallas_call(
        kern,
        out_shape=jax.ShapeDtypeStruct((BH, S, DPH), q.dtype),
        grid=(BH // hb, S // tq, S // tk),
        in_specs=[q_spec, kv_spec, kv_spec],
        out_specs=q_spec,
        scratch_shapes=[pltpu.VMEM((hb, tq, 1), jnp.float32),    # running max
                        pltpu.VMEM((hb, tq, 1), jnp.float32),    # running sum
                        pltpu.VMEM((hb, tq, DPH), jnp.float32)], # accumulator
        compiler_params=_compiler_params(("parallel", "parallel", "arbitrary")),
    )(q, k, v)


# --------------- output projection + residual + LayerNorm (fused) ------------

def _layernorm(z, gamma, beta, eps):
    mean = jnp.mean(z, axis=-1, keepdims=True)
    var = jnp.mean(jnp.square(z - mean), axis=-1, keepdims=True)
    return (z - mean) * jax.lax.rsqrt(var + eps) * gamma + beta


def _proj_res_ln_kernel(x_ref, w_ref, b_ref, res_ref, g_ref, be_ref, o_ref, *, eps):
    x = x_ref[...].astype(w_ref.dtype)
    y = jnp.dot(x, w_ref[...], preferred_element_type=jnp.float32) + b_ref[...]
    z = y + res_ref[...].astype(jnp.float32)
    o_ref[...] = _layernorm(z, g_ref[...], be_ref[...], eps).astype(o_ref.dtype)


def proj_res_ln(x, w_t, b, res, gamma, beta, *, eps=_LN_EPS, block_m=None):
    M, K = x.shape
    N = w_t.shape[1]
    tm = block_m if block_m is not None else _pick_block_m(M)
    assert M % tm == 0, f"block_m={tm} must divide M={M}"
    kern = functools.partial(_proj_res_ln_kernel, eps=eps)
    return pl.pallas_call(
        kern,
        out_shape=jax.ShapeDtypeStruct((M, N), x.dtype),
        grid=(M // tm,),
        in_specs=[pl.BlockSpec((tm, K), lambda i: (i, 0)),
                  pl.BlockSpec((K, N), lambda i: (0, 0)),   # resident weight
                  pl.BlockSpec((1, N), lambda i: (0, 0)),
                  pl.BlockSpec((tm, N), lambda i: (i, 0)),
                  pl.BlockSpec((1, N), lambda i: (0, 0)),
                  pl.BlockSpec((1, N), lambda i: (0, 0))],
        out_specs=pl.BlockSpec((tm, N), lambda i: (i, 0)),
        compiler_params=_compiler_params(("parallel",)),
    )(x, w_t, b, res, gamma, beta)


# ------------------- feed-forward block (DFF-tiled reduction) ----------------

def _ffn_kernel(x_ref, w1_ref, b1_ref, w2_ref, b2_ref, g_ref, be_ref, o_ref,
                acc_ref, *, eps):
    # LN( W2 @ relu(W1 x + b1) + b2 + x ), DFF streamed in chunks on axis 1.
    j = pl.program_id(1)

    @pl.when(j == 0)
    def _():
        acc_ref[...] = jnp.zeros_like(acc_ref)

    x = x_ref[...]
    h = jnp.dot(x.astype(w1_ref.dtype), w1_ref[...],
                preferred_element_type=jnp.float32) + b1_ref[...]
    h = jnp.maximum(h, 0.0)
    acc_ref[...] += jnp.dot(h.astype(w2_ref.dtype), w2_ref[...],
                            preferred_element_type=jnp.float32)

    @pl.when(j == pl.num_programs(1) - 1)
    def _():
        z = acc_ref[...] + b2_ref[...] + x.astype(jnp.float32)
        o_ref[...] = _layernorm(z, g_ref[...], be_ref[...], eps).astype(o_ref.dtype)


def feedforward(x, w1_t, b1, w2_t, b2, gamma, beta, *, eps=_LN_EPS,
                out_dtype=None, block_m=None, block_dff=None):
    M, D = x.shape
    DFF = w1_t.shape[1]
    tm = block_m if block_m is not None else _pick_block_m(M)
    if block_dff is not None:
        tdff = block_dff
    elif DFF % 128 == 0:
        tdff = _largest_divisor(DFF, 512, 128)   # lane-aligned DFF chunks
    else:
        tdff = DFF                               # full extent (small dff)
    assert M % tm == 0, f"block_m={tm} must divide M={M}"
    assert DFF % tdff == 0, f"block_dff={tdff} must divide DFF={DFF}"
    odt = x.dtype if out_dtype is None else out_dtype
    kern = functools.partial(_ffn_kernel, eps=eps)
    return pl.pallas_call(
        kern,
        out_shape=jax.ShapeDtypeStruct((M, D), odt),
        grid=(M // tm, DFF // tdff),
        in_specs=[pl.BlockSpec((tm, D), lambda i, j: (i, 0)),
                  pl.BlockSpec((D, tdff), lambda i, j: (0, j)),   # streamed W1 chunk
                  pl.BlockSpec((1, tdff), lambda i, j: (0, j)),
                  pl.BlockSpec((tdff, D), lambda i, j: (j, 0)),   # streamed W2 chunk
                  pl.BlockSpec((1, D), lambda i, j: (0, 0)),
                  pl.BlockSpec((1, D), lambda i, j: (0, 0)),
                  pl.BlockSpec((1, D), lambda i, j: (0, 0))],
        out_specs=pl.BlockSpec((tm, D), lambda i, j: (i, 0)),
        scratch_shapes=[pltpu.VMEM((tm, D), jnp.float32)],        # f32 accumulator
        compiler_params=_compiler_params(("parallel", "arbitrary")),
    )(x, w1_t, b1, w2_t, b2, gamma, beta)


# ------------------------------ parameter prep --------------------------------

def prepare_params(params, matmul_dtype=None):
    """One-time host-side prep: transpose to (in,out), concat QKV into one wide
    weight, reshape biases, and (optionally) cast weights to the MXU dtype."""
    wdt = jnp.float32 if matmul_dtype is None else matmul_dtype
    D = params["wq"].shape[1]
    return {
        "w_qkv": jnp.concatenate(
            [params["wq"].T, params["wk"].T, params["wv"].T], axis=1).astype(wdt),
        "b_qkv": jnp.concatenate(
            [params["bq"], params["bk"], params["bv"]]).reshape(1, 3 * D).astype(jnp.float32),
        "wf": params["wf"].T.astype(wdt),
        "bf": params["bf"].reshape(1, -1).astype(jnp.float32),
        "w1": params["w1"].T.astype(wdt),
        "b1": params["b1"].reshape(1, -1).astype(jnp.float32),
        "w2": params["w2"].T.astype(wdt),
        "b2": params["b2"].reshape(1, -1).astype(jnp.float32),
        "ln1_g": params["ln1_g"].reshape(1, -1).astype(jnp.float32),
        "ln1_b": params["ln1_b"].reshape(1, -1).astype(jnp.float32),
        "ln2_g": params["ln2_g"].reshape(1, -1).astype(jnp.float32),
        "ln2_b": params["ln2_b"].reshape(1, -1).astype(jnp.float32),
    }


# -------------------------------- Encoder layer --------------------------------

def encoder_layer(x, prepped, headnum, *, block_m=None, block_q=None,
                  block_kv=None, block_dff=None):
    """x: (B, S, D). Reproduces Encoderlayer.forward (eval / no dropout).
    Intermediates run in the weights' dtype (bf16 if prepare_params did so)."""
    B, S, D = x.shape
    dph = D // headnum
    io_dtype = prepped["w_qkv"].dtype
    x2d = x.reshape(B * S, D).astype(io_dtype)

    # Fused Q/K/V projection: one matmul, one lane-dense (M, 3D) store.
    qkv = qkv_proj(x2d, prepped["w_qkv"], prepped["b_qkv"], block_m=block_m)
    q_cat, k_cat, v_cat = qkv[:, :D], qkv[:, D:2 * D], qkv[:, 2 * D:]

    # PyTorch's .view(B*h, -1, dph): flat contiguous reshape (glue).
    q_h = q_cat.reshape(B * headnum, S, dph)
    k_h = k_cat.reshape(B * headnum, S, dph)
    v_h = v_cat.reshape(B * headnum, S, dph)

    att = flash_attention(q_h, k_h, v_h, block_q=block_q, block_kv=block_kv)
    att2d = att.reshape(B * S, D)                               # .view(B,-1,D)

    # final linear + residual (multihead input V == x) + LayerNorm, fused.
    attn_out = proj_res_ln(att2d, prepped["wf"], prepped["bf"], x2d,
                           prepped["ln1_g"], prepped["ln1_b"], block_m=block_m)

    # Feedforward block (w1 -> relu -> w2 streamed over DFF -> +res -> LN).
    ffn_out = feedforward(attn_out, prepped["w1"], prepped["b1"],
                          prepped["w2"], prepped["b2"],
                          prepped["ln2_g"], prepped["ln2_b"],
                          out_dtype=x.dtype, block_m=block_m, block_dff=block_dff)
    return ffn_out.reshape(B, S, D)


# --------------------------- pure-JAX reference check --------------------------

def _ref_encoder(x, params, headnum, eps=_LN_EPS):
    hp = jax.lax.Precision.HIGHEST

    def lin(t, w, b):
        return jnp.einsum("mk,nk->mn", t, w, precision=hp) + b

    def ln(z, g, b):
        m = jnp.mean(z, -1, keepdims=True)
        v = jnp.mean((z - m) ** 2, -1, keepdims=True)
        return (z - m) / jnp.sqrt(v + eps) * g + b

    B, S, D = x.shape
    dph = D // headnum
    x2d = x.reshape(B * S, D)
    q = lin(x2d, params["wq"], params["bq"]).reshape(B * headnum, S, dph)
    k = lin(x2d, params["wk"], params["bk"]).reshape(B * headnum, S, dph)
    v = lin(x2d, params["wv"], params["bv"]).reshape(B * headnum, S, dph)
    s = jnp.einsum("bqd,bkd->bqk", q, k, precision=hp) / math.sqrt(dph)
    p = jax.nn.softmax(s, axis=-1)
    att = jnp.einsum("bqk,bkd->bqd", p, v, precision=hp).reshape(B * S, D)
    o = lin(att, params["wf"], params["bf"])
    o = ln(o + x2d, params["ln1_g"], params["ln1_b"])
    h = jnp.maximum(lin(o, params["w1"], params["b1"]), 0.0)
    f = lin(h, params["w2"], params["b2"])
    f = ln(f + o, params["ln2_g"], params["ln2_b"])
    return f.reshape(B, S, D)


# ------------------------------------ main -------------------------------------

def _init_linear(key, in_dim, out_dim):
    kw, kb = jax.random.split(key)
    bound = 1.0 / math.sqrt(in_dim)
    w = jax.random.uniform(kw, (out_dim, in_dim), jnp.float32, -bound, bound)
    b = jax.random.uniform(kb, (out_dim,), jnp.float32, -bound, bound)
    return w, b


if __name__ == "__main__":
    B, S, D, H, DFF = 2, 16, 32, 8, 256   # modeldim=32, heads=8, dff=256

    key = jax.random.PRNGKey(0)
    kx, kq, kk, kv, kf, k1, k2 = jax.random.split(key, 7)

    x = jax.random.normal(kx, (B, S, D), jnp.float32)

    params = {}
    params["wq"], params["bq"] = _init_linear(kq, D, D)
    params["wk"], params["bk"] = _init_linear(kk, D, D)
    params["wv"], params["bv"] = _init_linear(kv, D, D)
    params["wf"], params["bf"] = _init_linear(kf, D, D)
    params["w1"], params["b1"] = _init_linear(k1, D, DFF)
    params["w2"], params["b2"] = _init_linear(k2, DFF, D)
    params["ln1_g"] = jnp.ones((D,), jnp.float32)
    params["ln1_b"] = jnp.zeros((D,), jnp.float32)
    params["ln2_g"] = jnp.ones((D,), jnp.float32)
    params["ln2_b"] = jnp.zeros((D,), jnp.float32)

    # f32 path with small block overrides so the demo exercises the tiled /
    # multi-step code paths (M tiling, multi-KV flash steps, DFF-chunked FFN).
    prepped = prepare_params(params)
    fwd = jax.jit(functools.partial(encoder_layer, headnum=H,
                                    block_m=16, block_q=8, block_kv=8,
                                    block_dff=128))
    out = jax.block_until_ready(fwd(x, prepped))

    ref = _ref_encoder(x, params, H)
    assert out.shape == (B, S, D)
    max_err = float(jnp.max(jnp.abs(out - ref)))
    assert jnp.allclose(out, ref, atol=1e-2, rtol=1e-2), max_err

    # bf16 MXU path (recommended production setting per perf review): weights
    # and inter-kernel intermediates in bf16, f32 accumulation + f32 LayerNorm.
    prepped_bf16 = prepare_params(params, matmul_dtype=jnp.bfloat16)
    fwd_bf16 = jax.jit(functools.partial(encoder_layer, headnum=H))
    out_bf16 = jax.block_until_ready(fwd_bf16(x, prepped_bf16))
    assert out_bf16.shape == (B, S, D)
    assert bool(jnp.all(jnp.isfinite(out_bf16)))

    print("KERNEL_OK")
</pallas_src>

<mosaic_0001>
module attributes {stable_mosaic.version = 11 : i64} {
  func.func @_linear_bias_kernel(%arg0: i32, %arg1: memref<16x32xf32, #tpu.memory_space<vmem>>, %arg2: memref<32x96xf32, #tpu.memory_space<vmem>>, %arg3: memref<1x96xf32, #tpu.memory_space<vmem>>, %arg4: memref<16x96xf32, #tpu.memory_space<vmem>>) attributes {dimension_semantics = [#tpu.dimension_semantics<parallel>], iteration_bounds = array<i64: 2>, scalar_prefetch = 0 : i64, scratch_operands = 0 : i64, tpu.core_type = #tpu.core_type<tc>, window_params = [{transform_indices = @transform_0, window_bounds = array<i64: 16, 32>}, {pipeline_mode = #tpu.pipeline_mode<synchronous>, transform_indices = @transform_1, window_bounds = array<i64: 32, 96>}, {pipeline_mode = #tpu.pipeline_mode<synchronous>, transform_indices = @transform_2, window_bounds = array<i64: 1, 96>}, {transform_indices = @transform_3, window_bounds = array<i64: 16, 96>}]} {
    %c0 = arith.constant 0 : index
    %c0_0 = arith.constant 0 : index
    %0 = vector.load %arg1[%c0, %c0_0] : memref<16x32xf32, #tpu.memory_space<vmem>>, vector<16x32xf32>
    %c0_1 = arith.constant 0 : index
    %c0_2 = arith.constant 0 : index
    %1 = vector.load %arg2[%c0_1, %c0_2] : memref<32x96xf32, #tpu.memory_space<vmem>>, vector<32x96xf32>
    %cst = arith.constant dense<0.000000e+00> : vector<16x96xf32>
    %2 = tpu.matmul %0, %1, %cst {dimension_numbers = #tpu.dot_dimension_numbers<[1], [0], [0], [1], [0, 0, 1, 1], [], []>} : vector<16x32xf32>, vector<32x96xf32>, vector<16x96xf32> -> vector<16x96xf32>
    %c0_3 = arith.constant 0 : index
    %c0_4 = arith.constant 0 : index
    %3 = vector.load %arg3[%c0_3, %c0_4] : memref<1x96xf32, #tpu.memory_space<vmem>>, vector<1x96xf32>
    %4 = vector.broadcast %3 : vector<1x96xf32> to vector<16x96xf32>
    %5 = arith.addf %2, %4 : vector<16x96xf32>
    %c0_5 = arith.constant 0 : index
    %c0_6 = arith.constant 0 : index
    %6 = vector.load %arg4[%c0_5, %c0_6] : memref<16x96xf32, #tpu.memory_space<vmem>>, vector<16x96xf32>
    tpu.vector_store %arg4[%c0_5, %c0_6], %5 {strides = array<i32>} : memref<16x96xf32, #tpu.memory_space<vmem>>, vector<16x96xf32>,
    return
  }
  func.func @transform_0(%arg0: i32) -> (i32, i32) {
    %c0_i32 = arith.constant 0 : i32
    %c0_i32_0 = arith.constant 0 : i32
    return %arg0, %c0_i32 : i32, i32
  }
  func.func @transform_1(%arg0: i32) -> (i32, i32) {
    %c0_i32 = arith.constant 0 : i32
    %c0_i32_0 = arith.constant 0 : i32
    %c0_i32_1 = arith.constant 0 : i32
    return %c0_i32, %c0_i32_0 : i32, i32
  }
  func.func @transform_2(%arg0: i32) -> (i32, i32) {
    %c0_i32 = arith.constant 0 : i32
    %c0_i32_0 = arith.constant 0 : i32
    %c0_i32_1 = arith.constant 0 : i32
    return %c0_i32, %c0_i32_0 : i32, i32
  }
  func.func @transform_3(%arg0: i32) -> (i32, i32) {
    %c0_i32 = arith.constant 0 : i32
    %c0_i32_0 = arith.constant 0 : i32
    return %arg0, %c0_i32 : i32, i32
  }
}

module attributes {stable_mosaic.version = 11 : i64} {
  func.func @_flash_attn_kernel(%arg0: i32, %arg1: i32, %arg2: i32, %arg3: memref<8x8x4xf32, #tpu.memory_space<vmem>>, %arg4: memref<8x8x4xf32, #tpu.memory_space<vmem>>, %arg5: memref<8x8x4xf32, #tpu.memory_space<vmem>>, %arg6: memref<8x8x4xf32, #tpu.memory_space<vmem>>, %arg7: memref<8x8x1xf32, #tpu.memory_space<vmem>>, %arg8: memref<8x8x1xf32, #tpu.memory_space<vmem>>, %arg9: memref<8x8x4xf32, #tpu.memory_space<vmem>>) attributes {dimension_semantics = [#tpu.dimension_semantics<parallel>, #tpu.dimension_semantics<parallel>, #tpu.dimension_semantics<arbitrary>], iteration_bounds = array<i64: 2, 2, 2>, scalar_prefetch = 0 : i64, scratch_operands = 3 : i64, tpu.core_type = #tpu.core_type<tc>, window_params = [{transform_indices = @transform_0, window_bounds = array<i64: 8, 8, 4>}, {transform_indices = @transform_1, window_bounds = array<i64: 8, 8, 4>}, {transform_indices = @transform_2, window_bounds = array<i64: 8, 8, 4>}, {transform_indices = @transform_3, window_bounds = array<i64: 8, 8, 4>}]} {
    %c0_i32 = arith.constant 0 : i32
    %0 = arith.cmpi eq, %arg2, %c0_i32 : i32
    %1 = arith.extui %0 : i1 to i32
    %c0_i32_0 = arith.constant 0 : i32
    %2 = arith.cmpi ne, %1, %c0_i32_0 : i32
    scf.if %2 {
      %cst_32 = arith.constant 0xFF800000 : f32
      %34 = vector.broadcast %cst_32 : f32 to vector<8x8x1xf32>
      %c0_33 = arith.constant 0 : index
      %c0_34 = arith.constant 0 : index
      %c0_35 = arith.constant 0 : index
      %35 = vector.load %arg7[%c0_33, %c0_34, %c0_35] : memref<8x8x1xf32, #tpu.memory_space<vmem>>, vector<8x8x1xf32>
      tpu.vector_store %arg7[%c0_33, %c0_34, %c0_35], %34 {strides = array<i32>} : memref<8x8x1xf32, #tpu.memory_space<vmem>>, vector<8x8x1xf32>,
      %cst_36 = arith.constant 0.000000e+00 : f32
      %36 = vector.broadcast %cst_36 : f32 to vector<8x8x1xf32>
      %c0_37 = arith.constant 0 : index
      %c0_38 = arith.constant 0 : index
      %c0_39 = arith.constant 0 : index
      %37 = vector.load %arg8[%c0_37, %c0_38, %c0_39] : memref<8x8x1xf32, #tpu.memory_space<vmem>>, vector<8x8x1xf32>
      tpu.vector_store %arg8[%c0_37, %c0_38, %c0_39], %36 {strides = array<i32>} : memref<8x8x1xf32, #tpu.memory_space<vmem>>, vector<8x8x1xf32>,
      %cst_40 = arith.constant 0.000000e+00 : f32
      %38 = vector.broadcast %cst_40 : f32 to vector<8x8x4xf32>
      %c0_41 = arith.constant 0 : index
      %c0_42 = arith.constant 0 : index
      %c0_43 = arith.constant 0 : index
      %39 = vector.load %arg9[%c0_41, %c0_42, %c0_43] : memref<8x8x4xf32, #tpu.memory_space<vmem>>, vector<8x8x4xf32>
      tpu.vector_store %arg9[%c0_41, %c0_42, %c0_43], %38 {strides = array<i32>} : memref<8x8x4xf32, #tpu.memory_space<vmem>>, vector<8x8x4xf32>,
    } else {
    }
    %c0 = arith.constant 0 : index
    %c0_1 = arith.constant 0 : index
    %c0_2 = arith.constant 0 : index
    %3 = vector.load %arg3[%c0, %c0_1, %c0_2] : memref<8x8x4xf32, #tpu.memory_space<vmem>>, vector<8x8x4xf32>
    %c0_3 = arith.constant 0 : index
    %c0_4 = arith.constant 0 : index
    %c0_5 = arith.constant 0 : index
    %4 = vector.load %arg4[%c0_3, %c0_4, %c0_5] : memref<8x8x4xf32, #tpu.memory_space<vmem>>, vector<8x8x4xf32>
    %c0_6 = arith.constant 0 : index
    %c0_7 = arith.constant 0 : index
    %c0_8 = arith.constant 0 : index
    %5 = vector.load %arg5[%c0_6, %c0_7, %c0_8] : memref<8x8x4xf32, #tpu.memory_space<vmem>>, vector<8x8x4xf32>
    "tpu.trace_start"() <{level = 10 : i32, message = "bqd,bkd->bqk"}> : () -> ()
    %cst = arith.constant dense<0.000000e+00> : vector<8x8x8xf32>
    %6 = tpu.matmul %3, %4, %cst {dimension_numbers = #tpu.dot_dimension_numbers<[2], [2], [1], [1], [0, 0, 0, 1, 1, 1], [0], [0]>} : vector<8x8x4xf32>, vector<8x8x4xf32>, vector<8x8x8xf32> -> vector<8x8x8xf32>
    "tpu.trace_stop"() : () -> ()
    %cst_9 = arith.constant 5.000000e-01 : f32
    %7 = vector.broadcast %cst_9 : f32 to vector<8x8x8xf32>
    %8 = arith.mulf %6, %7 : vector<8x8x8xf32>
    %c0_10 = arith.constant 0 : index
    %c0_11 = arith.constant 0 : index
    %c0_12 = arith.constant 0 : index
    %9 = vector.load %arg7[%c0_10, %c0_11, %c0_12] : memref<8x8x1xf32, #tpu.memory_space<vmem>>, vector<8x8x1xf32>
    %cst_13 = arith.constant dense<0xFF800000> : vector<8x8xf32>
    %10 = vector.multi_reduction <maximumf>, %8, %cst_13 [2] : vector<8x8x8xf32> to vector<8x8xf32>
    %11 = vector.shape_cast %10 : vector<8x8xf32> to vector<8x8x1xf32>
    %12 = arith.maximumf %9, %11 : vector<8x8x1xf32>
    %13 = arith.subf %9, %12 : vector<8x8x1xf32>
    %14 = math.exp %13 : vector<8x8x1xf32>
    %15 = vector.broadcast %12 : vector<8x8x1xf32> to vector<8x8x8xf32>
    %16 = arith.subf %8, %15 : vector<8x8x8xf32>
    %17 = math.exp %16 : vector<8x8x8xf32>
    %c0_14 = arith.constant 0 : index
    %c0_15 = arith.constant 0 : index
    %c0_16 = arith.constant 0 : index
    %18 = vector.load %arg8[%c0_14, %c0_15, %c0_16] : memref<8x8x1xf32, #tpu.memory_space<vmem>>, vector<8x8x1xf32>
    %19 = arith.mulf %14, %18 : vector<8x8x1xf32>
    %cst_17 = arith.constant dense<0.000000e+00> : vector<8x8xf32>
    %20 = vector.multi_reduction <add>, %17, %cst_17 [2] : vector<8x8x8xf32> to vector<8x8xf32>
    %21 = vector.shape_cast %20 : vector<8x8xf32> to vector<8x8x1xf32>
    %22 = arith.addf %19, %21 : vector<8x8x1xf32>
    %c0_18 = arith.constant 0 : index
    %c0_19 = arith.constant 0 : index
    %c0_20 = arith.constant 0 : index
    %23 = vector.load %arg8[%c0_18, %c0_19, %c0_20] : memref<8x8x1xf32, #tpu.memory_space<vmem>>, vector<8x8x1xf32>
    tpu.vector_store %arg8[%c0_18, %c0_19, %c0_20], %22 {strides = array<i32>} : memref<8x8x1xf32, #tpu.memory_space<vmem>>, vector<8x8x1xf32>,
    %c0_21 = arith.constant 0 : index
    %c0_22 = arith.constant 0 : index
    %c0_23 = arith.constant 0 : index
    %24 = vector.load %arg9[%c0_21, %c0_22, %c0_23] : memref<8x8x4xf32, #tpu.memory_space<vmem>>, vector<8x8x4xf32>
    %25 = vector.broadcast %14 : vector<8x8x1xf32> to vector<8x8x4xf32>
    %26 = arith.mulf %25, %24 : vector<8x8x4xf32>
    "tpu.trace_start"() <{level = 10 : i32, message = "bqk,bkd->bqd"}> : () -> ()
    %cst_24 = arith.constant dense<0.000000e+00> : vector<8x8x4xf32>
    %27 = tpu.matmul %17, %5, %cst_24 {dimension_numbers = #tpu.dot_dimension_numbers<[2], [1], [1], [2], [0, 0, 0, 1, 1, 2], [0], [0]>} : vector<8x8x8xf32>, vector<8x8x4xf32>, vector<8x8x4xf32> -> vector<8x8x4xf32>
    "tpu.trace_stop"() : () -> ()
    %28 = arith.addf %26, %27 : vector<8x8x4xf32>
    %c0_25 = arith.constant 0 : index
    %c0_26 = arith.constant 0 : index
    %c0_27 = arith.constant 0 : index
    %29 = vector.load %arg9[%c0_25, %c0_26, %c0_27] : memref<8x8x4xf32, #tpu.memory_space<vmem>>, vector<8x8x4xf32>
    tpu.vector_store %arg9[%c0_25, %c0_26, %c0_27], %28 {strides = array<i32>} : memref<8x8x4xf32, #tpu.memory_space<vmem>>, vector<8x8x4xf32>,
    %c0_28 = arith.constant 0 : index
    %c0_29 = arith.constant 0 : index
    %c0_30 = arith.constant 0 : index
    %30 = vector.load %arg7[%c0_28, %c0_29, %c0_30] : memref<8x8x1xf32, #tpu.memory_space<vmem>>, vector<8x8x1xf32>
    tpu.vector_store %arg7[%c0_28, %c0_29, %c0_30], %12 {strides = array<i32>} : memref<8x8x1xf32, #tpu.memory_space<vmem>>, vector<8x8x1xf32>,
    %c1_i32 = arith.constant 1 : i32
    %31 = arith.cmpi eq, %arg2, %c1_i32 : i32
    %32 = arith.extui %31 : i1 to i32
    %c0_i32_31 = arith.constant 0 : i32
    %33 = arith.cmpi ne, %32, %c0_i32_31 : i32
    scf.if %33 {
      %c0_32 = arith.constant 0 : index
      %c0_33 = arith.constant 0 : index
      %c0_34 = arith.constant 0 : index
      %34 = vector.load %arg8[%c0_32, %c0_33, %c0_34] : memref<8x8x1xf32, #tpu.memory_space<vmem>>, vector<8x8x1xf32>
      %35 = tpu.reciprocal %34 {approx = true} : vector<8x8x1xf32> -> vector<8x8x1xf32>
      %c0_35 = arith.constant 0 : index
      %c0_36 = arith.constant 0 : index
      %c0_37 = arith.constant 0 : index
      %36 = vector.load %arg9[%c0_35, %c0_36, %c0_37] : memref<8x8x4xf32, #tpu.memory_space<vmem>>, vector<8x8x4xf32>
      %37 = vector.broadcast %35 : vector<8x8x1xf32> to vector<8x8x4xf32>
      %38 = arith.mulf %36, %37 : vector<8x8x4xf32>
      %c0_38 = arith.constant 0 : index
      %c0_39 = arith.constant 0 : index
      %c0_40 = arith.constant 0 : index
      %39 = vector.load %arg6[%c0_38, %c0_39, %c0_40] : memref<8x8x4xf32, #tpu.memory_space<vmem>>, vector<8x8x4xf32>
      tpu.vector_store %arg6[%c0_38, %c0_39, %c0_40], %38 {strides = array<i32>} : memref<8x8x4xf32, #tpu.memory_space<vmem>>, vector<8x8x4xf32>,
    } else {
    }
    return
  }
  func.func @transform_0(%arg0: i32, %arg1: i32, %arg2: i32) -> (i32, i32, i32) {
    %c0_i32 = arith.constant 0 : i32
    %c0_i32_0 = arith.constant 0 : i32
    return %arg0, %arg1, %c0_i32 : i32, i32, i32
  }
  func.func @transform_1(%arg0: i32, %arg1: i32, %arg2: i32) -> (i32, i32, i32) {
    %c0_i32 = arith.constant 0 : i32
    %c0_i32_0 = arith.constant 0 : i32
    return %arg0, %arg2, %c0_i32 : i32, i32, i32
  }
  func.func @transform_2(%arg0: i32, %arg1: i32, %arg2: i32) -> (i32, i32, i32) {
    %c0_i32 = arith.constant 0 : i32
    %c0_i32_0 = arith.constant 0 : i32
    return %arg0, %arg2, %c0_i32 : i32, i32, i32
  }
  func.func @transform_3(%arg0: i32, %arg1: i32, %arg2: i32) -> (i32, i32, i32) {
    %c0_i32 = arith.constant 0 : i32
    %c0_i32_0 = arith.constant 0 : i32
    return %arg0, %arg1, %c0_i32 : i32, i32, i32
  }
}

module attributes {stable_mosaic.version = 11 : i64} {
  func.func @_proj_res_ln_kernel(%arg0: i32, %arg1: memref<16x32xf32, #tpu.memory_space<vmem>>, %arg2: memref<32x32xf32, #tpu.memory_space<vmem>>, %arg3: memref<1x32xf32, #tpu.memory_space<vmem>>, %arg4: memref<16x32xf32, #tpu.memory_space<vmem>>, %arg5: memref<1x32xf32, #tpu.memory_space<vmem>>, %arg6: memref<1x32xf32, #tpu.memory_space<vmem>>, %arg7: memref<16x32xf32, #tpu.memory_space<vmem>>) attributes {dimension_semantics = [#tpu.dimension_semantics<parallel>], iteration_bounds = array<i64: 2>, scalar_prefetch = 0 : i64, scratch_operands = 0 : i64, tpu.core_type = #tpu.core_type<tc>, window_params = [{transform_indices = @transform_0, window_bounds = array<i64: 16, 32>}, {pipeline_mode = #tpu.pipeline_mode<synchronous>, transform_indices = @transform_1, window_bounds = array<i64: 32, 32>}, {pipeline_mode = #tpu.pipeline_mode<synchronous>, transform_indices = @transform_2, window_bounds = array<i64: 1, 32>}, {transform_indices = @transform_3, window_bounds = array<i64: 16, 32>}, {pipeline_mode = #tpu.pipeline_mode<synchronous>, transform_indices = @transform_4, window_bounds = array<i64: 1, 32>}, {pipeline_mode = #tpu.pipeline_mode<synchronous>, transform_indices = @transform_5, window_bounds = array<i64: 1, 32>}, {transform_indices = @transform_6, window_bounds = array<i64: 16, 32>}]} {
    %c0 = arith.constant 0 : index
    %c0_0 = arith.constant 0 : index
    %0 = vector.load %arg1[%c0, %c0_0] : memref<16x32xf32, #tpu.memory_space<vmem>>, vector<16x32xf32>
    %c0_1 = arith.constant 0 : index
    %c0_2 = arith.constant 0 : index
    %1 = vector.load %arg2[%c0_1, %c0_2] : memref<32x32xf32, #tpu.memory_space<vmem>>, vector<32x32xf32>
    %cst = arith.constant dense<0.000000e+00> : vector<16x32xf32>
    %2 = tpu.matmul %0, %1, %cst {dimension_numbers = #tpu.dot_dimension_numbers<[1], [0], [0], [1], [0, 0, 1, 1], [], []>} : vector<16x32xf32>, vector<32x32xf32>, vector<16x32xf32> -> vector<16x32xf32>
    %c0_3 = arith.constant 0 : index
    %c0_4 = arith.constant 0 : index
    %3 = vector.load %arg3[%c0_3, %c0_4] : memref<1x32xf32, #tpu.memory_space<vmem>>, vector<1x32xf32>
    %4 = vector.broadcast %3 : vector<1x32xf32> to vector<16x32xf32>
    %5 = arith.addf %2, %4 : vector<16x32xf32>
    %c0_5 = arith.constant 0 : index
    %c0_6 = arith.constant 0 : index
    %6 = vector.load %arg4[%c0_5, %c0_6] : memref<16x32xf32, #tpu.memory_space<vmem>>, vector<16x32xf32>
    %7 = arith.addf %5, %6 : vector<16x32xf32>
    %c0_7 = arith.constant 0 : index
    %c0_8 = arith.constant 0 : index
    %8 = vector.load %arg5[%c0_7, %c0_8] : memref<1x32xf32, #tpu.memory_space<vmem>>, vector<1x32xf32>
    %c0_9 = arith.constant 0 : index
    %c0_10 = arith.constant 0 : index
    %9 = vector.load %arg6[%c0_9, %c0_10] : memref<1x32xf32, #tpu.memory_space<vmem>>, vector<1x32xf32>
    %cst_11 = arith.constant dense<0.000000e+00> : vector<16xf32>
    %10 = vector.multi_reduction <add>, %7, %cst_11 [1] : vector<16x32xf32> to vector<16xf32>
    %11 = vector.shape_cast %10 : vector<16xf32> to vector<16x1xf32>
    %cst_12 = arith.constant 3.200000e+01 : f32
    %12 = vector.broadcast %cst_12 : f32 to vector<16x1xf32>
    %13 = arith.divf %11, %12 : vector<16x1xf32>
    %14 = vector.broadcast %13 : vector<16x1xf32> to vector<16x32xf32>
    %15 = arith.subf %7, %14 : vector<16x32xf32>
    %16 = arith.mulf %15, %15 : vector<16x32xf32>
    %cst_13 = arith.constant dense<0.000000e+00> : vector<16xf32>
    %17 = vector.multi_reduction <add>, %16, %cst_13 [1] : vector<16x32xf32> to vector<16xf32>
    %18 = vector.shape_cast %17 : vector<16xf32> to vector<16x1xf32>
    %cst_14 = arith.constant 3.200000e+01 : f32
    %19 = vector.broadcast %cst_14 : f32 to vector<16x1xf32>
    %20 = arith.divf %18, %19 : vector<16x1xf32>
    %21 = vector.broadcast %13 : vector<16x1xf32> to vector<16x32xf32>
    %22 = arith.subf %7, %21 : vector<16x32xf32>
    %cst_15 = arith.constant 9.99999974E-6 : f32
    %23 = vector.broadcast %cst_15 : f32 to vector<16x1xf32>
    %24 = arith.addf %20, %23 : vector<16x1xf32>
    %25 = math.rsqrt %24 : vector<16x1xf32>
    %26 = vector.broadcast %25 : vector<16x1xf32> to vector<16x32xf32>
    %27 = arith.mulf %22, %26 : vector<16x32xf32>
    %28 = vector.broadcast %8 : vector<1x32xf32> to vector<16x32xf32>
    %29 = arith.mulf %27, %28 : vector<16x32xf32>
    %30 = vector.broadcast %9 : vector<1x32xf32> to vector<16x32xf32>
    %31 = arith.addf %29, %30 : vector<16x32xf32>
    %c0_16 = arith.constant 0 : index
    %c0_17 = arith.constant 0 : index
    %32 = vector.load %arg7[%c0_16, %c0_17] : memref<16x32xf32, #tpu.memory_space<vmem>>, vector<16x32xf32>
    tpu.vector_store %arg7[%c0_16, %c0_17], %31 {strides = array<i32>} : memref<16x32xf32, #tpu.memory_space<vmem>>, vector<16x32xf32>,
    return
  }
  func.func @transform_0(%arg0: i32) -> (i32, i32) {
    %c0_i32 = arith.constant 0 : i32
    %c0_i32_0 = arith.constant 0 : i32
    return %arg0, %c0_i32 : i32, i32
  }
  func.func @transform_1(%arg0: i32) -> (i32, i32) {
    %c0_i32 = arith.constant 0 : i32
    %c0_i32_0 = arith.constant 0 : i32
    %c0_i32_1 = arith.constant 0 : i32
    return %c0_i32, %c0_i32_0 : i32, i32
  }
  func.func @transform_2(%arg0: i32) -> (i32, i32) {
    %c0_i32 = arith.constant 0 : i32
    %c0_i32_0 = arith.constant 0 : i32
    %c0_i32_1 = arith.constant 0 : i32
    return %c0_i32, %c0_i32_0 : i32, i32
  }
  func.func @transform_3(%arg0: i32) -> (i32, i32) {
    %c0_i32 = arith.constant 0 : i32
    %c0_i32_0 = arith.constant 0 : i32
    return %arg0, %c0_i32 : i32, i32
  }
  func.func @transform_4(%arg0: i32) -> (i32, i32) {
    %c0_i32 = arith.constant 0 : i32
    %c0_i32_0 = arith.constant 0 : i32
    %c0_i32_1 = arith.constant 0 : i32
    return %c0_i32, %c0_i32_0 : i32, i32
  }
  func.func @transform_5(%arg0: i32) -> (i32, i32) {
    %c0_i32 = arith.constant 0 : i32
    %c0_i32_0 = arith.constant 0 : i32
    %c0_i32_1 = arith.constant 0 : i32
    return %c0_i32, %c0_i32_0 : i32, i32
  }
  func.func @transform_6(%arg0: i32) -> (i32, i32) {
    %c0_i32 = arith.constant 0 : i32
    %c0_i32_0 = arith.constant 0 : i32
    return %arg0, %c0_i32 : i32, i32
  }
}

module attributes {stable_mosaic.version = 11 : i64} {
  func.func @_ffn_kernel(%arg0: i32, %arg1: i32, %arg2: memref<16x32xf32, #tpu.memory_space<vmem>>, %arg3: memref<32x128xf32, #tpu.memory_space<vmem>>, %arg4: memref<1x128xf32, #tpu.memory_space<vmem>>, %arg5: memref<128x32xf32, #tpu.memory_space<vmem>>, %arg6: memref<1x32xf32, #tpu.memory_space<vmem>>, %arg7: memref<1x32xf32, #tpu.memory_space<vmem>>, %arg8: memref<1x32xf32, #tpu.memory_space<vmem>>, %arg9: memref<16x32xf32, #tpu.memory_space<vmem>>, %arg10: memref<16x32xf32, #tpu.memory_space<vmem>>) attributes {dimension_semantics = [#tpu.dimension_semantics<parallel>, #tpu.dimension_semantics<arbitrary>], iteration_bounds = array<i64: 2, 2>, scalar_prefetch = 0 : i64, scratch_operands = 1 : i64, tpu.core_type = #tpu.core_type<tc>, window_params = [{transform_indices = @transform_0, window_bounds = array<i64: 16, 32>}, {transform_indices = @transform_1, window_bounds = array<i64: 32, 128>}, {transform_indices = @transform_2, window_bounds = array<i64: 1, 128>}, {transform_indices = @transform_3, window_bounds = array<i64: 128, 32>}, {pipeline_mode = #tpu.pipeline_mode<synchronous>, transform_indices = @transform_4, window_bounds = array<i64: 1, 32>}, {pipeline_mode = #tpu.pipeline_mode<synchronous>, transform_indices = @transform_5, window_bounds = array<i64: 1, 32>}, {pipeline_mode = #tpu.pipeline_mode<synchronous>, transform_indices = @transform_6, window_bounds = array<i64: 1, 32>}, {transform_indices = @transform_7, window_bounds = array<i64: 16, 32>}]} {
    %c0_i32 = arith.constant 0 : i32
    %0 = arith.cmpi eq, %arg1, %c0_i32 : i32
    %1 = arith.extui %0 : i1 to i32
    %c0_i32_0 = arith.constant 0 : i32
    %2 = arith.cmpi ne, %1, %c0_i32_0 : i32
    scf.if %2 {
      %cst_15 = arith.constant 0.000000e+00 : f32
      %19 = vector.broadcast %cst_15 : f32 to vector<16x32xf32>
      %c0_16 = arith.constant 0 : index
      %c0_17 = arith.constant 0 : index
      %20 = vector.load %arg10[%c0_16, %c0_17] : memref<16x32xf32, #tpu.memory_space<vmem>>, vector<16x32xf32>
      tpu.vector_store %arg10[%c0_16, %c0_17], %19 {strides = array<i32>} : memref<16x32xf32, #tpu.memory_space<vmem>>, vector<16x32xf32>,
    } else {
    }
    %c0 = arith.constant 0 : index
    %c0_1 = arith.constant 0 : index
    %3 = vector.load %arg2[%c0, %c0_1] : memref<16x32xf32, #tpu.memory_space<vmem>>, vector<16x32xf32>
    %c0_2 = arith.constant 0 : index
    %c0_3 = arith.constant 0 : index
    %4 = vector.load %arg3[%c0_2, %c0_3] : memref<32x128xf32, #tpu.memory_space<vmem>>, vector<32x128xf32>
    %cst = arith.constant dense<0.000000e+00> : vector<16x128xf32>
    %5 = tpu.matmul %3, %4, %cst {dimension_numbers = #tpu.dot_dimension_numbers<[1], [0], [0], [1], [0, 0, 1, 1], [], []>} : vector<16x32xf32>, vector<32x128xf32>, vector<16x128xf32> -> vector<16x128xf32>
    %c0_4 = arith.constant 0 : index
    %c0_5 = arith.constant 0 : index
    %6 = vector.load %arg4[%c0_4, %c0_5] : memref<1x128xf32, #tpu.memory_space<vmem>>, vector<1x128xf32>
    %7 = vector.broadcast %6 : vector<1x128xf32> to vector<16x128xf32>
    %8 = arith.addf %5, %7 : vector<16x128xf32>
    %cst_6 = arith.constant 0.000000e+00 : f32
    %9 = vector.broadcast %cst_6 : f32 to vector<16x128xf32>
    %10 = arith.maximumf %8, %9 : vector<16x128xf32>
    %c0_7 = arith.constant 0 : index
    %c0_8 = arith.constant 0 : index
    %11 = vector.load %arg10[%c0_7, %c0_8] : memref<16x32xf32, #tpu.memory_space<vmem>>, vector<16x32xf32>
    %c0_9 = arith.constant 0 : index
    %c0_10 = arith.constant 0 : index
    %12 = vector.load %arg5[%c0_9, %c0_10] : memref<128x32xf32, #tpu.memory_space<vmem>>, vector<128x32xf32>
    %cst_11 = arith.constant dense<0.000000e+00> : vector<16x32xf32>
    %13 = tpu.matmul %10, %12, %cst_11 {dimension_numbers = #tpu.dot_dimension_numbers<[1], [0], [0], [1], [0, 0, 1, 1], [], []>} : vector<16x128xf32>, vector<128x32xf32>, vector<16x32xf32> -> vector<16x32xf32>
    %14 = arith.addf %11, %13 : vector<16x32xf32>
    %c0_12 = arith.constant 0 : index
    %c0_13 = arith.constant 0 : index
    %15 = vector.load %arg10[%c0_12, %c0_13] : memref<16x32xf32, #tpu.memory_space<vmem>>, vector<16x32xf32>
    tpu.vector_store %arg10[%c0_12, %c0_13], %14 {strides = array<i32>} : memref<16x32xf32, #tpu.memory_space<vmem>>, vector<16x32xf32>,
    %c1_i32 = arith.constant 1 : i32
    %16 = arith.cmpi eq, %arg1, %c1_i32 : i32
    %17 = arith.extui %16 : i1 to i32
    %c0_i32_14 = arith.constant 0 : i32
    %18 = arith.cmpi ne, %17, %c0_i32_14 : i32
    scf.if %18 {
      %c0_15 = arith.constant 0 : index
      %c0_16 = arith.constant 0 : index
      %19 = vector.load %arg10[%c0_15, %c0_16] : memref<16x32xf32, #tpu.memory_space<vmem>>, vector<16x32xf32>
      %c0_17 = arith.constant 0 : index
      %c0_18 = arith.constant 0 : index
      %20 = vector.load %arg6[%c0_17, %c0_18] : memref<1x32xf32, #tpu.memory_space<vmem>>, vector<1x32xf32>
      %21 = vector.broadcast %20 : vector<1x32xf32> to vector<16x32xf32>
      %22 = arith.addf %19, %21 : vector<16x32xf32>
      %23 = arith.addf %22, %3 : vector<16x32xf32>
      %c0_19 = arith.constant 0 : index
      %c0_20 = arith.constant 0 : index
      %24 = vector.load %arg7[%c0_19, %c0_20] : memref<1x32xf32, #tpu.memory_space<vmem>>, vector<1x32xf32>
      %c0_21 = arith.constant 0 : index
      %c0_22 = arith.constant 0 : index
      %25 = vector.load %arg8[%c0_21, %c0_22] : memref<1x32xf32, #tpu.memory_space<vmem>>, vector<1x32xf32>
      %cst_23 = arith.constant dense<0.000000e+00> : vector<16xf32>
      %26 = vector.multi_reduction <add>, %23, %cst_23 [1] : vector<16x32xf32> to vector<16xf32>
      %27 = vector.shape_cast %26 : vector<16xf32> to vector<16x1xf32>
      %cst_24 = arith.constant 3.200000e+01 : f32
      %28 = vector.broadcast %cst_24 : f32 to vector<16x1xf32>
      %29 = arith.divf %27, %28 : vector<16x1xf32>
      %30 = vector.broadcast %29 : vector<16x1xf32> to vector<16x32xf32>
      %31 = arith.subf %23, %30 : vector<16x32xf32>
      %32 = arith.mulf %31, %31 : vector<16x32xf32>
      %cst_25 = arith.constant dense<0.000000e+00> : vector<16xf32>
      %33 = vector.multi_reduction <add>, %32, %cst_25 [1] : vector<16x32xf32> to vector<16xf32>
      %34 = vector.shape_cast %33 : vector<16xf32> to vector<16x1xf32>
      %cst_26 = arith.constant 3.200000e+01 : f32
      %35 = vector.broadcast %cst_26 : f32 to vector<16x1xf32>
      %36 = arith.divf %34, %35 : vector<16x1xf32>
      %37 = vector.broadcast %29 : vector<16x1xf32> to vector<16x32xf32>
      %38 = arith.subf %23, %37 : vector<16x32xf32>
      %cst_27 = arith.constant 9.99999974E-6 : f32
      %39 = vector.broadcast %cst_27 : f32 to vector<16x1xf32>
      %40 = arith.addf %36, %39 : vector<16x1xf32>
      %41 = math.rsqrt %40 : vector<16x1xf32>
      %42 = vector.broadcast %41 : vector<16x1xf32> to vector<16x32xf32>
      %43 = arith.mulf %38, %42 : vector<16x32xf32>
      %44 = vector.broadcast %24 : vector<1x32xf32> to vector<16x32xf32>
      %45 = arith.mulf %43, %44 : vector<16x32xf32>
      %46 = vector.broadcast %25 : vector<1x32xf32> to vector<16x32xf32>
      %47 = arith.addf %45, %46 : vector<16x32xf32>
      %c0_28 = arith.constant 0 : index
      %c0_29 = arith.constant 0 : index
      %48 = vector.load %arg9[%c0_28, %c0_29] : memref<16x32xf32, #tpu.memory_space<vmem>>, vector<16x32xf32>
      tpu.vector_store %arg9[%c0_28, %c0_29], %47 {strides = array<i32>} : memref<16x32xf32, #tpu.memory_space<vmem>>, vector<16x32xf32>,
    } else {
    }
    return
  }
  func.func @transform_0(%arg0: i32, %arg1: i32) -> (i32, i32) {
    %c0_i32 = arith.constant 0 : i32
    %c0_i32_0 = arith.constant 0 : i32
    return %arg0, %c0_i32 : i32, i32
  }
  func.func @transform_1(%arg0: i32, %arg1: i32) -> (i32, i32) {
    %c0_i32 = arith.constant 0 : i32
    %c0_i32_0 = arith.constant 0 : i32
    return %c0_i32, %arg1 : i32, i32
  }
  func.func @transform_2(%arg0: i32, %arg1: i32) -> (i32, i32) {
    %c0_i32 = arith.constant 0 : i32
    %c0_i32_0 = arith.constant 0 : i32
    return %c0_i32, %arg1 : i32, i32
  }
  func.func @transform_3(%arg0: i32, %arg1: i32) -> (i32, i32) {
    %c0_i32 = arith.constant 0 : i32
    %c0_i32_0 = arith.constant 0 : i32
    return %arg1, %c0_i32 : i32, i32
  }
  func.func @transform_4(%arg0: i32, %arg1: i32) -> (i32, i32) {
    %c0_i32 = arith.constant 0 : i32
    %c0_i32_0 = arith.constant 0 : i32
    %c0_i32_1 = arith.constant 0 : i32
    return %c0_i32, %c0_i32_0 : i32, i32
  }
  func.func @transform_5(%arg0: i32, %arg1: i32) -> (i32, i32) {
    %c0_i32 = arith.constant 0 : i32
    %c0_i32_0 = arith.constant 0 : i32
    %c0_i32_1 = arith.constant 0 : i32
    return %c0_i32, %c0_i32_0 : i32, i32
  }
  func.func @transform_6(%arg0: i32, %arg1: i32) -> (i32, i32) {
    %c0_i32 = arith.constant 0 : i32
    %c0_i32_0 = arith.constant 0 : i32
    %c0_i32_1 = arith.constant 0 : i32
    return %c0_i32, %c0_i32_0 : i32, i32
  }
  func.func @transform_7(%arg0: i32, %arg1: i32) -> (i32, i32) {
    %c0_i32 = arith.constant 0 : i32
    %c0_i32_0 = arith.constant 0 : i32
    return %arg0, %c0_i32 : i32, i32
  }
}

</mosaic_0001>

<llo_original>
// kernel: encoder_layer.4
$region0: #{encoder_layer.4}
  #allocation0 [shape = 'u32[]', space=smem, size = 0x4, offset = 0x4, fixed_abs, tag = 'smem constant byte address 0x4 - core index']
  #allocation1 [shape = 'u32[144,128]{1,0:T(1,128)}', space=vmem, size = 0x12000, scoped, tag = 'internal scratch']
  %s0 = inlined_call_operand.hbm [shape: f32[32,32], index: 0, kind: input, shape index: {}]
  %s1 = inlined_call_operand.hbm [shape: f32[32,96], index: 1, kind: input, shape index: {}]
  %s2 = inlined_call_operand.hbm [shape: f32[1,96], index: 2, kind: input, shape index: {}]
  %s3 = inlined_call_operand.hbm [shape: f32[32,96], index: 3, kind: output, shape index: {}]
  %s4 = sld [smem:[#allocation0]]
  $region57: #{encoder_layer.4} parent=0
    _
  %s6 = ssub.s32 1, %s4
  %s7 = scalar_select 0, %s6, %s4
  $region1: #{encoder_layer.4} parent=0
    #allocation2 [shape = 'u8[16384]{0}', space=vmem, size = 0x4000, scoped, tag = 'input window, operand 0']
    #allocation3 [shape = 's32[2]{0}', space=sflag, size = 0x8, scoped, tag = 'scoped memory for encoder_layer.4']
    #allocation4 [shape = 's32[2]{0}', space=sflag, size = 0x8, scoped, tag = 'scoped memory for encoder_layer.4']
    #allocation5 [shape = 'u8[16384]{0}', space=vmem, size = 0x4000, scoped, tag = 'input window, operand 1, single buffered']
    #allocation6 [shape = 's32[1]{0}', space=sflag, size = 0x4, scoped, tag = 'scoped memory for encoder_layer.4']
    #allocation7 [shape = 'u8[512]{0}', space=vmem, size = 0x400, scoped, tag = 'input window, operand 2, single buffered']
    #allocation8 [shape = 'u8[16384]{0}', space=vmem, size = 0x4000, scoped, tag = 'output window, operand 0']
    %8 = vsyncpa [#allocation3], 0
    %s9 = scalar_lea.sflag [#allocation3], 1
    %10 = vsyncpa %s9, 0
    %11 = vsyncpa [#allocation6], 0
    %12 = vsyncpa [#allocation4], 0
    %s13 = scalar_lea.sflag [#allocation4], 1
    %14 = vsyncpa %s13, 0
    loop: start=0, step=1, limit=4
    $region2: #{encoder_layer.4} parent=1 // loop_pre_header
      _
    $region3: #{encoder_layer.4} parent=1 // loop_header
      %s16 = sphi 0, %s20
      %p17 = scmp.ge.s32.totalorder %s16, 4
      %s26 = sphi 0, %s28
      %s29 = sphi 0, %s26
      %s30 = sphi 0, %s29
      %s46 = sphi 0, %s30
      %s50 = sphi 0, %s50
      %s52 = sphi 0, %s50
      %s53 = sphi 0, %s52
      %s67 = sphi 0, %s53
      %s71 = sphi 0, %s71
      %s73 = sphi 0, %s71
      %s74 = sphi 0, %s73
      %s88 = sphi 0, %s74
      %s94 = sphi 0, %s96
      %s97 = sphi 0, %s94
      %s98 = sphi 0, %s97
      %s114 = sphi 0, %s98
    $region4: #{encoder_layer.4} parent=1 // loop_header_branch
      %19 = sbr.rel (%p17) target = $region8
    $region5: #{encoder_layer.4} parent=1 // loop_body
      %s21 = ssub.s32 %s16, 1
      %s22 = ssub.s32 %s16, 2
      %s23 = sadd.s32 %s16, 1
      %s24 = ssub.s32 %s16, %s23
      %p25 = scmp.eq.s32.totalorder %s24, 0
      %s27 = sadd.s32 %s26, 1
      %s28 = scalar_select %p25, %s26, %s27
      %p31 = pneg %p25
      %p32 = scmp.eq.s32.totalorder %s16, 1
      %p33 = por %p31, %p32
      %p34 = scmp.ne.s32.totalorder %s26, %s29
      %p35 = scmp.eq.s32.totalorder %s16, 0
      %p36 = por %p34, %p35
      %p37 = scmp.ne.s32.totalorder %s26, %s29
      %p38 = scmp.eq.s32.totalorder %s21, 1
      %p39 = por %p37, %p38
      %p40 = scmp.ne.s32.totalorder %s29, %s30
      %p41 = scmp.eq.s32.totalorder %s21, 0
      %p42 = por %p40, %p41
      %p43 = scmp.ne.s32.totalorder %s29, %s30
      %p44 = scmp.eq.s32.totalorder %s22, 1
      %p45 = por %p43, %p44
      %p47 = scmp.ne.s32.totalorder %s30, %s46
      %p48 = scmp.eq.s32.totalorder %s22, 0
      %p49 = por %p47, %p48
      %s51 = sadd.s32 %s50, 1
      %p54 = scmp.eq.s32.totalorder %s16, 1
      %p55 = scmp.ne.s32.totalorder %s50, %s52
      %p56 = scmp.eq.s32.totalorder %s16, 0
      %p57 = por %p55, %p56
      %p58 = scmp.ne.s32.totalorder %s50, %s52
      %p59 = scmp.eq.s32.totalorder %s21, 1
      %p60 = por %p58, %p59
      %p61 = scmp.ne.s32.totalorder %s52, %s53
      %p62 = scmp.eq.s32.totalorder %s21, 0
      %p63 = por %p61, %p62
      %p64 = scmp.ne.s32.totalorder %s52, %s53
      %p65 = scmp.eq.s32.totalorder %s22, 1
      %p66 = por %p64, %p65
      %p68 = scmp.ne.s32.totalorder %s53, %s67
      %p69 = scmp.eq.s32.totalorder %s22, 0
      %p70 = por %p68, %p69
      %s72 = sadd.s32 %s71, 1
      %p75 = scmp.eq.s32.totalorder %s16, 1
      %p76 = scmp.ne.s32.totalorder %s71, %s73
      %p77 = scmp.eq.s32.totalorder %s16, 0
      %p78 = por %p76, %p77
      %p79 = scmp.ne.s32.totalorder %s71, %s73
      %p80 = scmp.eq.s32.totalorder %s21, 1
      %p81 = por %p79, %p80
      %p82 = scmp.ne.s32.totalorder %s73, %s74
      %p83 = scmp.eq.s32.totalorder %s21, 0
      %p84 = por %p82, %p83
      %p85 = scmp.ne.s32.totalorder %s73, %s74
      %p86 = scmp.eq.s32.totalorder %s22, 1
      %p87 = por %p85, %p86
      %p89 = scmp.ne.s32.totalorder %s74, %s88
      %p90 = scmp.eq.s32.totalorder %s22, 0
      %p91 = por %p89, %p90
      %s92 = ssub.s32 %s16, %s23
      %p93 = scmp.eq.s32.totalorder %s92, 0
      %s95 = sadd.s32 %s94, 1
      %s96 = scalar_select %p93, %s94, %s95
      %p99 = pneg %p93
      %p100 = scmp.eq.s32.totalorder %s16, 1
      %p101 = por %p99, %p100
      %p102 = scmp.ne.s32.totalorder %s94, %s97
      %p103 = scmp.eq.s32.totalorder %s16, 0
      %p104 = por %p102, %p103
      %p105 = scmp.ne.s32.totalorder %s94, %s97
      %p106 = scmp.eq.s32.totalorder %s21, 1
      %p107 = por %p105, %p106
      %p108 = scmp.ne.s32.totalorder %s97, %s98
      %p109 = scmp.eq.s32.totalorder %s21, 0
      %p110 = por %p108, %p109
      %p111 = scmp.ne.s32.totalorder %s97, %s98
      %p112 = scmp.eq.s32.totalorder %s22, 1
      %p113 = por %p111, %p112
      %p115 = scmp.ne.s32.totalorder %s98, %s114
      %p116 = scmp.eq.s32.totalorder %s22, 0
      %p117 = por %p115, %p116
      %p118 = scmp.le.s32.totalorder 1, %s16
      %p119 = scmp.lt.s32.totalorder %s16, 3
      %p120 = pnand %p118, %p119
      %p121 = pneg %p120
      // Predicated region
      $region9: #{encoder_layer.4} parent=5 // pred_check
        _
      $region10: #{encoder_layer.4} parent=5 // pred_check_branch
        %123 = sbr.rel (%p120) target = $region12
      $region11: #{encoder_layer.4} parent=5 // pred_region
        %s124 = ssub.s32 %s16, 1
        // Predicated region
        $region13: #{encoder_layer.4} parent=11 // pred_check
          %p125 = pneg %p63
        $region14: #{encoder_layer.4} parent=11 // pred_check_branch
          %127 = sbr.rel (%p125) target = $region16
        $region15: #{encoder_layer.4} parent=11 // pred_region
          %s129 = ssub.s32 512, 512
          %130 = vsyncadd [#allocation6], %s129
          %s131 = sshll.u32 [#allocation5], 4
          %s132 = int_to_ptr.vmem [resolvable:$true] %s131
          %137 = dma.hbm_to_vmem [thread:$0]  %s1, 512, %s132, [#allocation6], 128, 128, 8
        $region16: #{encoder_layer.4} parent=11 // pred_fallthru
          _
        // Predicated region
        $region17: #{encoder_layer.4} parent=11 // pred_check
          %p138 = pneg %p84
        $region18: #{encoder_layer.4} parent=11 // pred_check_branch
          %140 = sbr.rel (%p138) target = $region20
        $region19: #{encoder_layer.4} parent=11 // pred_region
          %s142 = ssub.s32 16, 16
          %143 = vsyncadd [#allocation6], %s142
          %s145 = sshll.u32 [#allocation7], 4
          %s146 = int_to_ptr.vmem [resolvable:$true] %s145
          %148 = dma.hbm_to_vmem [thread:$0]  %s2, 16, %s146, [#allocation6]
        $region20: #{encoder_layer.4} parent=11 // pred_fallthru
          _
      $region12: #{encoder_layer.4} parent=5 // pred_fallthru
        _
      %p149 = scmp.lt.s32.totalorder %s16, 2
      // Predicated region
      $region21: #{encoder_layer.4} parent=5 // pred_check
        %p150 = pneg %p149
      $region22: #{encoder_layer.4} parent=5 // pred_check_branch
        %152 = sbr.rel (%p150) target = $region24
      $region23: #{encoder_layer.4} parent=5 // pred_region
        // Predicated region
        $region25: #{encoder_layer.4} parent=23 // pred_check
          %p153 = pneg %p36
        $region26: #{encoder_layer.4} parent=23 // pred_check_branch
          %155 = sbr.rel (%p153) target = $region28
        $region27: #{encoder_layer.4} parent=23 // pred_region
          %s156 = sand.u32 %s26, 1
          %s157 = scalar_lea.sflag [#allocation3], %s156
          %s158 = sand.u32 %s26, 1
          %s159 = smul.addr %s158, 16
          %s160 = scalar_lea.vmem [#allocation2], %s159
          %s161 = smul.u32 2, %s16
          %s163 = ssub.s32 256, 256
          %164 = vsyncadd %s157, %s163
          %s165 = smul.addr %s161, 128
          %s166 = scalar_lea.hbm %s0, %s165
          %s167 = sshll.u32 %s160, 4
          %s168 = int_to_ptr.vmem [resolvable:$true] %s167
          %173 = dma.hbm_to_vmem [thread:$0]  %s166, 256, %s168, %s157, 128, 128, 8
        $region28: #{encoder_layer.4} parent=23 // pred_fallthru
          _
      $region24: #{encoder_layer.4} parent=5 // pred_fallthru
        _
      %p174 = scmp.le.s32.totalorder 1, %s16
      %p175 = scmp.lt.s32.totalorder %s16, 3
      %p176 = pnand %p174, %p175
      %p177 = pneg %p176
      // Predicated region
      $region29: #{encoder_layer.4} parent=5 // pred_check
        _
      $region30: #{encoder_layer.4} parent=5 // pred_check_branch
        %179 = sbr.rel (%p176) target = $region32
      $region31: #{encoder_layer.4} parent=5 // pred_region
        %s180 = ssub.s32 %s16, 1
        %s181 = sand.u32 %s29, 1
        %s182 = scalar_lea.sflag [#allocation3], %s181
        %s183 = sand.u32 %s29, 1
        %s184 = smul.addr %s183, 16
        %s185 = scalar_lea.vmem [#allocation2], %s184
        // Predicated region
        $region33: #{encoder_layer.4} parent=31 // pred_check
          %p186 = pneg %p42
        $region34: #{encoder_layer.4} parent=31 // pred_check_branch
          %188 = sbr.rel (%p186) target = $region36
        $region35: #{encoder_layer.4} parent=31 // pred_region
          %189 = dma.done %s182, 256
        $region36: #{encoder_layer.4} parent=31 // pred_fallthru
          _
        // Predicated region
        $region37: #{encoder_layer.4} parent=31 // pred_check
          %p190 = pneg %p63
        $region38: #{encoder_layer.4} parent=31 // pred_check_branch
          %192 = sbr.rel (%p190) target = $region40
        $region39: #{encoder_layer.4} parent=31 // pred_region
          %193 = dma.done [#allocation6], 512
        $region40: #{encoder_layer.4} parent=31 // pred_fallthru
          _
        // Predicated region
        $region41: #{encoder_layer.4} parent=31 // pred_check
          %p194 = pneg %p84
        $region42: #{encoder_layer.4} parent=31 // pred_check_branch
          %196 = sbr.rel (%p194) target = $region44
        $region43: #{encoder_layer.4} parent=31 // pred_region
          %197 = dma.done [#allocation6], 16
        $region44: #{encoder_layer.4} parent=31 // pred_fallthru
          _
        %s198 = sand.u32 %s29, 1
        %s199 = scalar_lea.sflag [#allocation3], %s198
        %s200 = sand.u32 %s29, 1
        %s201 = smul.addr %s200, 16
        %s202 = scalar_lea.vmem [#allocation2], %s201
        %p203 = pneg %p42
        %p204 = pneg %p39
        %p205 = pneg %p63
        %p206 = pneg %p60
        %p207 = pneg %p84
        %p208 = pneg %p81
        %p209 = pneg %p110
        %p210 = pneg %p107
        %s211 = sand.u32 %s97, 1
        %s212 = scalar_lea.sflag [#allocation4], %s211
        %s213 = sand.u32 %s97, 1
        %s214 = smul.addr %s213, 16
        %s215 = scalar_lea.vmem [#allocation8], %s214
        %s216 = smul.u32 2, %s21
        %s217 = smul.u32 2, %s21
        %v218 = vld [vmem:[%s185] sm:$0xff]
        %v219 = vld [vmem:[%s185 + $0x8] sm:$0xff]
        %v220 = vld [vmem:[#allocation5] sm:$0xff]
        %v221 = vld [vmem:[#allocation5 + $0x8] sm:$0xff]
        %v222 = vld [vmem:[#allocation5 + $0x10] sm:$0xff]
        %v223 = vld [vmem:[#allocation5 + $0x18] sm:$0xff]
        %v224 = vld [vmem:[#allocation7] sm:$0x1]
        %v226 = vlaneseq
        %v227 = vshrl.u32 %v226, 7
        %v228 = vsub.s32 0, %v227
        %v229 = vrot.slane %v224, %v228
        %vm231 = vcmask 261120
        %v233 = vsel %vm231, %v218, 0
        %v236 = vsel %vm231, %v219, 0
        %238 = vmatprep.subr.mxu0 0.0
        %239 = vmatpush1.msra.mxu0 %v220
        %240 = vmatprep.subr.mxu0 0.0
        %241 = vmatpush1.msra.mxu0 %v221
        %242 = vmatprep.subr.mxu0 0.0
        %243 = vmatpush1.msra.mxu0 %v222
        %244 = vmatprep.subr.mxu0 0.0
        %245 = vmatpush1.msra.mxu0 %v223
        %246 = vmatprep.subr.mxu0 0.0
        %247 = vmatpush1.msra.mxu0 0.0
        %248 = vmatprep.subr.mxu0 0.0
        %249 = vmatpush1.msra.mxu0 0.0
        %250 = vmatprep.subr.mxu0 0.0
        %251 = vmatpush1.msra.mxu0 0.0
        %252 = vmatprep.subr.mxu0 0.0
        %253 = vmatpush1.msra.mxu0 0.0
        %254 = vmatprep.subr.mxu0 0.0
        %255 = vmatpush1.msra.mxu0 0.0
        %256 = vmatprep.subr.mxu0 0.0
        %257 = vmatpush1.msra.mxu0 0.0
        %258 = vmatprep.subr.mxu0 0.0
        %259 = vmatpush1.msra.mxu0 0.0
        %260 = vmatprep.subr.mxu0 0.0
        %261 = vmatpush1.msra.mxu0 0.0
        %262 = vmatprep.subr.mxu0 0.0
        %263 = vmatpush1.msra.mxu0 0.0
        %264 = vmatprep.subr.mxu0 0.0
        %265 = vmatpush1.msra.mxu0 0.0
        %266 = vmatprep.subr.mxu0 0.0
        %267 = vmatpush1.msra.mxu0 0.0
        %268 = vmatprep.subr.mxu0 0.0
        %269 = vmatpush1.msra.mxu0 0.0
        %270 = vmatprep.subr.mxu0 0.0
        %271 = vmatpush1.msra.mxu0 0.0
        %272 = vmatprep.subr.mxu0 0.0
        %273 = vmatpush1.msra.mxu0 0.0
        %274 = vmatprep.subr.mxu0 0.0
        %275 = vmatpush1.msra.mxu0 0.0
        %276 = vmatprep.subr.mxu0 0.0
        %277 = vmatpush1.msra.mxu0 0.0
        %278 = vmatprep.subr.mxu0 0.0
        %279 = vmatpush1.msra.mxu0 0.0
        %280 = vmatprep.subr.mxu0 0.0
        %281 = vmatpush1.msra.mxu0 0.0
        %282 = vmatprep.subr.mxu0 0.0
        %283 = vmatpush1.msra.mxu0 0.0
        %284 = vmatprep.subr.mxu0 0.0
        %285 = vmatpush1.msra.mxu0 0.0
        %286 = vmatprep.subr.mxu0 0.0
        %287 = vmatpush1.msra.mxu0 0.0
        %288 = vmatprep.subr.mxu0 0.0
        %289 = vmatpush1.msra.mxu0 0.0
        %290 = vmatprep.subr.mxu0 0.0
        %291 = vmatpush1.msra.mxu0 0.0
        %292 = vmatprep.subr.mxu0 0.0
        %293 = vmatpush1.msra.mxu0 0.0
        %294 = vmatprep.subr.mxu0 0.0
        %295 = vmatpush1.msra.mxu0 0.0
        %296 = vmatprep.subr.mxu0 0.0
        %297 = vmatpush1.msra.mxu0 0.0
        %298 = vmatprep.subr.mxu0 0.0
        %299 = vmatpush1.msra.mxu0 0.0
        %300 = vmatprep.subr.mxu0 0.0
        %301 = vmatpush1.msra.mxu0 0.0
        %302 = vmatprep.mubr.f32.mxu0 0.0
        %303 = vmatmul.mubr.f32.gmra.mrb[0].mxu0 %v233
        %v304 = vpop.f32.mrb[0].mxu0
        %v305 = vadd.f32 %v229, %v304
        %v306 = vpop.f32.mrb[0].mxu0
        %307 = vmatprep.mubr.f32.mxu0 0.0
        %308 = vmatmul.mubr.f32.gmra.mrb[0].mxu0 %v236
        %v309 = vpop.f32.mrb[0].mxu0
        %v310 = vadd.f32 %v229, %v309
        %v311 = vpop.f32.mrb[0].mxu0
        %312 = vdwg.mxu0
        %vm313 = vcmask 785408
        %314 = vst.msk [vmem:[%s215] sm:$0xff] %vm313, %v305
        %315 = vst.msk [vmem:[%s215 + $0x8] sm:$0xff] %vm313, %v310
        %s316 = sand.u32 %s97, 1
        %s317 = scalar_lea.sflag [#allocation4], %s316
        %s318 = sand.u32 %s97, 1
        %s319 = smul.addr %s318, 16
        %s320 = scalar_lea.vmem [#allocation8], %s319
        // Predicated region
        $region45: #{encoder_layer.4} parent=31 // pred_check
          %p321 = pneg %p107
        $region46: #{encoder_layer.4} parent=31 // pred_check_branch
          %323 = sbr.rel (%p321) target = $region48
        $region47: #{encoder_layer.4} parent=31 // pred_region
          %s324 = smul.u32 2, %s21
          %s326 = ssub.s32 256, 256
          %327 = vsyncadd %s317, %s326
          %s328 = smul.addr %s324, 128
          %s329 = scalar_lea.hbm %s3, %s328
          %s330 = sshll.u32 %s320, 4
          %s331 = int_to_ptr.vmem [resolvable:$true] %s330
          %336 = dma.vmem_to_hbm [thread:$0]  %s331, 256, %s329, %s317, 128, 128, 8
        $region48: #{encoder_layer.4} parent=31 // pred_fallthru
          _
      $region32: #{encoder_layer.4} parent=5 // pred_fallthru
        _
      %p337 = scmp.le.s32.totalorder 2, %s16
      // Predicated region
      $region49: #{encoder_layer.4} parent=5 // pred_check
        %p338 = pneg %p337
      $region50: #{encoder_layer.4} parent=5 // pred_check_branch
        %340 = sbr.rel (%p338) target = $region52
      $region51: #{encoder_layer.4} parent=5 // pred_region
        %s341 = ssub.s32 %s16, 2
        // Predicated region
        $region53: #{encoder_layer.4} parent=51 // pred_check
          %p342 = pneg %p113
        $region54: #{encoder_layer.4} parent=51 // pred_check_branch
          %344 = sbr.rel (%p342) target = $region56
        $region55: #{encoder_layer.4} parent=51 // pred_region
          %s345 = sand.u32 %s98, 1
          %s346 = scalar_lea.sflag [#allocation4], %s345
          %s347 = sand.u32 %s98, 1
          %s348 = smul.addr %s347, 16
          %s349 = scalar_lea.vmem [#allocation8], %s348
          %350 = dma.done %s346, 256
        $region56: #{encoder_layer.4} parent=51 // pred_fallthru
          _
      $region52: #{encoder_layer.4} parent=5 // pred_fallthru
        _
    $region6: #{encoder_layer.4} parent=1 // loop_footer
      %s20 = sadd.s32 1, %s16
    $region7: #{encoder_layer.4} parent=1 // loop_footer_branch
      %15 = sbr.rel target = $region3
    $region8: #{encoder_layer.4} parent=1 // loop_exit
      _
    %351 = vsyncpa [#allocation3], 1
    %s352 = scalar_lea.sflag [#allocation3], 1
    %353 = vsyncpa %s352, 1
    %354 = vsyncpa [#allocation6], 1
    %355 = vsyncpa [#allocation4], 1
    %s356 = scalar_lea.sflag [#allocation4], 1
    %357 = vsyncpa %s356, 1

// kernel: encoder_layer.6
$region0: #{encoder_layer.6}
  #allocation0 [shape = 'u32[]', space=smem, size = 0x4, offset = 0x4, fixed_abs, tag = 'smem constant byte address 0x4 - core index']
  #allocation1 [shape = 'u32[144,128]{1,0:T(1,128)}', space=vmem, size = 0x12000, scoped, tag = 'internal scratch']
  %s0 = inlined_call_operand.hbm [shape: f32[32,32], index: 0, kind: input, shape index: {}]
  %s1 = inlined_call_operand.hbm [shape: f32[32,32], index: 1, kind: input, shape index: {}]
  %s2 = inlined_call_operand.hbm [shape: f32[1,32], index: 2, kind: input, shape index: {}]
  %s3 = inlined_call_operand.hbm [shape: f32[32,32], index: 3, kind: input, shape index: {}]
  %s4 = inlined_call_operand.hbm [shape: f32[1,32], index: 4, kind: input, shape index: {}]
  %s5 = inlined_call_operand.hbm [shape: f32[1,32], index: 5, kind: input, shape index: {}]
  %s6 = inlined_call_operand.hbm [shape: f32[32,32], index: 6, kind: output, shape index: {}]
  %s7 = sld [smem:[#allocation0]]
  $region81: #{encoder_layer.6} parent=0
    _
  %s9 = ssub.s32 1, %s7
  %s10 = scalar_select 0, %s9, %s7
  $region1: #{encoder_layer.6} parent=0
    #allocation2 [shape = 'u8[16384]{0}', space=vmem, size = 0x4000, scoped, tag = 'input window, operand 0']
    #allocation3 [shape = 's32[2]{0}', space=sflag, size = 0x8, scoped, tag = 'scoped memory for encoder_layer.6']
    #allocation4 [shape = 's32[2]{0}', space=sflag, size = 0x8, scoped, tag = 'scoped memory for encoder_layer.6']
    #allocation5 [shape = 'u8[16384]{0}', space=vmem, size = 0x4000, scoped, tag = 'input window, operand 1, single buffered']
    #allocation6 [shape = 's32[1]{0}', space=sflag, size = 0x4, scoped, tag = 'scoped memory for encoder_layer.6']
    #allocation7 [shape = 'u8[512]{0}', space=vmem, size = 0x400, scoped, tag = 'input window, operand 2, single buffered']
    #allocation8 [shape = 'u8[16384]{0}', space=vmem, size = 0x4000, scoped, tag = 'input window, operand 3']
    #allocation9 [shape = 's32[2]{0}', space=sflag, size = 0x8, scoped, tag = 'scoped memory for encoder_layer.6']
    #allocation10 [shape = 'u8[512]{0}', space=vmem, size = 0x400, scoped, tag = 'input window, operand 4, single buffered']
    #allocation11 [shape = 'u8[512]{0}', space=vmem, size = 0x400, scoped, tag = 'input window, operand 5, single buffered']
    #allocation12 [shape = 's32[1]{0}', space=sflag, size = 0x4, scoped, tag = 'scoped memory for encoder_layer.6']
    #allocation13 [shape = 'u8[16384]{0}', space=vmem, size = 0x4000, scoped, tag = 'output window, operand 0']
    %11 = vsyncpa [#allocation3], 0
    %s12 = scalar_lea.sflag [#allocation3], 1
    %13 = vsyncpa %s12, 0
    %14 = vsyncpa [#allocation6], 0
    %15 = vsyncpa [#allocation9], 0
    %s16 = scalar_lea.sflag [#allocation9], 1
    %17 = vsyncpa %s16, 0
    %18 = vsyncpa [#allocation12], 0
    %19 = vsyncpa [#allocation4], 0
    %s20 = scalar_lea.sflag [#allocation4], 1
    %21 = vsyncpa %s20, 0
    loop: start=0, step=1, limit=4
    $region2: #{encoder_layer.6} parent=1 // loop_pre_header
      _
    $region3: #{encoder_layer.6} parent=1 // loop_header
      %s23 = sphi 0, %s27
      %p24 = scmp.ge.s32.totalorder %s23, 4
      %s33 = sphi 0, %s35
      %s36 = sphi 0, %s33
      %s37 = sphi 0, %s36
      %s53 = sphi 0, %s37
      %s57 = sphi 0, %s57
      %s59 = sphi 0, %s57
      %s60 = sphi 0, %s59
      %s74 = sphi 0, %s60
      %s78 = sphi 0, %s78
      %s80 = sphi 0, %s78
      %s81 = sphi 0, %s80
      %s95 = sphi 0, %s81
      %s101 = sphi 0, %s103
      %s104 = sphi 0, %s101
      %s105 = sphi 0, %s104
      %s121 = sphi 0, %s105
      %s125 = sphi 0, %s125
      %s127 = sphi 0, %s125
      %s128 = sphi 0, %s127
      %s142 = sphi 0, %s128
      %s146 = sphi 0, %s146
      %s148 = sphi 0, %s146
      %s149 = sphi 0, %s148
      %s163 = sphi 0, %s149
      %s169 = sphi 0, %s171
      %s172 = sphi 0, %s169
      %s173 = sphi 0, %s172
      %s189 = sphi 0, %s173
    $region4: #{encoder_layer.6} parent=1 // loop_header_branch
      %26 = sbr.rel (%p24) target = $region8
    $region5: #{encoder_layer.6} parent=1 // loop_body
      %s28 = ssub.s32 %s23, 1
      %s29 = ssub.s32 %s23, 2
      %s30 = sadd.s32 %s23, 1
      %s31 = ssub.s32 %s23, %s30
      %p32 = scmp.eq.s32.totalorder %s31, 0
      %s34 = sadd.s32 %s33, 1
      %s35 = scalar_select %p32, %s33, %s34
      %p38 = pneg %p32
      %p39 = scmp.eq.s32.totalorder %s23, 1
      %p40 = por %p38, %p39
      %p41 = scmp.ne.s32.totalorder %s33, %s36
      %p42 = scmp.eq.s32.totalorder %s23, 0
      %p43 = por %p41, %p42
      %p44 = scmp.ne.s32.totalorder %s33, %s36
      %p45 = scmp.eq.s32.totalorder %s28, 1
      %p46 = por %p44, %p45
      %p47 = scmp.ne.s32.totalorder %s36, %s37
      %p48 = scmp.eq.s32.totalorder %s28, 0
      %p49 = por %p47, %p48
      %p50 = scmp.ne.s32.totalorder %s36, %s37
      %p51 = scmp.eq.s32.totalorder %s29, 1
      %p52 = por %p50, %p51
      %p54 = scmp.ne.s32.totalorder %s37, %s53
      %p55 = scmp.eq.s32.totalorder %s29, 0
      %p56 = por %p54, %p55
      %s58 = sadd.s32 %s57, 1
      %p61 = scmp.eq.s32.totalorder %s23, 1
      %p62 = scmp.ne.s32.totalorder %s57, %s59
      %p63 = scmp.eq.s32.totalorder %s23, 0
      %p64 = por %p62, %p63
      %p65 = scmp.ne.s32.totalorder %s57, %s59
      %p66 = scmp.eq.s32.totalorder %s28, 1
      %p67 = por %p65, %p66
      %p68 = scmp.ne.s32.totalorder %s59, %s60
      %p69 = scmp.eq.s32.totalorder %s28, 0
      %p70 = por %p68, %p69
      %p71 = scmp.ne.s32.totalorder %s59, %s60
      %p72 = scmp.eq.s32.totalorder %s29, 1
      %p73 = por %p71, %p72
      %p75 = scmp.ne.s32.totalorder %s60, %s74
      %p76 = scmp.eq.s32.totalorder %s29, 0
      %p77 = por %p75, %p76
      %s79 = sadd.s32 %s78, 1
      %p82 = scmp.eq.s32.totalorder %s23, 1
      %p83 = scmp.ne.s32.totalorder %s78, %s80
      %p84 = scmp.eq.s32.totalorder %s23, 0
      %p85 = por %p83, %p84
      %p86 = scmp.ne.s32.totalorder %s78, %s80
      %p87 = scmp.eq.s32.totalorder %s28, 1
      %p88 = por %p86, %p87
      %p89 = scmp.ne.s32.totalorder %s80, %s81
      %p90 = scmp.eq.s32.totalorder %s28, 0
      %p91 = por %p89, %p90
      %p92 = scmp.ne.s32.totalorder %s80, %s81
      %p93 = scmp.eq.s32.totalorder %s29, 1
      %p94 = por %p92, %p93
      %p96 = scmp.ne.s32.totalorder %s81, %s95
      %p97 = scmp.eq.s32.totalorder %s29, 0
      %p98 = por %p96, %p97
      %s99 = ssub.s32 %s23, %s30
      %p100 = scmp.eq.s32.totalorder %s99, 0
      %s102 = sadd.s32 %s101, 1
      %s103 = scalar_select %p100, %s101, %s102
      %p106 = pneg %p100
      %p107 = scmp.eq.s32.totalorder %s23, 1
      %p108 = por %p106, %p107
      %p109 = scmp.ne.s32.totalorder %s101, %s104
      %p110 = scmp.eq.s32.totalorder %s23, 0
      %p111 = por %p109, %p110
      %p112 = scmp.ne.s32.totalorder %s101, %s104
      %p113 = scmp.eq.s32.totalorder %s28, 1
      %p114 = por %p112, %p113
      %p115 = scmp.ne.s32.totalorder %s104, %s105
      %p116 = scmp.eq.s32.totalorder %s28, 0
      %p117 = por %p115, %p116
      %p118 = scmp.ne.s32.totalorder %s104, %s105
      %p119 = scmp.eq.s32.totalorder %s29, 1
      %p120 = por %p118, %p119
      %p122 = scmp.ne.s32.totalorder %s105, %s121
      %p123 = scmp.eq.s32.totalorder %s29, 0
      %p124 = por %p122, %p123
      %s126 = sadd.s32 %s125, 1
      %p129 = scmp.eq.s32.totalorder %s23, 1
      %p130 = scmp.ne.s32.totalorder %s125, %s127
      %p131 = scmp.eq.s32.totalorder %s23, 0
      %p132 = por %p130, %p131
      %p133 = scmp.ne.s32.totalorder %s125, %s127
      %p134 = scmp.eq.s32.totalorder %s28, 1
      %p135 = por %p133, %p134
      %p136 = scmp.ne.s32.totalorder %s127, %s128
      %p137 = scmp.eq.s32.totalorder %s28, 0
      %p138 = por %p136, %p137
      %p139 = scmp.ne.s32.totalorder %s127, %s128
      %p140 = scmp.eq.s32.totalorder %s29, 1
      %p141 = por %p139, %p140
      %p143 = scmp.ne.s32.totalorder %s128, %s142
      %p144 = scmp.eq.s32.totalorder %s29, 0
      %p145 = por %p143, %p144
      %s147 = sadd.s32 %s146, 1
      %p150 = scmp.eq.s32.totalorder %s23, 1
      %p151 = scmp.ne.s32.totalorder %s146, %s148
      %p152 = scmp.eq.s32.totalorder %s23, 0
      %p153 = por %p151, %p152
      %p154 = scmp.ne.s32.totalorder %s146, %s148
      %p155 = scmp.eq.s32.totalorder %s28, 1
      %p156 = por %p154, %p155
      %p157 = scmp.ne.s32.totalorder %s148, %s149
      %p158 = scmp.eq.s32.totalorder %s28, 0
      %p159 = por %p157, %p158
      %p160 = scmp.ne.s32.totalorder %s148, %s149
      %p161 = scmp.eq.s32.totalorder %s29, 1
      %p162 = por %p160, %p161
      %p164 = scmp.ne.s32.totalorder %s149, %s163
      %p165 = scmp.eq.s32.totalorder %s29, 0
      %p166 = por %p164, %p165
      %s167 = ssub.s32 %s23, %s30
      %p168 = scmp.eq.s32.totalorder %s167, 0
      %s170 = sadd.s32 %s169, 1
      %s171 = scalar_select %p168, %s169, %s170
      %p174 = pneg %p168
      %p175 = scmp.eq.s32.totalorder %s23, 1
      %p176 = por %p174, %p175
      %p177 = scmp.ne.s32.totalorder %s169, %s172
      %p178 = scmp.eq.s32.totalorder %s23, 0
      %p179 = por %p177, %p178
      %p180 = scmp.ne.s32.totalorder %s169, %s172
      %p181 = scmp.eq.s32.totalorder %s28, 1
      %p182 = por %p180, %p181
      %p183 = scmp.ne.s32.totalorder %s172, %s173
      %p184 = scmp.eq.s32.totalorder %s28, 0
      %p185 = por %p183, %p184
      %p186 = scmp.ne.s32.totalorder %s172, %s173
      %p187 = scmp.eq.s32.totalorder %s29, 1
      %p188 = por %p186, %p187
      %p190 = scmp.ne.s32.totalorder %s173, %s189
      %p191 = scmp.eq.s32.totalorder %s29, 0
      %p192 = por %p190, %p191
      %p193 = scmp.le.s32.totalorder 1, %s23
      %p194 = scmp.lt.s32.totalorder %s23, 3
      %p195 = pnand %p193, %p194
      %p196 = pneg %p195
      // Predicated region
      $region9: #{encoder_layer.6} parent=5 // pred_check
        _
      $region10: #{encoder_layer.6} parent=5 // pred_check_branch
        %198 = sbr.rel (%p195) target = $region12
      $region11: #{encoder_layer.6} parent=5 // pred_region
        %s199 = ssub.s32 %s23, 1
        // Predicated region
        $region13: #{encoder_layer.6} parent=11 // pred_check
          %p200 = pneg %p70
        $region14: #{encoder_layer.6} parent=11 // pred_check_branch
          %202 = sbr.rel (%p200) target = $region16
        $region15: #{encoder_layer.6} parent=11 // pred_region
          %s204 = ssub.s32 512, 512
          %205 = vsyncadd [#allocation6], %s204
          %s206 = sshll.u32 [#allocation5], 4
          %s207 = int_to_ptr.vmem [resolvable:$true] %s206
          %212 = dma.hbm_to_vmem [thread:$0]  %s1, 512, %s207, [#allocation6], 128, 128, 8
        $region16: #{encoder_layer.6} parent=11 // pred_fallthru
          _
        // Predicated region
        $region17: #{encoder_layer.6} parent=11 // pred_check
          %p213 = pneg %p91
        $region18: #{encoder_layer.6} parent=11 // pred_check_branch
          %215 = sbr.rel (%p213) target = $region20
        $region19: #{encoder_layer.6} parent=11 // pred_region
          %s217 = ssub.s32 16, 16
          %218 = vsyncadd [#allocation6], %s217
          %s220 = sshll.u32 [#allocation7], 4
          %s221 = int_to_ptr.vmem [resolvable:$true] %s220
          %223 = dma.hbm_to_vmem [thread:$0]  %s2, 16, %s221, [#allocation6]
        $region20: #{encoder_layer.6} parent=11 // pred_fallthru
          _
        // Predicated region
        $region21: #{encoder_layer.6} parent=11 // pred_check
          %p224 = pneg %p138
        $region22: #{encoder_layer.6} parent=11 // pred_check_branch
          %226 = sbr.rel (%p224) target = $region24
        $region23: #{encoder_layer.6} parent=11 // pred_region
          %s228 = ssub.s32 16, 16
          %229 = vsyncadd [#allocation9], %s228
          %s231 = sshll.u32 [#allocation10], 4
          %s232 = int_to_ptr.vmem [resolvable:$true] %s231
          %234 = dma.hbm_to_vmem [thread:$0]  %s4, 16, %s232, [#allocation9]
        $region24: #{encoder_layer.6} parent=11 // pred_fallthru
          _
        // Predicated region
        $region25: #{encoder_layer.6} parent=11 // pred_check
          %p235 = pneg %p159
        $region26: #{encoder_layer.6} parent=11 // pred_check_branch
          %237 = sbr.rel (%p235) target = $region28
        $region27: #{encoder_layer.6} parent=11 // pred_region
          %s239 = ssub.s32 16, 16
          %240 = vsyncadd [#allocation12], %s239
          %s242 = sshll.u32 [#allocation11], 4
          %s243 = int_to_ptr.vmem [resolvable:$true] %s242
          %245 = dma.hbm_to_vmem [thread:$0]  %s5, 16, %s243, [#allocation12]
        $region28: #{encoder_layer.6} parent=11 // pred_fallthru
          _
      $region12: #{encoder_layer.6} parent=5 // pred_fallthru
        _
      %p246 = scmp.lt.s32.totalorder %s23, 2
      // Predicated region
      $region29: #{encoder_layer.6} parent=5 // pred_check
        %p247 = pneg %p246
      $region30: #{encoder_layer.6} parent=5 // pred_check_branch
        %249 = sbr.rel (%p247) target = $region32
      $region31: #{encoder_layer.6} parent=5 // pred_region
        // Predicated region
        $region33: #{encoder_layer.6} parent=31 // pred_check
          %p250 = pneg %p43
        $region34: #{encoder_layer.6} parent=31 // pred_check_branch
          %252 = sbr.rel (%p250) target = $region36
        $region35: #{encoder_layer.6} parent=31 // pred_region
          %s253 = sand.u32 %s33, 1
          %s254 = scalar_lea.sflag [#allocation3], %s253
          %s255 = sand.u32 %s33, 1
          %s256 = smul.addr %s255, 16
          %s257 = scalar_lea.vmem [#allocation2], %s256
          %s258 = smul.u32 2, %s23
          %s260 = ssub.s32 256, 256
          %261 = vsyncadd %s254, %s260
          %s262 = smul.addr %s258, 128
          %s263 = scalar_lea.hbm %s0, %s262
          %s264 = sshll.u32 %s257, 4
          %s265 = int_to_ptr.vmem [resolvable:$true] %s264
          %270 = dma.hbm_to_vmem [thread:$0]  %s263, 256, %s265, %s254, 128, 128, 8
        $region36: #{encoder_layer.6} parent=31 // pred_fallthru
          _
        // Predicated region
        $region37: #{encoder_layer.6} parent=31 // pred_check
          %p271 = pneg %p111
        $region38: #{encoder_layer.6} parent=31 // pred_check_branch
          %273 = sbr.rel (%p271) target = $region40
        $region39: #{encoder_layer.6} parent=31 // pred_region
          %s274 = sand.u32 %s23, 1
          %s275 = scalar_lea.sflag [#allocation9], %s274
          %s276 = sand.u32 %s101, 1
          %s277 = smul.addr %s276, 16
          %s278 = scalar_lea.vmem [#allocation8], %s277
          %s279 = smul.u32 2, %s23
          %s281 = ssub.s32 256, 256
          %282 = vsyncadd %s275, %s281
          %s283 = smul.addr %s279, 128
          %s284 = scalar_lea.hbm %s3, %s283
          %s285 = sshll.u32 %s278, 4
          %s286 = int_to_ptr.vmem [resolvable:$true] %s285
          %291 = dma.hbm_to_vmem [thread:$0]  %s284, 256, %s286, %s275, 128, 128, 8
        $region40: #{encoder_layer.6} parent=31 // pred_fallthru
          _
      $region32: #{encoder_layer.6} parent=5 // pred_fallthru
        _
      %p292 = scmp.le.s32.totalorder 1, %s23
      %p293 = scmp.lt.s32.totalorder %s23, 3
      %p294 = pnand %p292, %p293
      %p295 = pneg %p294
      // Predicated region
      $region41: #{encoder_layer.6} parent=5 // pred_check
        _
      $region42: #{encoder_layer.6} parent=5 // pred_check_branch
        %297 = sbr.rel (%p294) target = $region44
      $region43: #{encoder_layer.6} parent=5 // pred_region
        %s298 = ssub.s32 %s23, 1
        %s299 = sand.u32 %s36, 1
        %s300 = scalar_lea.sflag [#allocation3], %s299
        %s301 = sand.u32 %s36, 1
        %s302 = smul.addr %s301, 16
        %s303 = scalar_lea.vmem [#allocation2], %s302
        // Predicated region
        $region45: #{encoder_layer.6} parent=43 // pred_check
          %p304 = pneg %p49
        $region46: #{encoder_layer.6} parent=43 // pred_check_branch
          %306 = sbr.rel (%p304) target = $region48
        $region47: #{encoder_layer.6} parent=43 // pred_region
          %307 = dma.done %s300, 256
        $region48: #{encoder_layer.6} parent=43 // pred_fallthru
          _
        // Predicated region
        $region49: #{encoder_layer.6} parent=43 // pred_check
          %p308 = pneg %p70
        $region50: #{encoder_layer.6} parent=43 // pred_check_branch
          %310 = sbr.rel (%p308) target = $region52
        $region51: #{encoder_layer.6} parent=43 // pred_region
          %311 = dma.done [#allocation6], 512
        $region52: #{encoder_layer.6} parent=43 // pred_fallthru
          _
        // Predicated region
        $region53: #{encoder_layer.6} parent=43 // pred_check
          %p312 = pneg %p91
        $region54: #{encoder_layer.6} parent=43 // pred_check_branch
          %314 = sbr.rel (%p312) target = $region56
        $region55: #{encoder_layer.6} parent=43 // pred_region
          %315 = dma.done [#allocation6], 16
        $region56: #{encoder_layer.6} parent=43 // pred_fallthru
          _
        %s316 = sand.u32 %s28, 1
        %s317 = scalar_lea.sflag [#allocation9], %s316
        %s318 = sand.u32 %s104, 1
        %s319 = smul.addr %s318, 16
        %s320 = scalar_lea.vmem [#allocation8], %s319
        // Predicated region
        $region57: #{encoder_layer.6} parent=43 // pred_check
          %p321 = pneg %p117
        $region58: #{encoder_layer.6} parent=43 // pred_check_branch
          %323 = sbr.rel (%p321) target = $region60
        $region59: #{encoder_layer.6} parent=43 // pred_region
          %324 = dma.done %s317, 256
        $region60: #{encoder_layer.6} parent=43 // pred_fallthru
          _
        // Predicated region
        $region61: #{encoder_layer.6} parent=43 // pred_check
          %p325 = pneg %p138
        $region62: #{encoder_layer.6} parent=43 // pred_check_branch
          %327 = sbr.rel (%p325) target = $region64
        $region63: #{encoder_layer.6} parent=43 // pred_region
          %328 = dma.done [#allocation9], 16
        $region64: #{encoder_layer.6} parent=43 // pred_fallthru
          _
        // Predicated region
        $region65: #{encoder_layer.6} parent=43 // pred_check
          %p329 = pneg %p159
        $region66: #{encoder_layer.6} parent=43 // pred_check_branch
          %331 = sbr.rel (%p329) target = $region68
        $region67: #{encoder_layer.6} parent=43 // pred_region
          %332 = dma.done [#allocation12], 16
        $region68: #{encoder_layer.6} parent=43 // pred_fallthru
          _
        %s333 = sand.u32 %s36, 1
        %s334 = scalar_lea.sflag [#allocation3], %s333
        %s335 = sand.u32 %s36, 1
        %s336 = smul.addr %s335, 16
        %s337 = scalar_lea.vmem [#allocation2], %s336
        %p338 = pneg %p49
        %p339 = pneg %p46
        %p340 = pneg %p70
        %p341 = pneg %p67
        %p342 = pneg %p91
        %p343 = pneg %p88
        %s344 = sand.u32 %s28, 1
        %s345 = scalar_lea.sflag [#allocation9], %s344
        %s346 = sand.u32 %s104, 1
        %s347 = smul.addr %s346, 16
        %s348 = scalar_lea.vmem [#allocation8], %s347
        %p349 = pneg %p117
        %p350 = pneg %p114
        %p351 = pneg %p138
        %p352 = pneg %p135
        %p353 = pneg %p159
        %p354 = pneg %p156
        %p355 = pneg %p185
        %p356 = pneg %p182
        %s357 = sand.u32 %s172, 1
        %s358 = scalar_lea.sflag [#allocation4], %s357
        %s359 = sand.u32 %s172, 1
        %s360 = smul.addr %s359, 16
        %s361 = scalar_lea.vmem [#allocation13], %s360
        %s362 = smul.u32 2, %s28
        %s363 = smul.u32 2, %s28
        %s364 = smul.u32 2, %s28
        %v365 = vld [vmem:[%s303] sm:$0xff]
        %v366 = vld [vmem:[%s303 + $0x8] sm:$0xff]
        %v367 = vld [vmem:[#allocation5] sm:$0xff]
        %v368 = vld [vmem:[#allocation5 + $0x8] sm:$0xff]
        %v369 = vld [vmem:[#allocation5 + $0x10] sm:$0xff]
        %v370 = vld [vmem:[#allocation5 + $0x18] sm:$0xff]
        %v371 = vld [vmem:[#allocation7] sm:$0x1]
        %v373 = vlaneseq
        %v374 = vshrl.u32 %v373, 7
        %v375 = vsub.s32 0, %v374
        %v376 = vrot.slane %v371, %v375
        %vm378 = vcmask 261120
        %v380 = vsel %vm378, %v365, 0
        %v383 = vsel %vm378, %v366, 0
        %385 = vmatprep.subr.mxu0 0.0
        %386 = vmatpush1.msra.mxu0 %v367
        %387 = vmatprep.subr.mxu0 0.0
        %388 = vmatpush1.msra.mxu0 %v368
        %389 = vmatprep.subr.mxu0 0.0
        %390 = vmatpush1.msra.mxu0 %v369
        %391 = vmatprep.subr.mxu0 0.0
        %392 = vmatpush1.msra.mxu0 %v370
        %393 = vmatprep.subr.mxu0 0.0
        %394 = vmatpush1.msra.mxu0 0.0
        %395 = vmatprep.subr.mxu0 0.0
        %396 = vmatpush1.msra.mxu0 0.0
        %397 = vmatprep.subr.mxu0 0.0
        %398 = vmatpush1.msra.mxu0 0.0
        %399 = vmatprep.subr.mxu0 0.0
        %400 = vmatpush1.msra.mxu0 0.0
        %401 = vmatprep.subr.mxu0 0.0
        %402 = vmatpush1.msra.mxu0 0.0
        %403 = vmatprep.subr.mxu0 0.0
        %404 = vmatpush1.msra.mxu0 0.0
        %405 = vmatprep.subr.mxu0 0.0
        %406 = vmatpush1.msra.mxu0 0.0
        %407 = vmatprep.subr.mxu0 0.0
        %408 = vmatpush1.msra.mxu0 0.0
        %409 = vmatprep.subr.mxu0 0.0
        %410 = vmatpush1.msra.mxu0 0.0
        %411 = vmatprep.subr.mxu0 0.0
        %412 = vmatpush1.msra.mxu0 0.0
        %413 = vmatprep.subr.mxu0 0.0
        %414 = vmatpush1.msra.mxu0 0.0
        %415 = vmatprep.subr.mxu0 0.0
        %416 = vmatpush1.msra.mxu0 0.0
        %417 = vmatprep.subr.mxu0 0.0
        %418 = vmatpush1.msra.mxu0 0.0
        %419 = vmatprep.subr.mxu0 0.0
        %420 = vmatpush1.msra.mxu0 0.0
        %421 = vmatprep.subr.mxu0 0.0
        %422 = vmatpush1.msra.mxu0 0.0
        %423 = vmatprep.subr.mxu0 0.0
        %424 = vmatpush1.msra.mxu0 0.0
        %425 = vmatprep.subr.mxu0 0.0
        %426 = vmatpush1.msra.mxu0 0.0
        %427 = vmatprep.subr.mxu0 0.0
        %428 = vmatpush1.msra.mxu0 0.0
        %429 = vmatprep.subr.mxu0 0.0
        %430 = vmatpush1.msra.mxu0 0.0
        %431 = vmatprep.subr.mxu0 0.0
        %432 = vmatpush1.msra.mxu0 0.0
        %433 = vmatprep.subr.mxu0 0.0
        %434 = vmatpush1.msra.mxu0 0.0
        %435 = vmatprep.subr.mxu0 0.0
        %436 = vmatpush1.msra.mxu0 0.0
        %437 = vmatprep.subr.mxu0 0.0
        %438 = vmatpush1.msra.mxu0 0.0
        %439 = vmatprep.subr.mxu0 0.0
        %440 = vmatpush1.msra.mxu0 0.0
        %441 = vmatprep.subr.mxu0 0.0
        %442 = vmatpush1.msra.mxu0 0.0
        %443 = vmatprep.subr.mxu0 0.0
        %444 = vmatpush1.msra.mxu0 0.0
        %445 = vmatprep.subr.mxu0 0.0
        %446 = vmatpush1.msra.mxu0 0.0
        %447 = vmatprep.subr.mxu0 0.0
        %448 = vmatpush1.msra.mxu0 0.0
        %449 = vmatprep.mubr.f32.mxu0 0.0
        %450 = vmatmul.mubr.f32.gmra.mrb[0].mxu0 %v380
        %v451 = vpop.f32.mrb[0].mxu0
        %v452 = vadd.f32 %v376, %v451
        %v453 = vpop.f32.mrb[0].mxu0
        %454 = vmatprep.mubr.f32.mxu0 0.0
        %455 = vmatmul.mubr.f32.gmra.mrb[0].mxu0 %v383
        %v456 = vpop.f32.mrb[0].mxu0
        %v457 = vadd.f32 %v376, %v456
        %v458 = vpop.f32.mrb[0].mxu0
        %459 = vdwg.mxu0
        %v460 = vld [vmem:[%s320] sm:$0xff]
        %v461 = vld [vmem:[%s320 + $0x8] sm:$0xff]
        %v462 = vadd.f32 %v452, %v460
        %v463 = vadd.f32 %v457, %v461
        %v464 = vld [vmem:[#allocation10] sm:$0x1]
        %v465 = vld [vmem:[#allocation11] sm:$0x1]
        %v466 = vsel %vm378, %v462, 0.0
        %467 = vadd.xlane.f32.xlu0 %v466
        %v468 = vpop.xlane.xlu0 %467
        %v469 = vsel %vm378, %v463, 0.0
        %470 = vadd.xlane.f32.xlu0 %v469
        %v471 = vpop.xlane.xlu0 %470
        %v472 = vrcp.pop 32.0
        %v473 = vmul.f32 %v468, %v472
        %v474 = vmul.f32 %v471, %v472
        %v475 = vsub.f32 %v462, %v473
        %v476 = vsub.f32 %v463, %v474
        %v477 = vmul.f32 %v475, %v475
        %v478 = vmul.f32 %v476, %v476
        %v479 = vsel %vm378, %v477, 0.0
        %480 = vadd.xlane.f32.xlu0 %v479
        %v481 = vpop.xlane.xlu0 %480
        %v482 = vsel %vm378, %v478, 0.0
        %483 = vadd.xlane.f32.xlu0 %v482
        %v484 = vpop.xlane.xlu0 %483
        %v485 = vmul.f32 %v481, %v472
        %v486 = vmul.f32 %v484, %v472
        %v487 = vadd.f32 %v485, 1e-05
        %v488 = vadd.f32 %v486, 1e-05
        %v489 = vrsqrt.pop %v487
        %v490 = vrsqrt.pop %v488
        %v491 = vmul.f32 %v475, %v489
        %v492 = vmul.f32 %v476, %v490
        %v494 = vlaneseq
        %v495 = vshrl.u32 %v494, 7
        %v496 = vsub.s32 0, %v495
        %v497 = vrot.slane %v464, %v496
        %v499 = vmul.f32 %v491, %v497
        %v500 = vmul.f32 %v492, %v497
        %v502 = vlaneseq
        %v503 = vshrl.u32 %v502, 7
        %v504 = vsub.s32 0, %v503
        %v505 = vrot.slane %v465, %v504
        %v507 = vadd.f32 %v499, %v505
        %v508 = vadd.f32 %v500, %v505
        %509 = vst.msk [vmem:[%s361] sm:$0xff] %vm378, %v507
        %510 = vst.msk [vmem:[%s361 + $0x8] sm:$0xff] %vm378, %v508
        %s511 = sand.u32 %s172, 1
        %s512 = scalar_lea.sflag [#allocation4], %s511
        %s513 = sand.u32 %s172, 1
        %s514 = smul.addr %s513, 16
        %s515 = scalar_lea.vmem [#allocation13], %s514
        // Predicated region
        $region69: #{encoder_layer.6} parent=43 // pred_check
          %p516 = pneg %p182
        $region70: #{encoder_layer.6} parent=43 // pred_check_branch
          %518 = sbr.rel (%p516) target = $region72
        $region71: #{encoder_layer.6} parent=43 // pred_region
          %s519 = smul.u32 2, %s28
          %s521 = ssub.s32 256, 256
          %522 = vsyncadd %s512, %s521
          %s523 = smul.addr %s519, 128
          %s524 = scalar_lea.hbm %s6, %s523
          %s525 = sshll.u32 %s515, 4
          %s526 = int_to_ptr.vmem [resolvable:$true] %s525
          %531 = dma.vmem_to_hbm [thread:$0]  %s526, 256, %s524, %s512, 128, 128, 8
        $region72: #{encoder_layer.6} parent=43 // pred_fallthru
          _
      $region44: #{encoder_layer.6} parent=5 // pred_fallthru
        _
      %p532 = scmp.le.s32.totalorder 2, %s23
      // Predicated region
      $region73: #{encoder_layer.6} parent=5 // pred_check
        %p533 = pneg %p532
      $region74: #{encoder_layer.6} parent=5 // pred_check_branch
        %535 = sbr.rel (%p533) target = $region76
      $region75: #{encoder_layer.6} parent=5 // pred_region
        %s536 = ssub.s32 %s23, 2
        // Predicated region
        $region77: #{encoder_layer.6} parent=75 // pred_check
          %p537 = pneg %p188
        $region78: #{encoder_layer.6} parent=75 // pred_check_branch
          %539 = sbr.rel (%p537) target = $region80
        $region79: #{encoder_layer.6} parent=75 // pred_region
          %s540 = sand.u32 %s173, 1
          %s541 = scalar_lea.sflag [#allocation4], %s540
          %s542 = sand.u32 %s173, 1
          %s543 = smul.addr %s542, 16
          %s544 = scalar_lea.vmem [#allocation13], %s543
          %545 = dma.done %s541, 256
        $region80: #{encoder_layer.6} parent=75 // pred_fallthru
          _
      $region76: #{encoder_layer.6} parent=5 // pred_fallthru
        _
    $region6: #{encoder_layer.6} parent=1 // loop_footer
      %s27 = sadd.s32 1, %s23
    $region7: #{encoder_layer.6} parent=1 // loop_footer_branch
      %22 = sbr.rel target = $region3
    $region8: #{encoder_layer.6} parent=1 // loop_exit
      _
    %546 = vsyncpa [#allocation3], 1
    %s547 = scalar_lea.sflag [#allocation3], 1
    %548 = vsyncpa %s547, 1
    %549 = vsyncpa [#allocation6], 1
    %550 = vsyncpa [#allocation9], 1
    %s551 = scalar_lea.sflag [#allocation9], 1
    %552 = vsyncpa %s551, 1
    %553 = vsyncpa [#allocation12], 1
    %554 = vsyncpa [#allocation4], 1
    %s555 = scalar_lea.sflag [#allocation4], 1
    %556 = vsyncpa %s555, 1

// kernel: encoder_layer.5
$region0: #{encoder_layer.5}
  #allocation0 [shape = 'u32[]', space=smem, size = 0x4, offset = 0x4, fixed_abs, tag = 'smem constant byte address 0x4 - core index']
  #allocation1 [shape = 'u32[144,128]{1,0:T(1,128)}', space=vmem, size = 0x12000, scoped, tag = 'internal scratch']
  #allocation2 [shape = 'f32[8,8,1]{2,1,0:T(8,128)}', space=vmem, size = 0x8000, scoped, tag = 'scratch operand']
  #allocation3 [shape = 'f32[8,8,1]{2,1,0:T(8,128)}', space=vmem, size = 0x8000, scoped, tag = 'scratch operand']
  #allocation4 [shape = 'f32[8,8,4]{2,1,0:T(8,128)}', space=vmem, size = 0x8000, scoped, tag = 'scratch operand']
  %s0 = inlined_call_operand.hbm [shape: f32[16,16,4], index: 0, kind: input, shape index: {}]
  %s1 = inlined_call_operand.hbm [shape: f32[16,16,4], index: 1, kind: input, shape index: {}]
  %s2 = inlined_call_operand.hbm [shape: f32[16,16,4], index: 2, kind: input, shape index: {}]
  %s3 = inlined_call_operand.hbm [shape: f32[16,16,4], index: 3, kind: output, shape index: {}]
  %s4 = sld [smem:[#allocation0]]
  $region65: #{encoder_layer.5} parent=0
    _
  %s6 = ssub.s32 1, %s4
  %s7 = scalar_select 0, %s6, %s4
  $region1: #{encoder_layer.5} parent=0
    #allocation5 [shape = 'u8[65536]{0}', space=vmem, size = 0x10000, scoped, tag = 'input window, operand 0']
    #allocation6 [shape = 's32[2]{0}', space=sflag, size = 0x8, scoped, tag = 'scoped memory for encoder_layer.5']
    #allocation7 [shape = 's32[2]{0}', space=sflag, size = 0x8, scoped, tag = 'scoped memory for encoder_layer.5']
    #allocation8 [shape = 'u8[65536]{0}', space=vmem, size = 0x10000, scoped, tag = 'input window, operand 1']
    #allocation9 [shape = 's32[2]{0}', space=sflag, size = 0x8, scoped, tag = 'scoped memory for encoder_layer.5']
    #allocation10 [shape = 'u8[65536]{0}', space=vmem, size = 0x10000, scoped, tag = 'input window, operand 2']
    #allocation11 [shape = 'u8[65536]{0}', space=vmem, size = 0x10000, scoped, tag = 'output window, operand 0']
    %8 = vsyncpa [#allocation6], 0
    %s9 = scalar_lea.sflag [#allocation6], 1
    %10 = vsyncpa %s9, 0
    %11 = vsyncpa [#allocation9], 0
    %s12 = scalar_lea.sflag [#allocation9], 1
    %13 = vsyncpa %s12, 0
    %14 = vsyncpa [#allocation7], 0
    %s15 = scalar_lea.sflag [#allocation7], 1
    %16 = vsyncpa %s15, 0
    loop: start=0, step=1, limit=10
    $region2: #{encoder_layer.5} parent=1 // loop_pre_header
      _
    $region3: #{encoder_layer.5} parent=1 // loop_header
      %s18 = sphi 0, %s22
      %p19 = scmp.ge.s32.totalorder %s18, 10
      %s25 = sphi 0, %s44
      %s26 = sphi 0, %s40
      %s27 = sphi 0, %s36
      %s28 = sphi 0, %s25
      %s29 = sphi 0, %s26
      %s30 = sphi 0, %s27
      %s31 = sphi 0, %s28
      %s32 = sphi 0, %s29
      %s33 = sphi 0, %s30
      %s49 = sphi 0, %s51
      %s52 = sphi 0, %s49
      %s53 = sphi 0, %s52
      %s69 = sphi 0, %s53
      %s77 = sphi 0, %s79
      %s80 = sphi 0, %s77
      %s81 = sphi 0, %s80
      %s97 = sphi 0, %s81
      %s105 = sphi 0, %s107
      %s108 = sphi 0, %s105
      %s109 = sphi 0, %s108
      %s125 = sphi 0, %s109
      %s133 = sphi 0, %s135
      %s136 = sphi 0, %s133
      %s137 = sphi 0, %s136
      %s153 = sphi 0, %s137
    $region4: #{encoder_layer.5} parent=1 // loop_header_branch
      %21 = sbr.rel (%p19) target = $region8
    $region5: #{encoder_layer.5} parent=1 // loop_body
      %s23 = ssub.s32 %s18, 1
      %s24 = ssub.s32 %s18, 2
      %s34 = sadd.s32 1, %s27
      %p35 = scmp.ge.s32.totalorder %s34, 2
      %s36 = scalar_select %p35, 0, %s34
      %s37 = sadd.s32 1, %s26
      %s38 = scalar_select %p35, %s37, %s26
      %p39 = scmp.ge.s32.totalorder %s38, 2
      %s40 = scalar_select %p39, 0, %s38
      %s41 = sadd.s32 1, %s25
      %s42 = scalar_select %p39, %s41, %s25
      %p43 = scmp.ge.s32.totalorder %s42, 2
      %s44 = scalar_select %p43, 0, %s42
      %s45 = ssub.s32 %s25, %s44
      %s46 = ssub.s32 %s26, %s40
      %s47 = sor.u32 %s45, %s46
      %p48 = scmp.eq.s32.totalorder %s47, 0
      %s50 = sadd.s32 %s49, 1
      %s51 = scalar_select %p48, %s49, %s50
      %p54 = pneg %p48
      %p55 = scmp.eq.s32.totalorder %s18, 7
      %p56 = por %p54, %p55
      %p57 = scmp.ne.s32.totalorder %s49, %s52
      %p58 = scmp.eq.s32.totalorder %s18, 0
      %p59 = por %p57, %p58
      %p60 = scmp.ne.s32.totalorder %s49, %s52
      %p61 = scmp.eq.s32.totalorder %s23, 7
      %p62 = por %p60, %p61
      %p63 = scmp.ne.s32.totalorder %s52, %s53
      %p64 = scmp.eq.s32.totalorder %s23, 0
      %p65 = por %p63, %p64
      %p66 = scmp.ne.s32.totalorder %s52, %s53
      %p67 = scmp.eq.s32.totalorder %s24, 7
      %p68 = por %p66, %p67
      %p70 = scmp.ne.s32.totalorder %s53, %s69
      %p71 = scmp.eq.s32.totalorder %s24, 0
      %p72 = por %p70, %p71
      %s73 = ssub.s32 %s25, %s44
      %s74 = ssub.s32 %s27, %s36
      %s75 = sor.u32 %s73, %s74
      %p76 = scmp.eq.s32.totalorder %s75, 0
      %s78 = sadd.s32 %s77, 1
      %s79 = scalar_select %p76, %s77, %s78
      %p82 = pneg %p76
      %p83 = scmp.eq.s32.totalorder %s18, 7
      %p84 = por %p82, %p83
      %p85 = scmp.ne.s32.totalorder %s77, %s80
      %p86 = scmp.eq.s32.totalorder %s18, 0
      %p87 = por %p85, %p86
      %p88 = scmp.ne.s32.totalorder %s77, %s80
      %p89 = scmp.eq.s32.totalorder %s23, 7
      %p90 = por %p88, %p89
      %p91 = scmp.ne.s32.totalorder %s80, %s81
      %p92 = scmp.eq.s32.totalorder %s23, 0
      %p93 = por %p91, %p92
      %p94 = scmp.ne.s32.totalorder %s80, %s81
      %p95 = scmp.eq.s32.totalorder %s24, 7
      %p96 = por %p94, %p95
      %p98 = scmp.ne.s32.totalorder %s81, %s97
      %p99 = scmp.eq.s32.totalorder %s24, 0
      %p100 = por %p98, %p99
      %s101 = ssub.s32 %s25, %s44
      %s102 = ssub.s32 %s27, %s36
      %s103 = sor.u32 %s101, %s102
      %p104 = scmp.eq.s32.totalorder %s103, 0
      %s106 = sadd.s32 %s105, 1
      %s107 = scalar_select %p104, %s105, %s106
      %p110 = pneg %p104
      %p111 = scmp.eq.s32.totalorder %s18, 7
      %p112 = por %p110, %p111
      %p113 = scmp.ne.s32.totalorder %s105, %s108
      %p114 = scmp.eq.s32.totalorder %s18, 0
      %p115 = por %p113, %p114
      %p116 = scmp.ne.s32.totalorder %s105, %s108
      %p117 = scmp.eq.s32.totalorder %s23, 7
      %p118 = por %p116, %p117
      %p119 = scmp.ne.s32.totalorder %s108, %s109
      %p120 = scmp.eq.s32.totalorder %s23, 0
      %p121 = por %p119, %p120
      %p122 = scmp.ne.s32.totalorder %s108, %s109
      %p123 = scmp.eq.s32.totalorder %s24, 7
      %p124 = por %p122, %p123
      %p126 = scmp.ne.s32.totalorder %s109, %s125
      %p127 = scmp.eq.s32.totalorder %s24, 0
      %p128 = por %p126, %p127
      %s129 = ssub.s32 %s25, %s44
      %s130 = ssub.s32 %s26, %s40
      %s131 = sor.u32 %s129, %s130
      %p132 = scmp.eq.s32.totalorder %s131, 0
      %s134 = sadd.s32 %s133, 1
      %s135 = scalar_select %p132, %s133, %s134
      %p138 = pneg %p132
      %p139 = scmp.eq.s32.totalorder %s18, 7
      %p140 = por %p138, %p139
      %p141 = scmp.ne.s32.totalorder %s133, %s136
      %p142 = scmp.eq.s32.totalorder %s18, 0
      %p143 = por %p141, %p142
      %p144 = scmp.ne.s32.totalorder %s133, %s136
      %p145 = scmp.eq.s32.totalorder %s23, 7
      %p146 = por %p144, %p145
      %p147 = scmp.ne.s32.totalorder %s136, %s137
      %p148 = scmp.eq.s32.totalorder %s23, 0
      %p149 = por %p147, %p148
      %p150 = scmp.ne.s32.totalorder %s136, %s137
      %p151 = scmp.eq.s32.totalorder %s24, 7
      %p152 = por %p150, %p151
      %p154 = scmp.ne.s32.totalorder %s137, %s153
      %p155 = scmp.eq.s32.totalorder %s24, 0
      %p156 = por %p154, %p155
      %p157 = scmp.le.s32.totalorder 1, %s18
      %p158 = scmp.lt.s32.totalorder %s18, 9
      %p159 = pnand %p157, %p158
      %p160 = pneg %p159
      // Predicated region
      $region9: #{encoder_layer.5} parent=5 // pred_check
        _
      $region10: #{encoder_layer.5} parent=5 // pred_check_branch
        %162 = sbr.rel (%p159) target = $region12
      $region11: #{encoder_layer.5} parent=5 // pred_region
        %s163 = ssub.s32 %s18, 1
      $region12: #{encoder_layer.5} parent=5 // pred_fallthru
        _
      %p164 = scmp.lt.s32.totalorder %s18, 8
      // Predicated region
      $region13: #{encoder_layer.5} parent=5 // pred_check
        %p165 = pneg %p164
      $region14: #{encoder_layer.5} parent=5 // pred_check_branch
        %167 = sbr.rel (%p165) target = $region16
      $region15: #{encoder_layer.5} parent=5 // pred_region
        // Predicated region
        $region17: #{encoder_layer.5} parent=15 // pred_check
          %p168 = pneg %p59
        $region18: #{encoder_layer.5} parent=15 // pred_check_branch
          %170 = sbr.rel (%p168) target = $region20
        $region19: #{encoder_layer.5} parent=15 // pred_region
          %s171 = sand.u32 %s49, 1
          %s172 = scalar_lea.sflag [#allocation6], %s171
          %s173 = sand.u32 %s49, 1
          %s174 = smul.addr %s173, 64
          %s175 = scalar_lea.vmem [#allocation5], %s174
          %s176 = smul.u32 8, %s25
          %s178 = ssub.s32 1024, 1024
          %179 = vsyncadd %s172, %s178
          %s180 = smul.addr %s176, 2
          %s181 = sadd.s32 %s26, %s180
          %s182 = smul.addr %s181, 128
          %s183 = scalar_lea.hbm %s0, %s182
          %s184 = sshll.u32 %s175, 4
          %s185 = int_to_ptr.vmem [resolvable:$true] %s184
          %190 = dma.hbm_to_vmem [thread:$0]  %s183, 1024, %s185, %s172, 256, 128, 8
        $region20: #{encoder_layer.5} parent=15 // pred_fallthru
          _
        // Predicated region
        $region21: #{encoder_layer.5} parent=15 // pred_check
          %p191 = pneg %p87
        $region22: #{encoder_layer.5} parent=15 // pred_check_branch
          %193 = sbr.rel (%p191) target = $region24
        $region23: #{encoder_layer.5} parent=15 // pred_region
          %s194 = sand.u32 %s18, 1
          %s195 = scalar_lea.sflag [#allocation9], %s194
          %s196 = sand.u32 %s77, 1
          %s197 = smul.addr %s196, 64
          %s198 = scalar_lea.vmem [#allocation8], %s197
          %s199 = smul.u32 8, %s25
          %s201 = ssub.s32 1024, 1024
          %202 = vsyncadd %s195, %s201
          %s203 = smul.addr %s199, 2
          %s204 = sadd.s32 %s27, %s203
          %s205 = smul.addr %s204, 128
          %s206 = scalar_lea.hbm %s1, %s205
          %s207 = sshll.u32 %s198, 4
          %s208 = int_to_ptr.vmem [resolvable:$true] %s207
          %213 = dma.hbm_to_vmem [thread:$0]  %s206, 1024, %s208, %s195, 256, 128, 8
        $region24: #{encoder_layer.5} parent=15 // pred_fallthru
          _
        // Predicated region
        $region25: #{encoder_layer.5} parent=15 // pred_check
          %p214 = pneg %p115
        $region26: #{encoder_layer.5} parent=15 // pred_check_branch
          %216 = sbr.rel (%p214) target = $region28
        $region27: #{encoder_layer.5} parent=15 // pred_region
          %s217 = sand.u32 %s18, 1
          %s218 = scalar_lea.sflag [#allocation9], %s217
          %s219 = sand.u32 %s105, 1
          %s220 = smul.addr %s219, 64
          %s221 = scalar_lea.vmem [#allocation10], %s220
          %s222 = smul.u32 8, %s25
          %s224 = ssub.s32 1024, 1024
          %225 = vsyncadd %s218, %s224
          %s226 = smul.addr %s222, 2
          %s227 = sadd.s32 %s27, %s226
          %s228 = smul.addr %s227, 128
          %s229 = scalar_lea.hbm %s2, %s228
          %s230 = sshll.u32 %s221, 4
          %s231 = int_to_ptr.vmem [resolvable:$true] %s230
          %236 = dma.hbm_to_vmem [thread:$0]  %s229, 1024, %s231, %s218, 256, 128, 8
        $region28: #{encoder_layer.5} parent=15 // pred_fallthru
          _
      $region16: #{encoder_layer.5} parent=5 // pred_fallthru
        _
      %p237 = scmp.le.s32.totalorder 1, %s18
      %p238 = scmp.lt.s32.totalorder %s18, 9
      %p239 = pnand %p237, %p238
      %p240 = pneg %p239
      // Predicated region
      $region29: #{encoder_layer.5} parent=5 // pred_check
        _
      $region30: #{encoder_layer.5} parent=5 // pred_check_branch
        %242 = sbr.rel (%p239) target = $region32
      $region31: #{encoder_layer.5} parent=5 // pred_region
        %s243 = ssub.s32 %s18, 1
        %s244 = sand.u32 %s52, 1
        %s245 = scalar_lea.sflag [#allocation6], %s244
        %s246 = sand.u32 %s52, 1
        %s247 = smul.addr %s246, 64
        %s248 = scalar_lea.vmem [#allocation5], %s247
        // Predicated region
        $region33: #{encoder_layer.5} parent=31 // pred_check
          %p249 = pneg %p65
        $region34: #{encoder_layer.5} parent=31 // pred_check_branch
          %251 = sbr.rel (%p249) target = $region36
        $region35: #{encoder_layer.5} parent=31 // pred_region
          %252 = dma.done %s245, 1024
        $region36: #{encoder_layer.5} parent=31 // pred_fallthru
          _
        %s253 = sand.u32 %s23, 1
        %s254 = scalar_lea.sflag [#allocation9], %s253
        %s255 = sand.u32 %s80, 1
        %s256 = smul.addr %s255, 64
        %s257 = scalar_lea.vmem [#allocation8], %s256
        // Predicated region
        $region37: #{encoder_layer.5} parent=31 // pred_check
          %p258 = pneg %p93
        $region38: #{encoder_layer.5} parent=31 // pred_check_branch
          %260 = sbr.rel (%p258) target = $region40
        $region39: #{encoder_layer.5} parent=31 // pred_region
          %261 = dma.done %s254, 1024
        $region40: #{encoder_layer.5} parent=31 // pred_fallthru
          _
        %s262 = sand.u32 %s23, 1
        %s263 = scalar_lea.sflag [#allocation9], %s262
        %s264 = sand.u32 %s108, 1
        %s265 = smul.addr %s264, 64
        %s266 = scalar_lea.vmem [#allocation10], %s265
        // Predicated region
        $region41: #{encoder_layer.5} parent=31 // pred_check
          %p267 = pneg %p121
        $region42: #{encoder_layer.5} parent=31 // pred_check_branch
          %269 = sbr.rel (%p267) target = $region44
        $region43: #{encoder_layer.5} parent=31 // pred_region
          %270 = dma.done %s263, 1024
        $region44: #{encoder_layer.5} parent=31 // pred_fallthru
          _
        %s271 = sand.u32 %s52, 1
        %s272 = scalar_lea.sflag [#allocation6], %s271
        %s273 = sand.u32 %s52, 1
        %s274 = smul.addr %s273, 64
        %s275 = scalar_lea.vmem [#allocation5], %s274
        %p276 = pneg %p65
        %p277 = pneg %p62
        %s278 = sand.u32 %s23, 1
        %s279 = scalar_lea.sflag [#allocation9], %s278
        %s280 = sand.u32 %s80, 1
        %s281 = smul.addr %s280, 64
        %s282 = scalar_lea.vmem [#allocation8], %s281
        %p283 = pneg %p93
        %p284 = pneg %p90
        %s285 = sand.u32 %s23, 1
        %s286 = scalar_lea.sflag [#allocation9], %s285
        %s287 = sand.u32 %s108, 1
        %s288 = smul.addr %s287, 64
        %s289 = scalar_lea.vmem [#allocation10], %s288
        %p290 = pneg %p121
        %p291 = pneg %p118
        %p292 = pneg %p149
        %p293 = pneg %p146
        %s294 = sand.u32 %s136, 1
        %s295 = scalar_lea.sflag [#allocation7], %s294
        %s296 = sand.u32 %s136, 1
        %s297 = smul.addr %s296, 64
        %s298 = scalar_lea.vmem [#allocation11], %s297
        %s299 = smul.u32 8, %s28
        %s300 = smul.u32 8, %s28
        %s301 = smul.u32 8, %s28
        %s302 = smul.u32 8, %s28
        %p303 = scmp.eq.s32.totalorder %s30, 0
        // Predicated region
        $region45: #{encoder_layer.5} parent=31 // pred_check
          %p304 = pneg %p303
        $region46: #{encoder_layer.5} parent=31 // pred_check_branch
          %306 = sbr.rel (%p304) target = $region48
        $region47: #{encoder_layer.5} parent=31 // pred_region
          %vm307 = vcmask 7168
          %308 = vst.msk [vmem:[#allocation2] sm:$0xff] %vm307, -inf
          %309 = vst.msk [vmem:[#allocation2 + $0x8] sm:$0xff] %vm307, -inf
          %310 = vst.msk [vmem:[#allocation2 + $0x10] sm:$0xff] %vm307, -inf
          %311 = vst.msk [vmem:[#allocation2 + $0x18] sm:$0xff] %vm307, -inf
          %312 = vst.msk [vmem:[#allocation2 + $0x20] sm:$0xff] %vm307, -inf
          %313 = vst.msk [vmem:[#allocation2 + $0x28] sm:$0xff] %vm307, -inf
          %314 = vst.msk [vmem:[#allocation2 + $0x30] sm:$0xff] %vm307, -inf
          %315 = vst.msk [vmem:[#allocation2 + $0x38] sm:$0xff] %vm307, -inf
          %316 = vst.msk [vmem:[#allocation3] sm:$0xff] %vm307, 0.0
          %317 = vst.msk [vmem:[#allocation3 + $0x8] sm:$0xff] %vm307, 0.0
          %318 = vst.msk [vmem:[#allocation3 + $0x10] sm:$0xff] %vm307, 0.0
          %319 = vst.msk [vmem:[#allocation3 + $0x18] sm:$0xff] %vm307, 0.0
          %320 = vst.msk [vmem:[#allocation3 + $0x20] sm:$0xff] %vm307, 0.0
          %321 = vst.msk [vmem:[#allocation3 + $0x28] sm:$0xff] %vm307, 0.0
          %322 = vst.msk [vmem:[#allocation3 + $0x30] sm:$0xff] %vm307, 0.0
          %323 = vst.msk [vmem:[#allocation3 + $0x38] sm:$0xff] %vm307, 0.0
          %vm324 = vcmask 31744
          %325 = vst.msk [vmem:[#allocation4] sm:$0xff] %vm324, 0.0
          %326 = vst.msk [vmem:[#allocation4 + $0x8] sm:$0xff] %vm324, 0.0
          %327 = vst.msk [vmem:[#allocation4 + $0x10] sm:$0xff] %vm324, 0.0
          %328 = vst.msk [vmem:[#allocation4 + $0x18] sm:$0xff] %vm324, 0.0
          %329 = vst.msk [vmem:[#allocation4 + $0x20] sm:$0xff] %vm324, 0.0
          %330 = vst.msk [vmem:[#allocation4 + $0x28] sm:$0xff] %vm324, 0.0
          %331 = vst.msk [vmem:[#allocation4 + $0x30] sm:$0xff] %vm324, 0.0
          %332 = vst.msk [vmem:[#allocation4 + $0x38] sm:$0xff] %vm324, 0.0
        $region48: #{encoder_layer.5} parent=31 // pred_fallthru
          _
        %v333 = vld [vmem:[%s248] sm:$0xff]
        %v334 = vld [vmem:[%s248 + $0x8] sm:$0xff]
        %v335 = vld [vmem:[%s248 + $0x10] sm:$0xff]
        %v336 = vld [vmem:[%s248 + $0x18] sm:$0xff]
        %v337 = vld [vmem:[%s248 + $0x20] sm:$0xff]
        %v338 = vld [vmem:[%s248 + $0x28] sm:$0xff]
        %v339 = vld [vmem:[%s248 + $0x30] sm:$0xff]
        %v340 = vld [vmem:[%s248 + $0x38] sm:$0xff]
        %v341 = vld [vmem:[%s257] sm:$0xff]
        %v342 = vld [vmem:[%s257 + $0x8] sm:$0xff]
        %v343 = vld [vmem:[%s257 + $0x10] sm:$0xff]
        %v344 = vld [vmem:[%s257 + $0x18] sm:$0xff]
        %v345 = vld [vmem:[%s257 + $0x20] sm:$0xff]
        %v346 = vld [vmem:[%s257 + $0x28] sm:$0xff]
        %v347 = vld [vmem:[%s257 + $0x30] sm:$0xff]
        %v348 = vld [vmem:[%s257 + $0x38] sm:$0xff]
        %v349 = vld [vmem:[%s266] sm:$0xff]
        %v350 = vld [vmem:[%s266 + $0x8] sm:$0xff]
        %v351 = vld [vmem:[%s266 + $0x10] sm:$0xff]
        %v352 = vld [vmem:[%s266 + $0x18] sm:$0xff]
        %v353 = vld [vmem:[%s266 + $0x20] sm:$0xff]
        %v354 = vld [vmem:[%s266 + $0x28] sm:$0xff]
        %v355 = vld [vmem:[%s266 + $0x30] sm:$0xff]
        %v356 = vld [vmem:[%s266 + $0x38] sm:$0xff]
        %vm357 = vcmask 31744
        %v359 = vsel %vm357, %v333, 0
        %v362 = vsel %vm357, %v341, 0
        %364 = vmatprep.subr.mxu0 0.0
        %365 = vmatpush1.xpose.msra.mxu0 %v362
        %366 = vmatprep.subr.mxu0 0.0
        %367 = vmatpush1.xpose.msra.mxu0 0.0
        %368 = vmatprep.subr.mxu0 0.0
        %369 = vmatpush1.xpose.msra.mxu0 0.0
        %370 = vmatprep.subr.mxu0 0.0
        %371 = vmatpush1.xpose.msra.mxu0 0.0
        %372 = vmatprep.subr.mxu0 0.0
        %373 = vmatpush1.xpose.msra.mxu0 0.0
        %374 = vmatprep.subr.mxu0 0.0
        %375 = vmatpush1.xpose.msra.mxu0 0.0
        %376 = vmatprep.subr.mxu0 0.0
        %377 = vmatpush1.xpose.msra.mxu0 0.0
        %378 = vmatprep.subr.mxu0 0.0
        %379 = vmatpush1.xpose.msra.mxu0 0.0
        %380 = vmatprep.subr.mxu0 0.0
        %381 = vmatpush1.xpose.msra.mxu0 0.0
        %382 = vmatprep.subr.mxu0 0.0
        %383 = vmatpush1.xpose.msra.mxu0 0.0
        %384 = vmatprep.subr.mxu0 0.0
        %385 = vmatpush1.xpose.msra.mxu0 0.0
        %386 = vmatprep.subr.mxu0 0.0
        %387 = vmatpush1.xpose.msra.mxu0 0.0
        %388 = vmatprep.subr.mxu0 0.0
        %389 = vmatpush1.xpose.msra.mxu0 0.0
        %390 = vmatprep.subr.mxu0 0.0
        %391 = vmatpush1.xpose.msra.mxu0 0.0
        %392 = vmatprep.subr.mxu0 0.0
        %393 = vmatpush1.xpose.msra.mxu0 0.0
        %394 = vmatprep.subr.mxu0 0.0
        %395 = vmatpush1.xpose.msra.mxu0 0.0
        %396 = vmatprep.subr.mxu0 0.0
        %397 = vmatpush1.xpose.msra.mxu0 0.0
        %398 = vmatprep.subr.mxu0 0.0
        %399 = vmatpush1.xpose.msra.mxu0 0.0
        %400 = vmatprep.subr.mxu0 0.0
        %401 = vmatpush1.xpose.msra.mxu0 0.0
        %402 = vmatprep.subr.mxu0 0.0
        %403 = vmatpush1.xpose.msra.mxu0 0.0
        %404 = vmatprep.subr.mxu0 0.0
        %405 = vmatpush1.xpose.msra.mxu0 0.0
        %406 = vmatprep.subr.mxu0 0.0
        %407 = vmatpush1.xpose.msra.mxu0 0.0
        %408 = vmatprep.subr.mxu0 0.0
        %409 = vmatpush1.xpose.msra.mxu0 0.0
        %410 = vmatprep.subr.mxu0 0.0
        %411 = vmatpush1.xpose.msra.mxu0 0.0
        %412 = vmatprep.subr.mxu0 0.0
        %413 = vmatpush1.xpose.msra.mxu0 0.0
        %414 = vmatprep.subr.mxu0 0.0
        %415 = vmatpush1.xpose.msra.mxu0 0.0
        %416 = vmatprep.subr.mxu0 0.0
        %417 = vmatpush1.xpose.msra.mxu0 0.0
        %418 = vmatprep.subr.mxu0 0.0
        %419 = vmatpush1.xpose.msra.mxu0 0.0
        %420 = vmatprep.subr.mxu0 0.0
        %421 = vmatpush1.xpose.msra.mxu0 0.0
        %422 = vmatprep.subr.mxu0 0.0
        %423 = vmatpush1.xpose.msra.mxu0 0.0
        %424 = vmatprep.subr.mxu0 0.0
        %425 = vmatpush1.xpose.msra.mxu0 0.0
        %426 = vmatprep.subr.mxu0 0.0
        %427 = vmatpush1.xpose.msra.mxu0 0.0
        %428 = vmatprep.mubr.f32.mxu0 0.0
        %429 = vmatmul.mubr.f32.gmra.mrb[0].mxu0 %v359
        %v430 = vpop.f32.mrb[0].mxu0
        %v431 = vadd.f32 0.0, %v430
        %v432 = vpop.f32.mrb[0].mxu0
        %433 = vdwg.mxu0
        %v435 = vsel %vm357, %v334, 0
        %v438 = vsel %vm357, %v342, 0
        %440 = vmatprep.subr.mxu0 0.0
        %441 = vmatpush1.xpose.msra.mxu0 %v438
        %442 = vmatprep.subr.mxu0 0.0
        %443 = vmatpush1.xpose.msra.mxu0 0.0
        %444 = vmatprep.subr.mxu0 0.0
        %445 = vmatpush1.xpose.msra.mxu0 0.0
        %446 = vmatprep.subr.mxu0 0.0
        %447 = vmatpush1.xpose.msra.mxu0 0.0
        %448 = vmatprep.subr.mxu0 0.0
        %449 = vmatpush1.xpose.msra.mxu0 0.0
        %450 = vmatprep.subr.mxu0 0.0
        %451 = vmatpush1.xpose.msra.mxu0 0.0
        %452 = vmatprep.subr.mxu0 0.0
        %453 = vmatpush1.xpose.msra.mxu0 0.0
        %454 = vmatprep.subr.mxu0 0.0
        %455 = vmatpush1.xpose.msra.mxu0 0.0
        %456 = vmatprep.subr.mxu0 0.0
        %457 = vmatpush1.xpose.msra.mxu0 0.0
        %458 = vmatprep.subr.mxu0 0.0
        %459 = vmatpush1.xpose.msra.mxu0 0.0
        %460 = vmatprep.subr.mxu0 0.0
        %461 = vmatpush1.xpose.msra.mxu0 0.0
        %462 = vmatprep.subr.mxu0 0.0
        %463 = vmatpush1.xpose.msra.mxu0 0.0
        %464 = vmatprep.subr.mxu0 0.0
        %465 = vmatpush1.xpose.msra.mxu0 0.0
        %466 = vmatprep.subr.mxu0 0.0
        %467 = vmatpush1.xpose.msra.mxu0 0.0
        %468 = vmatprep.subr.mxu0 0.0
        %469 = vmatpush1.xpose.msra.mxu0 0.0
        %470 = vmatprep.subr.mxu0 0.0
        %471 = vmatpush1.xpose.msra.mxu0 0.0
        %472 = vmatprep.subr.mxu0 0.0
        %473 = vmatpush1.xpose.msra.mxu0 0.0
        %474 = vmatprep.subr.mxu0 0.0
        %475 = vmatpush1.xpose.msra.mxu0 0.0
        %476 = vmatprep.subr.mxu0 0.0
        %477 = vmatpush1.xpose.msra.mxu0 0.0
        %478 = vmatprep.subr.mxu0 0.0
        %479 = vmatpush1.xpose.msra.mxu0 0.0
        %480 = vmatprep.subr.mxu0 0.0
        %481 = vmatpush1.xpose.msra.mxu0 0.0
        %482 = vmatprep.subr.mxu0 0.0
        %483 = vmatpush1.xpose.msra.mxu0 0.0
        %484 = vmatprep.subr.mxu0 0.0
        %485 = vmatpush1.xpose.msra.mxu0 0.0
        %486 = vmatprep.subr.mxu0 0.0
        %487 = vmatpush1.xpose.msra.mxu0 0.0
        %488 = vmatprep.subr.mxu0 0.0
        %489 = vmatpush1.xpose.msra.mxu0 0.0
        %490 = vmatprep.subr.mxu0 0.0
        %491 = vmatpush1.xpose.msra.mxu0 0.0
        %492 = vmatprep.subr.mxu0 0.0
        %493 = vmatpush1.xpose.msra.mxu0 0.0
        %494 = vmatprep.subr.mxu0 0.0
        %495 = vmatpush1.xpose.msra.mxu0 0.0
        %496 = vmatprep.subr.mxu0 0.0
        %497 = vmatpush1.xpose.msra.mxu0 0.0
        %498 = vmatprep.subr.mxu0 0.0
        %499 = vmatpush1.xpose.msra.mxu0 0.0
        %500 = vmatprep.subr.mxu0 0.0
        %501 = vmatpush1.xpose.msra.mxu0 0.0
        %502 = vmatprep.subr.mxu0 0.0
        %503 = vmatpush1.xpose.msra.mxu0 0.0
        %504 = vmatprep.mubr.f32.mxu0 0.0
        %505 = vmatmul.mubr.f32.gmra.mrb[0].mxu0 %v435
        %v506 = vpop.f32.mrb[0].mxu0
        %v507 = vadd.f32 0.0, %v506
        %v508 = vpop.f32.mrb[0].mxu0
        %509 = vdwg.mxu0
        %v511 = vsel %vm357, %v335, 0
        %v514 = vsel %vm357, %v343, 0
        %516 = vmatprep.subr.mxu0 0.0
        %517 = vmatpush1.xpose.msra.mxu0 %v514
        %518 = vmatprep.subr.mxu0 0.0
        %519 = vmatpush1.xpose.msra.mxu0 0.0
        %520 = vmatprep.subr.mxu0 0.0
        %521 = vmatpush1.xpose.msra.mxu0 0.0
        %522 = vmatprep.subr.mxu0 0.0
        %523 = vmatpush1.xpose.msra.mxu0 0.0
        %524 = vmatprep.subr.mxu0 0.0
        %525 = vmatpush1.xpose.msra.mxu0 0.0
        %526 = vmatprep.subr.mxu0 0.0
        %527 = vmatpush1.xpose.msra.mxu0 0.0
        %528 = vmatprep.subr.mxu0 0.0
        %529 = vmatpush1.xpose.msra.mxu0 0.0
        %530 = vmatprep.subr.mxu0 0.0
        %531 = vmatpush1.xpose.msra.mxu0 0.0
        %532 = vmatprep.subr.mxu0 0.0
        %533 = vmatpush1.xpose.msra.mxu0 0.0
        %534 = vmatprep.subr.mxu0 0.0
        %535 = vmatpush1.xpose.msra.mxu0 0.0
        %536 = vmatprep.subr.mxu0 0.0
        %537 = vmatpush1.xpose.msra.mxu0 0.0
        %538 = vmatprep.subr.mxu0 0.0
        %539 = vmatpush1.xpose.msra.mxu0 0.0
        %540 = vmatprep.subr.mxu0 0.0
        %541 = vmatpush1.xpose.msra.mxu0 0.0
        %542 = vmatprep.subr.mxu0 0.0
        %543 = vmatpush1.xpose.msra.mxu0 0.0
        %544 = vmatprep.subr.mxu0 0.0
        %545 = vmatpush1.xpose.msra.mxu0 0.0
        %546 = vmatprep.subr.mxu0 0.0
        %547 = vmatpush1.xpose.msra.mxu0 0.0
        %548 = vmatprep.subr.mxu0 0.0
        %549 = vmatpush1.xpose.msra.mxu0 0.0
        %550 = vmatprep.subr.mxu0 0.0
        %551 = vmatpush1.xpose.msra.mxu0 0.0
        %552 = vmatprep.subr.mxu0 0.0
        %553 = vmatpush1.xpose.msra.mxu0 0.0
        %554 = vmatprep.subr.mxu0 0.0
        %555 = vmatpush1.xpose.msra.mxu0 0.0
        %556 = vmatprep.subr.mxu0 0.0
        %557 = vmatpush1.xpose.msra.mxu0 0.0
        %558 = vmatprep.subr.mxu0 0.0
        %559 = vmatpush1.xpose.msra.mxu0 0.0
        %560 = vmatprep.subr.mxu0 0.0
        %561 = vmatpush1.xpose.msra.mxu0 0.0
        %562 = vmatprep.subr.mxu0 0.0
        %563 = vmatpush1.xpose.msra.mxu0 0.0
        %564 = vmatprep.subr.mxu0 0.0
        %565 = vmatpush1.xpose.msra.mxu0 0.0
        %566 = vmatprep.subr.mxu0 0.0
        %567 = vmatpush1.xpose.msra.mxu0 0.0
        %568 = vmatprep.subr.mxu0 0.0
        %569 = vmatpush1.xpose.msra.mxu0 0.0
        %570 = vmatprep.subr.mxu0 0.0
        %571 = vmatpush1.xpose.msra.mxu0 0.0
        %572 = vmatprep.subr.mxu0 0.0
        %573 = vmatpush1.xpose.msra.mxu0 0.0
        %574 = vmatprep.subr.mxu0 0.0
        %575 = vmatpush1.xpose.msra.mxu0 0.0
        %576 = vmatprep.subr.mxu0 0.0
        %577 = vmatpush1.xpose.msra.mxu0 0.0
        %578 = vmatprep.subr.mxu0 0.0
        %579 = vmatpush1.xpose.msra.mxu0 0.0
        %580 = vmatprep.mubr.f32.mxu0 0.0
        %581 = vmatmul.mubr.f32.gmra.mrb[0].mxu0 %v511
        %v582 = vpop.f32.mrb[0].mxu0
        %v583 = vadd.f32 0.0, %v582
        %v584 = vpop.f32.mrb[0].mxu0
        %585 = vdwg.mxu0
        %v587 = vsel %vm357, %v336, 0
        %v590 = vsel %vm357, %v344, 0
        %592 = vmatprep.subr.mxu0 0.0
        %593 = vmatpush1.xpose.msra.mxu0 %v590
        %594 = vmatprep.subr.mxu0 0.0
        %595 = vmatpush1.xpose.msra.mxu0 0.0
        %596 = vmatprep.subr.mxu0 0.0
        %597 = vmatpush1.xpose.msra.mxu0 0.0
        %598 = vmatprep.subr.mxu0 0.0
        %599 = vmatpush1.xpose.msra.mxu0 0.0
        %600 = vmatprep.subr.mxu0 0.0
        %601 = vmatpush1.xpose.msra.mxu0 0.0
        %602 = vmatprep.subr.mxu0 0.0
        %603 = vmatpush1.xpose.msra.mxu0 0.0
        %604 = vmatprep.subr.mxu0 0.0
        %605 = vmatpush1.xpose.msra.mxu0 0.0
        %606 = vmatprep.subr.mxu0 0.0
        %607 = vmatpush1.xpose.msra.mxu0 0.0
        %608 = vmatprep.subr.mxu0 0.0
        %609 = vmatpush1.xpose.msra.mxu0 0.0
        %610 = vmatprep.subr.mxu0 0.0
        %611 = vmatpush1.xpose.msra.mxu0 0.0
        %612 = vmatprep.subr.mxu0 0.0
        %613 = vmatpush1.xpose.msra.mxu0 0.0
        %614 = vmatprep.subr.mxu0 0.0
        %615 = vmatpush1.xpose.msra.mxu0 0.0
        %616 = vmatprep.subr.mxu0 0.0
        %617 = vmatpush1.xpose.msra.mxu0 0.0
        %618 = vmatprep.subr.mxu0 0.0
        %619 = vmatpush1.xpose.msra.mxu0 0.0
        %620 = vmatprep.subr.mxu0 0.0
        %621 = vmatpush1.xpose.msra.mxu0 0.0
        %622 = vmatprep.subr.mxu0 0.0
        %623 = vmatpush1.xpose.msra.mxu0 0.0
        %624 = vmatprep.subr.mxu0 0.0
        %625 = vmatpush1.xpose.msra.mxu0 0.0
        %626 = vmatprep.subr.mxu0 0.0
        %627 = vmatpush1.xpose.msra.mxu0 0.0
        %628 = vmatprep.subr.mxu0 0.0
        %629 = vmatpush1.xpose.msra.mxu0 0.0
        %630 = vmatprep.subr.mxu0 0.0
        %631 = vmatpush1.xpose.msra.mxu0 0.0
        %632 = vmatprep.subr.mxu0 0.0
        %633 = vmatpush1.xpose.msra.mxu0 0.0
        %634 = vmatprep.subr.mxu0 0.0
        %635 = vmatpush1.xpose.msra.mxu0 0.0
        %636 = vmatprep.subr.mxu0 0.0
        %637 = vmatpush1.xpose.msra.mxu0 0.0
        %638 = vmatprep.subr.mxu0 0.0
        %639 = vmatpush1.xpose.msra.mxu0 0.0
        %640 = vmatprep.subr.mxu0 0.0
        %641 = vmatpush1.xpose.msra.mxu0 0.0
        %642 = vmatprep.subr.mxu0 0.0
        %643 = vmatpush1.xpose.msra.mxu0 0.0
        %644 = vmatprep.subr.mxu0 0.0
        %645 = vmatpush1.xpose.msra.mxu0 0.0
        %646 = vmatprep.subr.mxu0 0.0
        %647 = vmatpush1.xpose.msra.mxu0 0.0
        %648 = vmatprep.subr.mxu0 0.0
        %649 = vmatpush1.xpose.msra.mxu0 0.0
        %650 = vmatprep.subr.mxu0 0.0
        %651 = vmatpush1.xpose.msra.mxu0 0.0
        %652 = vmatprep.subr.mxu0 0.0
        %653 = vmatpush1.xpose.msra.mxu0 0.0
        %654 = vmatprep.subr.mxu0 0.0
        %655 = vmatpush1.xpose.msra.mxu0 0.0
        %656 = vmatprep.mubr.f32.mxu0 0.0
        %657 = vmatmul.mubr.f32.gmra.mrb[0].mxu0 %v587
        %v658 = vpop.f32.mrb[0].mxu0
        %v659 = vadd.f32 0.0, %v658
        %v660 = vpop.f32.mrb[0].mxu0
        %661 = vdwg.mxu0
        %v663 = vsel %vm357, %v337, 0
        %v666 = vsel %vm357, %v345, 0
        %668 = vmatprep.subr.mxu0 0.0
        %669 = vmatpush1.xpose.msra.mxu0 %v666
        %670 = vmatprep.subr.mxu0 0.0
        %671 = vmatpush1.xpose.msra.mxu0 0.0
        %672 = vmatprep.subr.mxu0 0.0
        %673 = vmatpush1.xpose.msra.mxu0 0.0
        %674 = vmatprep.subr.mxu0 0.0
        %675 = vmatpush1.xpose.msra.mxu0 0.0
        %676 = vmatprep.subr.mxu0 0.0
        %677 = vmatpush1.xpose.msra.mxu0 0.0
        %678 = vmatprep.subr.mxu0 0.0
        %679 = vmatpush1.xpose.msra.mxu0 0.0
        %680 = vmatprep.subr.mxu0 0.0
        %681 = vmatpush1.xpose.msra.mxu0 0.0
        %682 = vmatprep.subr.mxu0 0.0
        %683 = vmatpush1.xpose.msra.mxu0 0.0
        %684 = vmatprep.subr.mxu0 0.0
        %685 = vmatpush1.xpose.msra.mxu0 0.0
        %686 = vmatprep.subr.mxu0 0.0
        %687 = vmatpush1.xpose.msra.mxu0 0.0
        %688 = vmatprep.subr.mxu0 0.0
        %689 = vmatpush1.xpose.msra.mxu0 0.0
        %690 = vmatprep.subr.mxu0 0.0
        %691 = vmatpush1.xpose.msra.mxu0 0.0
        %692 = vmatprep.subr.mxu0 0.0
        %693 = vmatpush1.xpose.msra.mxu0 0.0
        %694 = vmatprep.subr.mxu0 0.0
        %695 = vmatpush1.xpose.msra.mxu0 0.0
        %696 = vmatprep.subr.mxu0 0.0
        %697 = vmatpush1.xpose.msra.mxu0 0.0
        %698 = vmatprep.subr.mxu0 0.0
        %699 = vmatpush1.xpose.msra.mxu0 0.0
        %700 = vmatprep.subr.mxu0 0.0
        %701 = vmatpush1.xpose.msra.mxu0 0.0
        %702 = vmatprep.subr.mxu0 0.0
        %703 = vmatpush1.xpose.msra.mxu0 0.0
        %704 = vmatprep.subr.mxu0 0.0
        %705 = vmatpush1.xpose.msra.mxu0 0.0
        %706 = vmatprep.subr.mxu0 0.0
        %707 = vmatpush1.xpose.msra.mxu0 0.0
        %708 = vmatprep.subr.mxu0 0.0
        %709 = vmatpush1.xpose.msra.mxu0 0.0
        %710 = vmatprep.subr.mxu0 0.0
        %711 = vmatpush1.xpose.msra.mxu0 0.0
        %712 = vmatprep.subr.mxu0 0.0
        %713 = vmatpush1.xpose.msra.mxu0 0.0
        %714 = vmatprep.subr.mxu0 0.0
        %715 = vmatpush1.xpose.msra.mxu0 0.0
        %716 = vmatprep.subr.mxu0 0.0
        %717 = vmatpush1.xpose.msra.mxu0 0.0
        %718 = vmatprep.subr.mxu0 0.0
        %719 = vmatpush1.xpose.msra.mxu0 0.0
        %720 = vmatprep.subr.mxu0 0.0
        %721 = vmatpush1.xpose.msra.mxu0 0.0
        %722 = vmatprep.subr.mxu0 0.0
        %723 = vmatpush1.xpose.msra.mxu0 0.0
        %724 = vmatprep.subr.mxu0 0.0
        %725 = vmatpush1.xpose.msra.mxu0 0.0
        %726 = vmatprep.subr.mxu0 0.0
        %727 = vmatpush1.xpose.msra.mxu0 0.0
        %728 = vmatprep.subr.mxu0 0.0
        %729 = vmatpush1.xpose.msra.mxu0 0.0
        %730 = vmatprep.subr.mxu0 0.0
        %731 = vmatpush1.xpose.msra.mxu0 0.0
        %732 = vmatprep.mubr.f32.mxu0 0.0
        %733 = vmatmul.mubr.f32.gmra.mrb[0].mxu0 %v663
        %v734 = vpop.f32.mrb[0].mxu0
        %v735 = vadd.f32 0.0, %v734
        %v736 = vpop.f32.mrb[0].mxu0
        %737 = vdwg.mxu0
        %v739 = vsel %vm357, %v338, 0
        %v742 = vsel %vm357, %v346, 0
        %744 = vmatprep.subr.mxu0 0.0
        %745 = vmatpush1.xpose.msra.mxu0 %v742
        %746 = vmatprep.subr.mxu0 0.0
        %747 = vmatpush1.xpose.msra.mxu0 0.0
        %748 = vmatprep.subr.mxu0 0.0
        %749 = vmatpush1.xpose.msra.mxu0 0.0
        %750 = vmatprep.subr.mxu0 0.0
        %751 = vmatpush1.xpose.msra.mxu0 0.0
        %752 = vmatprep.subr.mxu0 0.0
        %753 = vmatpush1.xpose.msra.mxu0 0.0
        %754 = vmatprep.subr.mxu0 0.0
        %755 = vmatpush1.xpose.msra.mxu0 0.0
        %756 = vmatprep.subr.mxu0 0.0
        %757 = vmatpush1.xpose.msra.mxu0 0.0
        %758 = vmatprep.subr.mxu0 0.0
        %759 = vmatpush1.xpose.msra.mxu0 0.0
        %760 = vmatprep.subr.mxu0 0.0
        %761 = vmatpush1.xpose.msra.mxu0 0.0
        %762 = vmatprep.subr.mxu0 0.0
        %763 = vmatpush1.xpose.msra.mxu0 0.0
        %764 = vmatprep.subr.mxu0 0.0
        %765 = vmatpush1.xpose.msra.mxu0 0.0
        %766 = vmatprep.subr.mxu0 0.0
        %767 = vmatpush1.xpose.msra.mxu0 0.0
        %768 = vmatprep.subr.mxu0 0.0
        %769 = vmatpush1.xpose.msra.mxu0 0.0
        %770 = vmatprep.subr.mxu0 0.0
        %771 = vmatpush1.xpose.msra.mxu0 0.0
        %772 = vmatprep.subr.mxu0 0.0
        %773 = vmatpush1.xpose.msra.mxu0 0.0
        %774 = vmatprep.subr.mxu0 0.0
        %775 = vmatpush1.xpose.msra.mxu0 0.0
        %776 = vmatprep.subr.mxu0 0.0
        %777 = vmatpush1.xpose.msra.mxu0 0.0
        %778 = vmatprep.subr.mxu0 0.0
        %779 = vmatpush1.xpose.msra.mxu0 0.0
        %780 = vmatprep.subr.mxu0 0.0
        %781 = vmatpush1.xpose.msra.mxu0 0.0
        %782 = vmatprep.subr.mxu0 0.0
        %783 = vmatpush1.xpose.msra.mxu0 0.0
        %784 = vmatprep.subr.mxu0 0.0
        %785 = vmatpush1.xpose.msra.mxu0 0.0
        %786 = vmatprep.subr.mxu0 0.0
        %787 = vmatpush1.xpose.msra.mxu0 0.0
        %788 = vmatprep.subr.mxu0 0.0
        %789 = vmatpush1.xpose.msra.mxu0 0.0
        %790 = vmatprep.subr.mxu0 0.0
        %791 = vmatpush1.xpose.msra.mxu0 0.0
        %792 = vmatprep.subr.mxu0 0.0
        %793 = vmatpush1.xpose.msra.mxu0 0.0
        %794 = vmatprep.subr.mxu0 0.0
        %795 = vmatpush1.xpose.msra.mxu0 0.0
        %796 = vmatprep.subr.mxu0 0.0
        %797 = vmatpush1.xpose.msra.mxu0 0.0
        %798 = vmatprep.subr.mxu0 0.0
        %799 = vmatpush1.xpose.msra.mxu0 0.0
        %800 = vmatprep.subr.mxu0 0.0
        %801 = vmatpush1.xpose.msra.mxu0 0.0
        %802 = vmatprep.subr.mxu0 0.0
        %803 = vmatpush1.xpose.msra.mxu0 0.0
        %804 = vmatprep.subr.mxu0 0.0
        %805 = vmatpush1.xpose.msra.mxu0 0.0
        %806 = vmatprep.subr.mxu0 0.0
        %807 = vmatpush1.xpose.msra.mxu0 0.0
        %808 = vmatprep.mubr.f32.mxu0 0.0
        %809 = vmatmul.mubr.f32.gmra.mrb[0].mxu0 %v739
        %v810 = vpop.f32.mrb[0].mxu0
        %v811 = vadd.f32 0.0, %v810
        %v812 = vpop.f32.mrb[0].mxu0
        %813 = vdwg.mxu0
        %v815 = vsel %vm357, %v339, 0
        %v818 = vsel %vm357, %v347, 0
        %820 = vmatprep.subr.mxu0 0.0
        %821 = vmatpush1.xpose.msra.mxu0 %v818
        %822 = vmatprep.subr.mxu0 0.0
        %823 = vmatpush1.xpose.msra.mxu0 0.0
        %824 = vmatprep.subr.mxu0 0.0
        %825 = vmatpush1.xpose.msra.mxu0 0.0
        %826 = vmatprep.subr.mxu0 0.0
        %827 = vmatpush1.xpose.msra.mxu0 0.0
        %828 = vmatprep.subr.mxu0 0.0
        %829 = vmatpush1.xpose.msra.mxu0 0.0
        %830 = vmatprep.subr.mxu0 0.0
        %831 = vmatpush1.xpose.msra.mxu0 0.0
        %832 = vmatprep.subr.mxu0 0.0
        %833 = vmatpush1.xpose.msra.mxu0 0.0
        %834 = vmatprep.subr.mxu0 0.0
        %835 = vmatpush1.xpose.msra.mxu0 0.0
        %836 = vmatprep.subr.mxu0 0.0
        %837 = vmatpush1.xpose.msra.mxu0 0.0
        %838 = vmatprep.subr.mxu0 0.0
        %839 = vmatpush1.xpose.msra.mxu0 0.0
        %840 = vmatprep.subr.mxu0 0.0
        %841 = vmatpush1.xpose.msra.mxu0 0.0
        %842 = vmatprep.subr.mxu0 0.0
        %843 = vmatpush1.xpose.msra.mxu0 0.0
        %844 = vmatprep.subr.mxu0 0.0
        %845 = vmatpush1.xpose.msra.mxu0 0.0
        %846 = vmatprep.subr.mxu0 0.0
        %847 = vmatpush1.xpose.msra.mxu0 0.0
        %848 = vmatprep.subr.mxu0 0.0
        %849 = vmatpush1.xpose.msra.mxu0 0.0
        %850 = vmatprep.subr.mxu0 0.0
        %851 = vmatpush1.xpose.msra.mxu0 0.0
        %852 = vmatprep.subr.mxu0 0.0
        %853 = vmatpush1.xpose.msra.mxu0 0.0
        %854 = vmatprep.subr.mxu0 0.0
        %855 = vmatpush1.xpose.msra.mxu0 0.0
        %856 = vmatprep.subr.mxu0 0.0
        %857 = vmatpush1.xpose.msra.mxu0 0.0
        %858 = vmatprep.subr.mxu0 0.0
        %859 = vmatpush1.xpose.msra.mxu0 0.0
        %860 = vmatprep.subr.mxu0 0.0
        %861 = vmatpush1.xpose.msra.mxu0 0.0
        %862 = vmatprep.subr.mxu0 0.0
        %863 = vmatpush1.xpose.msra.mxu0 0.0
        %864 = vmatprep.subr.mxu0 0.0
        %865 = vmatpush1.xpose.msra.mxu0 0.0
        %866 = vmatprep.subr.mxu0 0.0
        %867 = vmatpush1.xpose.msra.mxu0 0.0
        %868 = vmatprep.subr.mxu0 0.0
        %869 = vmatpush1.xpose.msra.mxu0 0.0
        %870 = vmatprep.subr.mxu0 0.0
        %871 = vmatpush1.xpose.msra.mxu0 0.0
        %872 = vmatprep.subr.mxu0 0.0
        %873 = vmatpush1.xpose.msra.mxu0 0.0
        %874 = vmatprep.subr.mxu0 0.0
        %875 = vmatpush1.xpose.msra.mxu0 0.0
        %876 = vmatprep.subr.mxu0 0.0
        %877 = vmatpush1.xpose.msra.mxu0 0.0
        %878 = vmatprep.subr.mxu0 0.0
        %879 = vmatpush1.xpose.msra.mxu0 0.0
        %880 = vmatprep.subr.mxu0 0.0
        %881 = vmatpush1.xpose.msra.mxu0 0.0
        %882 = vmatprep.subr.mxu0 0.0
        %883 = vmatpush1.xpose.msra.mxu0 0.0
        %884 = vmatprep.mubr.f32.mxu0 0.0
        %885 = vmatmul.mubr.f32.gmra.mrb[0].mxu0 %v815
        %v886 = vpop.f32.mrb[0].mxu0
        %v887 = vadd.f32 0.0, %v886
        %v888 = vpop.f32.mrb[0].mxu0
        %889 = vdwg.mxu0
        %v891 = vsel %vm357, %v340, 0
        %v894 = vsel %vm357, %v348, 0
        %896 = vmatprep.subr.mxu0 0.0
        %897 = vmatpush1.xpose.msra.mxu0 %v894
        %898 = vmatprep.subr.mxu0 0.0
        %899 = vmatpush1.xpose.msra.mxu0 0.0
        %900 = vmatprep.subr.mxu0 0.0
        %901 = vmatpush1.xpose.msra.mxu0 0.0
        %902 = vmatprep.subr.mxu0 0.0
        %903 = vmatpush1.xpose.msra.mxu0 0.0
        %904 = vmatprep.subr.mxu0 0.0
        %905 = vmatpush1.xpose.msra.mxu0 0.0
        %906 = vmatprep.subr.mxu0 0.0
        %907 = vmatpush1.xpose.msra.mxu0 0.0
        %908 = vmatprep.subr.mxu0 0.0
        %909 = vmatpush1.xpose.msra.mxu0 0.0
        %910 = vmatprep.subr.mxu0 0.0
        %911 = vmatpush1.xpose.msra.mxu0 0.0
        %912 = vmatprep.subr.mxu0 0.0
        %913 = vmatpush1.xpose.msra.mxu0 0.0
        %914 = vmatprep.subr.mxu0 0.0
        %915 = vmatpush1.xpose.msra.mxu0 0.0
        %916 = vmatprep.subr.mxu0 0.0
        %917 = vmatpush1.xpose.msra.mxu0 0.0
        %918 = vmatprep.subr.mxu0 0.0
        %919 = vmatpush1.xpose.msra.mxu0 0.0
        %920 = vmatprep.subr.mxu0 0.0
        %921 = vmatpush1.xpose.msra.mxu0 0.0
        %922 = vmatprep.subr.mxu0 0.0
        %923 = vmatpush1.xpose.msra.mxu0 0.0
        %924 = vmatprep.subr.mxu0 0.0
        %925 = vmatpush1.xpose.msra.mxu0 0.0
        %926 = vmatprep.subr.mxu0 0.0
        %927 = vmatpush1.xpose.msra.mxu0 0.0
        %928 = vmatprep.subr.mxu0 0.0
        %929 = vmatpush1.xpose.msra.mxu0 0.0
        %930 = vmatprep.subr.mxu0 0.0
        %931 = vmatpush1.xpose.msra.mxu0 0.0
        %932 = vmatprep.subr.mxu0 0.0
        %933 = vmatpush1.xpose.msra.mxu0 0.0
        %934 = vmatprep.subr.mxu0 0.0
        %935 = vmatpush1.xpose.msra.mxu0 0.0
        %936 = vmatprep.subr.mxu0 0.0
        %937 = vmatpush1.xpose.msra.mxu0 0.0
        %938 = vmatprep.subr.mxu0 0.0
        %939 = vmatpush1.xpose.msra.mxu0 0.0
        %940 = vmatprep.subr.mxu0 0.0
        %941 = vmatpush1.xpose.msra.mxu0 0.0
        %942 = vmatprep.subr.mxu0 0.0
        %943 = vmatpush1.xpose.msra.mxu0 0.0
        %944 = vmatprep.subr.mxu0 0.0
        %945 = vmatpush1.xpose.msra.mxu0 0.0
        %946 = vmatprep.subr.mxu0 0.0
        %947 = vmatpush1.xpose.msra.mxu0 0.0
        %948 = vmatprep.subr.mxu0 0.0
        %949 = vmatpush1.xpose.msra.mxu0 0.0
        %950 = vmatprep.subr.mxu0 0.0
        %951 = vmatpush1.xpose.msra.mxu0 0.0
        %952 = vmatprep.subr.mxu0 0.0
        %953 = vmatpush1.xpose.msra.mxu0 0.0
        %954 = vmatprep.subr.mxu0 0.0
        %955 = vmatpush1.xpose.msra.mxu0 0.0
        %956 = vmatprep.subr.mxu0 0.0
        %957 = vmatpush1.xpose.msra.mxu0 0.0
        %958 = vmatprep.subr.mxu0 0.0
        %959 = vmatpush1.xpose.msra.mxu0 0.0
        %960 = vmatprep.mubr.f32.mxu0 0.0
        %961 = vmatmul.mubr.f32.gmra.mrb[0].mxu0 %v891
        %v962 = vpop.f32.mrb[0].mxu0
        %v963 = vadd.f32 0.0, %v962
        %v964 = vpop.f32.mrb[0].mxu0
        %965 = vdwg.mxu0
        %v966 = vmul.f32 %v431, 0.5
        %v967 = vmul.f32 %v507, 0.5
        %v968 = vmul.f32 %v583, 0.5
        %v969 = vmul.f32 %v659, 0.5
        %v970 = vmul.f32 %v735, 0.5
        %v971 = vmul.f32 %v811, 0.5
        %v972 = vmul.f32 %v887, 0.5
        %v973 = vmul.f32 %v963, 0.5
        %v974 = vld [vmem:[#allocation2] sm:$0xff]
        %v975 = vld [vmem:[#allocation2 + $0x8] sm:$0xff]
        %v976 = vld [vmem:[#allocation2 + $0x10] sm:$0xff]
        %v977 = vld [vmem:[#allocation2 + $0x18] sm:$0xff]
        %v978 = vld [vmem:[#allocation2 + $0x20] sm:$0xff]
        %v979 = vld [vmem:[#allocation2 + $0x28] sm:$0xff]
        %v980 = vld [vmem:[#allocation2 + $0x30] sm:$0xff]
        %v981 = vld [vmem:[#allocation2 + $0x38] sm:$0xff]
        %vm982 = vcmask 64512
        %v983 = vsel %vm982, %v966, -inf
        %984 = vmax.xlane.f32.xlu0 %v983
        %v985 = vpop.xlane.xlu0 %984
        %v986 = vsel %vm982, %v967, -inf
        %987 = vmax.xlane.f32.xlu0 %v986
        %v988 = vpop.xlane.xlu0 %987
        %v989 = vsel %vm982, %v968, -inf
        %990 = vmax.xlane.f32.xlu0 %v989
        %v991 = vpop.xlane.xlu0 %990
        %v992 = vsel %vm982, %v969, -inf
        %993 = vmax.xlane.f32.xlu0 %v992
        %v994 = vpop.xlane.xlu0 %993
        %v995 = vsel %vm982, %v970, -inf
        %996 = vmax.xlane.f32.xlu0 %v995
        %v997 = vpop.xlane.xlu0 %996
        %v998 = vsel %vm982, %v971, -inf
        %999 = vmax.xlane.f32.xlu0 %v998
        %v1000 = vpop.xlane.xlu0 %999
        %v1001 = vsel %vm982, %v972, -inf
        %1002 = vmax.xlane.f32.xlu0 %v1001
        %v1003 = vpop.xlane.xlu0 %1002
        %v1004 = vsel %vm982, %v973, -inf
        %1005 = vmax.xlane.f32.xlu0 %v1004
        %v1006 = vpop.xlane.xlu0 %1005
        %v1007 = vmax.f32 %v974, %v985
        %v1008 = vmax.f32 %v975, %v988
        %v1009 = vmax.f32 %v976, %v991
        %v1010 = vmax.f32 %v977, %v994
        %v1011 = vmax.f32 %v978, %v997
        %v1012 = vmax.f32 %v979, %v1000
        %v1013 = vmax.f32 %v980, %v1003
        %v1014 = vmax.f32 %v981, %v1006
        %v1015 = vsub.f32 %v974, %v1007
        %v1016 = vsub.f32 %v975, %v1008
        %v1017 = vsub.f32 %v976, %v1009
        %v1018 = vsub.f32 %v977, %v1010
        %v1019 = vsub.f32 %v978, %v1011
        %v1020 = vsub.f32 %v979, %v1012
        %v1021 = vsub.f32 %v980, %v1013
        %v1022 = vsub.f32 %v981, %v1014
        %v1023 = vmul.f32 %v1015, 1.442695
        %v1024 = vpow.pop %v1023
        %v1025 = vmul.f32 %v1016, 1.442695
        %v1026 = vpow.pop %v1025
        %v1027 = vmul.f32 %v1017, 1.442695
        %v1028 = vpow.pop %v1027
        %v1029 = vmul.f32 %v1018, 1.442695
        %v1030 = vpow.pop %v1029
        %v1031 = vmul.f32 %v1019, 1.442695
        %v1032 = vpow.pop %v1031
        %v1033 = vmul.f32 %v1020, 1.442695
        %v1034 = vpow.pop %v1033
        %v1035 = vmul.f32 %v1021, 1.442695
        %v1036 = vpow.pop %v1035
        %v1037 = vmul.f32 %v1022, 1.442695
        %v1038 = vpow.pop %v1037
        %1040 = vset.pattern.permute.xlu0 0
        %1041 = vperm.xlu0 %1040, %v1007
        %v1042 = vpop.permute.xlu0 %1041
        %1045 = vset.pattern.permute.xlu0 0
        %1046 = vperm.xlu0 %1045, %v1008
        %v1047 = vpop.permute.xlu0 %1046
        %1050 = vset.pattern.permute.xlu0 0
        %1051 = vperm.xlu0 %1050, %v1009
        %v1052 = vpop.permute.xlu0 %1051
        %1055 = vset.pattern.permute.xlu0 0
        %1056 = vperm.xlu0 %1055, %v1010
        %v1057 = vpop.permute.xlu0 %1056
        %1060 = vset.pattern.permute.xlu0 0
        %1061 = vperm.xlu0 %1060, %v1011
        %v1062 = vpop.permute.xlu0 %1061
        %1065 = vset.pattern.permute.xlu0 0
        %1066 = vperm.xlu0 %1065, %v1012
        %v1067 = vpop.permute.xlu0 %1066
        %1070 = vset.pattern.permute.xlu0 0
        %1071 = vperm.xlu0 %1070, %v1013
        %v1072 = vpop.permute.xlu0 %1071
        %1075 = vset.pattern.permute.xlu0 0
        %1076 = vperm.xlu0 %1075, %v1014
        %v1077 = vpop.permute.xlu0 %1076
        %v1079 = vsub.f32 %v966, %v1042
        %v1080 = vsub.f32 %v967, %v1047
        %v1081 = vsub.f32 %v968, %v1052
        %v1082 = vsub.f32 %v969, %v1057
        %v1083 = vsub.f32 %v970, %v1062
        %v1084 = vsub.f32 %v971, %v1067
        %v1085 = vsub.f32 %v972, %v1072
        %v1086 = vsub.f32 %v973, %v1077
        %v1087 = vmul.f32 %v1079, 1.442695
        %v1088 = vpow.pop %v1087
        %v1089 = vmul.f32 %v1080, 1.442695
        %v1090 = vpow.pop %v1089
        %v1091 = vmul.f32 %v1081, 1.442695
        %v1092 = vpow.pop %v1091
        %v1093 = vmul.f32 %v1082, 1.442695
        %v1094 = vpow.pop %v1093
        %v1095 = vmul.f32 %v1083, 1.442695
        %v1096 = vpow.pop %v1095
        %v1097 = vmul.f32 %v1084, 1.442695
        %v1098 = vpow.pop %v1097
        %v1099 = vmul.f32 %v1085, 1.442695
        %v1100 = vpow.pop %v1099
        %v1101 = vmul.f32 %v1086, 1.442695
        %v1102 = vpow.pop %v1101
        %v1103 = vld [vmem:[#allocation3] sm:$0xff]
        %v1104 = vld [vmem:[#allocation3 + $0x8] sm:$0xff]
        %v1105 = vld [vmem:[#allocation3 + $0x10] sm:$0xff]
        %v1106 = vld [vmem:[#allocation3 + $0x18] sm:$0xff]
        %v1107 = vld [vmem:[#allocation3 + $0x20] sm:$0xff]
        %v1108 = vld [vmem:[#allocation3 + $0x28] sm:$0xff]
        %v1109 = vld [vmem:[#allocation3 + $0x30] sm:$0xff]
        %v1110 = vld [vmem:[#allocation3 + $0x38] sm:$0xff]
        %v1111 = vmul.f32 %v1024, %v1103
        %v1112 = vmul.f32 %v1026, %v1104
        %v1113 = vmul.f32 %v1028, %v1105
        %v1114 = vmul.f32 %v1030, %v1106
        %v1115 = vmul.f32 %v1032, %v1107
        %v1116 = vmul.f32 %v1034, %v1108
        %v1117 = vmul.f32 %v1036, %v1109
        %v1118 = vmul.f32 %v1038, %v1110
        %v1119 = vsel %vm982, %v1088, 0.0
        %1120 = vadd.xlane.f32.xlu0 %v1119
        %v1121 = vpop.xlane.xlu0 %1120
        %v1122 = vsel %vm982, %v1090, 0.0
        %1123 = vadd.xlane.f32.xlu0 %v1122
        %v1124 = vpop.xlane.xlu0 %1123
        %v1125 = vsel %vm982, %v1092, 0.0
        %1126 = vadd.xlane.f32.xlu0 %v1125
        %v1127 = vpop.xlane.xlu0 %1126
        %v1128 = vsel %vm982, %v1094, 0.0
        %1129 = vadd.xlane.f32.xlu0 %v1128
        %v1130 = vpop.xlane.xlu0 %1129
        %v1131 = vsel %vm982, %v1096, 0.0
        %1132 = vadd.xlane.f32.xlu0 %v1131
        %v1133 = vpop.xlane.xlu0 %1132
        %v1134 = vsel %vm982, %v1098, 0.0
        %1135 = vadd.xlane.f32.xlu0 %v1134
        %v1136 = vpop.xlane.xlu0 %1135
        %v1137 = vsel %vm982, %v1100, 0.0
        %1138 = vadd.xlane.f32.xlu0 %v1137
        %v1139 = vpop.xlane.xlu0 %1138
        %v1140 = vsel %vm982, %v1102, 0.0
        %1141 = vadd.xlane.f32.xlu0 %v1140
        %v1142 = vpop.xlane.xlu0 %1141
        %v1143 = vadd.f32 %v1111, %v1121
        %v1144 = vadd.f32 %v1112, %v1124
        %v1145 = vadd.f32 %v1113, %v1127
        %v1146 = vadd.f32 %v1114, %v1130
        %v1147 = vadd.f32 %v1115, %v1133
        %v1148 = vadd.f32 %v1116, %v1136
        %v1149 = vadd.f32 %v1117, %v1139
        %v1150 = vadd.f32 %v1118, %v1142
        %vm1151 = vcmask 7168
        %1152 = vst.msk [vmem:[#allocation3] sm:$0xff] %vm1151, %v1143
        %1153 = vst.msk [vmem:[#allocation3 + $0x8] sm:$0xff] %vm1151, %v1144
        %1154 = vst.msk [vmem:[#allocation3 + $0x10] sm:$0xff] %vm1151, %v1145
        %1155 = vst.msk [vmem:[#allocation3 + $0x18] sm:$0xff] %vm1151, %v1146
        %1156 = vst.msk [vmem:[#allocation3 + $0x20] sm:$0xff] %vm1151, %v1147
        %1157 = vst.msk [vmem:[#allocation3 + $0x28] sm:$0xff] %vm1151, %v1148
        %1158 = vst.msk [vmem:[#allocation3 + $0x30] sm:$0xff] %vm1151, %v1149
        %1159 = vst.msk [vmem:[#allocation3 + $0x38] sm:$0xff] %vm1151, %v1150
        %v1160 = vld [vmem:[#allocation4] sm:$0xff]
        %v1161 = vld [vmem:[#allocation4 + $0x8] sm:$0xff]
        %v1162 = vld [vmem:[#allocation4 + $0x10] sm:$0xff]
        %v1163 = vld [vmem:[#allocation4 + $0x18] sm:$0xff]
        %v1164 = vld [vmem:[#allocation4 + $0x20] sm:$0xff]
        %v1165 = vld [vmem:[#allocation4 + $0x28] sm:$0xff]
        %v1166 = vld [vmem:[#allocation4 + $0x30] sm:$0xff]
        %v1167 = vld [vmem:[#allocation4 + $0x38] sm:$0xff]
        %1169 = vset.pattern.permute.xlu0 0
        %1170 = vperm.xlu0 %1169, %v1024
        %v1171 = vpop.permute.xlu0 %1170
        %1174 = vset.pattern.permute.xlu0 0
        %1175 = vperm.xlu0 %1174, %v1026
        %v1176 = vpop.permute.xlu0 %1175
        %1179 = vset.pattern.permute.xlu0 0
        %1180 = vperm.xlu0 %1179, %v1028
        %v1181 = vpop.permute.xlu0 %1180
        %1184 = vset.pattern.permute.xlu0 0
        %1185 = vperm.xlu0 %1184, %v1030
        %v1186 = vpop.permute.xlu0 %1185
        %1189 = vset.pattern.permute.xlu0 0
        %1190 = vperm.xlu0 %1189, %v1032
        %v1191 = vpop.permute.xlu0 %1190
        %1194 = vset.pattern.permute.xlu0 0
        %1195 = vperm.xlu0 %1194, %v1034
        %v1196 = vpop.permute.xlu0 %1195
        %1199 = vset.pattern.permute.xlu0 0
        %1200 = vperm.xlu0 %1199, %v1036
        %v1201 = vpop.permute.xlu0 %1200
        %1204 = vset.pattern.permute.xlu0 0
        %1205 = vperm.xlu0 %1204, %v1038
        %v1206 = vpop.permute.xlu0 %1205
        %v1208 = vmul.f32 %v1171, %v1160
        %v1209 = vmul.f32 %v1176, %v1161
        %v1210 = vmul.f32 %v1181, %v1162
        %v1211 = vmul.f32 %v1186, %v1163
        %v1212 = vmul.f32 %v1191, %v1164
        %v1213 = vmul.f32 %v1196, %v1165
        %v1214 = vmul.f32 %v1201, %v1166
        %v1215 = vmul.f32 %v1206, %v1167
        %v1217 = vsel %vm982, %v1088, 0
        %1219 = vmatprep.subr.mxu0 0.0
        %1220 = vmatpush1.msra.mxu0 %v349
        %1221 = vmatprep.subr.mxu0 0.0
        %1222 = vmatpush1.msra.mxu0 0.0
        %1223 = vmatprep.subr.mxu0 0.0
        %1224 = vmatpush1.msra.mxu0 0.0
        %1225 = vmatprep.subr.mxu0 0.0
        %1226 = vmatpush1.msra.mxu0 0.0
        %1227 = vmatprep.subr.mxu0 0.0
        %1228 = vmatpush1.msra.mxu0 0.0
        %1229 = vmatprep.subr.mxu0 0.0
        %1230 = vmatpush1.msra.mxu0 0.0
        %1231 = vmatprep.subr.mxu0 0.0
        %1232 = vmatpush1.msra.mxu0 0.0
        %1233 = vmatprep.subr.mxu0 0.0
        %1234 = vmatpush1.msra.mxu0 0.0
        %1235 = vmatprep.subr.mxu0 0.0
        %1236 = vmatpush1.msra.mxu0 0.0
        %1237 = vmatprep.subr.mxu0 0.0
        %1238 = vmatpush1.msra.mxu0 0.0
        %1239 = vmatprep.subr.mxu0 0.0
        %1240 = vmatpush1.msra.mxu0 0.0
        %1241 = vmatprep.subr.mxu0 0.0
        %1242 = vmatpush1.msra.mxu0 0.0
        %1243 = vmatprep.subr.mxu0 0.0
        %1244 = vmatpush1.msra.mxu0 0.0
        %1245 = vmatprep.subr.mxu0 0.0
        %1246 = vmatpush1.msra.mxu0 0.0
        %1247 = vmatprep.subr.mxu0 0.0
        %1248 = vmatpush1.msra.mxu0 0.0
        %1249 = vmatprep.subr.mxu0 0.0
        %1250 = vmatpush1.msra.mxu0 0.0
        %1251 = vmatprep.subr.mxu0 0.0
        %1252 = vmatpush1.msra.mxu0 0.0
        %1253 = vmatprep.subr.mxu0 0.0
        %1254 = vmatpush1.msra.mxu0 0.0
        %1255 = vmatprep.subr.mxu0 0.0
        %1256 = vmatpush1.msra.mxu0 0.0
        %1257 = vmatprep.subr.mxu0 0.0
        %1258 = vmatpush1.msra.mxu0 0.0
        %1259 = vmatprep.subr.mxu0 0.0
        %1260 = vmatpush1.msra.mxu0 0.0
        %1261 = vmatprep.subr.mxu0 0.0
        %1262 = vmatpush1.msra.mxu0 0.0
        %1263 = vmatprep.subr.mxu0 0.0
        %1264 = vmatpush1.msra.mxu0 0.0
        %1265 = vmatprep.subr.mxu0 0.0
        %1266 = vmatpush1.msra.mxu0 0.0
        %1267 = vmatprep.subr.mxu0 0.0
        %1268 = vmatpush1.msra.mxu0 0.0
        %1269 = vmatprep.subr.mxu0 0.0
        %1270 = vmatpush1.msra.mxu0 0.0
        %1271 = vmatprep.subr.mxu0 0.0
        %1272 = vmatpush1.msra.mxu0 0.0
        %1273 = vmatprep.subr.mxu0 0.0
        %1274 = vmatpush1.msra.mxu0 0.0
        %1275 = vmatprep.subr.mxu0 0.0
        %1276 = vmatpush1.msra.mxu0 0.0
        %1277 = vmatprep.subr.mxu0 0.0
        %1278 = vmatpush1.msra.mxu0 0.0
        %1279 = vmatprep.subr.mxu0 0.0
        %1280 = vmatpush1.msra.mxu0 0.0
        %1281 = vmatprep.subr.mxu0 0.0
        %1282 = vmatpush1.msra.mxu0 0.0
        %1283 = vmatprep.mubr.f32.mxu0 0.0
        %1284 = vmatmul.mubr.f32.gmra.mrb[0].mxu0 %v1217
        %v1285 = vpop.f32.mrb[0].mxu0
        %v1286 = vadd.f32 0.0, %v1285
        %v1287 = vpop.f32.mrb[0].mxu0
        %1288 = vdwg.mxu0
        %v1290 = vsel %vm982, %v1090, 0
        %1292 = vmatprep.subr.mxu0 0.0
        %1293 = vmatpush1.msra.mxu0 %v350
        %1294 = vmatprep.subr.mxu0 0.0
        %1295 = vmatpush1.msra.mxu0 0.0
        %1296 = vmatprep.subr.mxu0 0.0
        %1297 = vmatpush1.msra.mxu0 0.0
        %1298 = vmatprep.subr.mxu0 0.0
        %1299 = vmatpush1.msra.mxu0 0.0
        %1300 = vmatprep.subr.mxu0 0.0
        %1301 = vmatpush1.msra.mxu0 0.0
        %1302 = vmatprep.subr.mxu0 0.0
        %1303 = vmatpush1.msra.mxu0 0.0
        %1304 = vmatprep.subr.mxu0 0.0
        %1305 = vmatpush1.msra.mxu0 0.0
        %1306 = vmatprep.subr.mxu0 0.0
        %1307 = vmatpush1.msra.mxu0 0.0
        %1308 = vmatprep.subr.mxu0 0.0
        %1309 = vmatpush1.msra.mxu0 0.0
        %1310 = vmatprep.subr.mxu0 0.0
        %1311 = vmatpush1.msra.mxu0 0.0
        %1312 = vmatprep.subr.mxu0 0.0
        %1313 = vmatpush1.msra.mxu0 0.0
        %1314 = vmatprep.subr.mxu0 0.0
        %1315 = vmatpush1.msra.mxu0 0.0
        %1316 = vmatprep.subr.mxu0 0.0
        %1317 = vmatpush1.msra.mxu0 0.0
        %1318 = vmatprep.subr.mxu0 0.0
        %1319 = vmatpush1.msra.mxu0 0.0
        %1320 = vmatprep.subr.mxu0 0.0
        %1321 = vmatpush1.msra.mxu0 0.0
        %1322 = vmatprep.subr.mxu0 0.0
        %1323 = vmatpush1.msra.mxu0 0.0
        %1324 = vmatprep.subr.mxu0 0.0
        %1325 = vmatpush1.msra.mxu0 0.0
        %1326 = vmatprep.subr.mxu0 0.0
        %1327 = vmatpush1.msra.mxu0 0.0
        %1328 = vmatprep.subr.mxu0 0.0
        %1329 = vmatpush1.msra.mxu0 0.0
        %1330 = vmatprep.subr.mxu0 0.0
        %1331 = vmatpush1.msra.mxu0 0.0
        %1332 = vmatprep.subr.mxu0 0.0
        %1333 = vmatpush1.msra.mxu0 0.0
        %1334 = vmatprep.subr.mxu0 0.0
        %1335 = vmatpush1.msra.mxu0 0.0
        %1336 = vmatprep.subr.mxu0 0.0
        %1337 = vmatpush1.msra.mxu0 0.0
        %1338 = vmatprep.subr.mxu0 0.0
        %1339 = vmatpush1.msra.mxu0 0.0
        %1340 = vmatprep.subr.mxu0 0.0
        %1341 = vmatpush1.msra.mxu0 0.0
        %1342 = vmatprep.subr.mxu0 0.0
        %1343 = vmatpush1.msra.mxu0 0.0
        %1344 = vmatprep.subr.mxu0 0.0
        %1345 = vmatpush1.msra.mxu0 0.0
        %1346 = vmatprep.subr.mxu0 0.0
        %1347 = vmatpush1.msra.mxu0 0.0
        %1348 = vmatprep.subr.mxu0 0.0
        %1349 = vmatpush1.msra.mxu0 0.0
        %1350 = vmatprep.subr.mxu0 0.0
        %1351 = vmatpush1.msra.mxu0 0.0
        %1352 = vmatprep.subr.mxu0 0.0
        %1353 = vmatpush1.msra.mxu0 0.0
        %1354 = vmatprep.subr.mxu0 0.0
        %1355 = vmatpush1.msra.mxu0 0.0
        %1356 = vmatprep.mubr.f32.mxu0 0.0
        %1357 = vmatmul.mubr.f32.gmra.mrb[0].mxu0 %v1290
        %v1358 = vpop.f32.mrb[0].mxu0
        %v1359 = vadd.f32 0.0, %v1358
        %v1360 = vpop.f32.mrb[0].mxu0
        %1361 = vdwg.mxu0
        %v1363 = vsel %vm982, %v1092, 0
        %1365 = vmatprep.subr.mxu0 0.0
        %1366 = vmatpush1.msra.mxu0 %v351
        %1367 = vmatprep.subr.mxu0 0.0
        %1368 = vmatpush1.msra.mxu0 0.0
        %1369 = vmatprep.subr.mxu0 0.0
        %1370 = vmatpush1.msra.mxu0 0.0
        %1371 = vmatprep.subr.mxu0 0.0
        %1372 = vmatpush1.msra.mxu0 0.0
        %1373 = vmatprep.subr.mxu0 0.0
        %1374 = vmatpush1.msra.mxu0 0.0
        %1375 = vmatprep.subr.mxu0 0.0
        %1376 = vmatpush1.msra.mxu0 0.0
        %1377 = vmatprep.subr.mxu0 0.0
        %1378 = vmatpush1.msra.mxu0 0.0
        %1379 = vmatprep.subr.mxu0 0.0
        %1380 = vmatpush1.msra.mxu0 0.0
        %1381 = vmatprep.subr.mxu0 0.0
        %1382 = vmatpush1.msra.mxu0 0.0
        %1383 = vmatprep.subr.mxu0 0.0
        %1384 = vmatpush1.msra.mxu0 0.0
        %1385 = vmatprep.subr.mxu0 0.0
        %1386 = vmatpush1.msra.mxu0 0.0
        %1387 = vmatprep.subr.mxu0 0.0
        %1388 = vmatpush1.msra.mxu0 0.0
        %1389 = vmatprep.subr.mxu0 0.0
        %1390 = vmatpush1.msra.mxu0 0.0
        %1391 = vmatprep.subr.mxu0 0.0
        %1392 = vmatpush1.msra.mxu0 0.0
        %1393 = vmatprep.subr.mxu0 0.0
        %1394 = vmatpush1.msra.mxu0 0.0
        %1395 = vmatprep.subr.mxu0 0.0
        %1396 = vmatpush1.msra.mxu0 0.0
        %1397 = vmatprep.subr.mxu0 0.0
        %1398 = vmatpush1.msra.mxu0 0.0
        %1399 = vmatprep.subr.mxu0 0.0
        %1400 = vmatpush1.msra.mxu0 0.0
        %1401 = vmatprep.subr.mxu0 0.0
        %1402 = vmatpush1.msra.mxu0 0.0
        %1403 = vmatprep.subr.mxu0 0.0
        %1404 = vmatpush1.msra.mxu0 0.0
        %1405 = vmatprep.subr.mxu0 0.0
        %1406 = vmatpush1.msra.mxu0 0.0
        %1407 = vmatprep.subr.mxu0 0.0
        %1408 = vmatpush1.msra.mxu0 0.0
        %1409 = vmatprep.subr.mxu0 0.0
        %1410 = vmatpush1.msra.mxu0 0.0
        %1411 = vmatprep.subr.mxu0 0.0
        %1412 = vmatpush1.msra.mxu0 0.0
        %1413 = vmatprep.subr.mxu0 0.0
        %1414 = vmatpush1.msra.mxu0 0.0
        %1415 = vmatprep.subr.mxu0 0.0
        %1416 = vmatpush1.msra.mxu0 0.0
        %1417 = vmatprep.subr.mxu0 0.0
        %1418 = vmatpush1.msra.mxu0 0.0
        %1419 = vmatprep.subr.mxu0 0.0
        %1420 = vmatpush1.msra.mxu0 0.0
        %1421 = vmatprep.subr.mxu0 0.0
        %1422 = vmatpush1.msra.mxu0 0.0
        %1423 = vmatprep.subr.mxu0 0.0
        %1424 = vmatpush1.msra.mxu0 0.0
        %1425 = vmatprep.subr.mxu0 0.0
        %1426 = vmatpush1.msra.mxu0 0.0
        %1427 = vmatprep.subr.mxu0 0.0
        %1428 = vmatpush1.msra.mxu0 0.0
        %1429 = vmatprep.mubr.f32.mxu0 0.0
        %1430 = vmatmul.mubr.f32.gmra.mrb[0].mxu0 %v1363
        %v1431 = vpop.f32.mrb[0].mxu0
        %v1432 = vadd.f32 0.0, %v1431
        %v1433 = vpop.f32.mrb[0].mxu0
        %1434 = vdwg.mxu0
        %v1436 = vsel %vm982, %v1094, 0
        %1438 = vmatprep.subr.mxu0 0.0
        %1439 = vmatpush1.msra.mxu0 %v352
        %1440 = vmatprep.subr.mxu0 0.0
        %1441 = vmatpush1.msra.mxu0 0.0
        %1442 = vmatprep.subr.mxu0 0.0
        %1443 = vmatpush1.msra.mxu0 0.0
        %1444 = vmatprep.subr.mxu0 0.0
        %1445 = vmatpush1.msra.mxu0 0.0
        %1446 = vmatprep.subr.mxu0 0.0
        %1447 = vmatpush1.msra.mxu0 0.0
        %1448 = vmatprep.subr.mxu0 0.0
        %1449 = vmatpush1.msra.mxu0 0.0
        %1450 = vmatprep.subr.mxu0 0.0
        %1451 = vmatpush1.msra.mxu0 0.0
        %1452 = vmatprep.subr.mxu0 0.0
        %1453 = vmatpush1.msra.mxu0 0.0
        %1454 = vmatprep.subr.mxu0 0.0
        %1455 = vmatpush1.msra.mxu0 0.0
        %1456 = vmatprep.subr.mxu0 0.0
        %1457 = vmatpush1.msra.mxu0 0.0
        %1458 = vmatprep.subr.mxu0 0.0
        %1459 = vmatpush1.msra.mxu0 0.0
        %1460 = vmatprep.subr.mxu0 0.0
        %1461 = vmatpush1.msra.mxu0 0.0
        %1462 = vmatprep.subr.mxu0 0.0
        %1463 = vmatpush1.msra.mxu0 0.0
        %1464 = vmatprep.subr.mxu0 0.0
        %1465 = vmatpush1.msra.mxu0 0.0
        %1466 = vmatprep.subr.mxu0 0.0
        %1467 = vmatpush1.msra.mxu0 0.0
        %1468 = vmatprep.subr.mxu0 0.0
        %1469 = vmatpush1.msra.mxu0 0.0
        %1470 = vmatprep.subr.mxu0 0.0
        %1471 = vmatpush1.msra.mxu0 0.0
        %1472 = vmatprep.subr.mxu0 0.0
        %1473 = vmatpush1.msra.mxu0 0.0
        %1474 = vmatprep.subr.mxu0 0.0
        %1475 = vmatpush1.msra.mxu0 0.0
        %1476 = vmatprep.subr.mxu0 0.0
        %1477 = vmatpush1.msra.mxu0 0.0
        %1478 = vmatprep.subr.mxu0 0.0
        %1479 = vmatpush1.msra.mxu0 0.0
        %1480 = vmatprep.subr.mxu0 0.0
        %1481 = vmatpush1.msra.mxu0 0.0
        %1482 = vmatprep.subr.mxu0 0.0
        %1483 = vmatpush1.msra.mxu0 0.0
        %1484 = vmatprep.subr.mxu0 0.0
        %1485 = vmatpush1.msra.mxu0 0.0
        %1486 = vmatprep.subr.mxu0 0.0
        %1487 = vmatpush1.msra.mxu0 0.0
        %1488 = vmatprep.subr.mxu0 0.0
        %1489 = vmatpush1.msra.mxu0 0.0
        %1490 = vmatprep.subr.mxu0 0.0
        %1491 = vmatpush1.msra.mxu0 0.0
        %1492 = vmatprep.subr.mxu0 0.0
        %1493 = vmatpush1.msra.mxu0 0.0
        %1494 = vmatprep.subr.mxu0 0.0
        %1495 = vmatpush1.msra.mxu0 0.0
        %1496 = vmatprep.subr.mxu0 0.0
        %1497 = vmatpush1.msra.mxu0 0.0
        %1498 = vmatprep.subr.mxu0 0.0
        %1499 = vmatpush1.msra.mxu0 0.0
        %1500 = vmatprep.subr.mxu0 0.0
        %1501 = vmatpush1.msra.mxu0 0.0
        %1502 = vmatprep.mubr.f32.mxu0 0.0
        %1503 = vmatmul.mubr.f32.gmra.mrb[0].mxu0 %v1436
        %v1504 = vpop.f32.mrb[0].mxu0
        %v1505 = vadd.f32 0.0, %v1504
        %v1506 = vpop.f32.mrb[0].mxu0
        %1507 = vdwg.mxu0
        %v1509 = vsel %vm982, %v1096, 0
        %1511 = vmatprep.subr.mxu0 0.0
        %1512 = vmatpush1.msra.mxu0 %v353
        %1513 = vmatprep.subr.mxu0 0.0
        %1514 = vmatpush1.msra.mxu0 0.0
        %1515 = vmatprep.subr.mxu0 0.0
        %1516 = vmatpush1.msra.mxu0 0.0
        %1517 = vmatprep.subr.mxu0 0.0
        %1518 = vmatpush1.msra.mxu0 0.0
        %1519 = vmatprep.subr.mxu0 0.0
        %1520 = vmatpush1.msra.mxu0 0.0
        %1521 = vmatprep.subr.mxu0 0.0
        %1522 = vmatpush1.msra.mxu0 0.0
        %1523 = vmatprep.subr.mxu0 0.0
        %1524 = vmatpush1.msra.mxu0 0.0
        %1525 = vmatprep.subr.mxu0 0.0
        %1526 = vmatpush1.msra.mxu0 0.0
        %1527 = vmatprep.subr.mxu0 0.0
        %1528 = vmatpush1.msra.mxu0 0.0
        %1529 = vmatprep.subr.mxu0 0.0
        %1530 = vmatpush1.msra.mxu0 0.0
        %1531 = vmatprep.subr.mxu0 0.0
        %1532 = vmatpush1.msra.mxu0 0.0
        %1533 = vmatprep.subr.mxu0 0.0
        %1534 = vmatpush1.msra.mxu0 0.0
        %1535 = vmatprep.subr.mxu0 0.0
        %1536 = vmatpush1.msra.mxu0 0.0
        %1537 = vmatprep.subr.mxu0 0.0
        %1538 = vmatpush1.msra.mxu0 0.0
        %1539 = vmatprep.subr.mxu0 0.0
        %1540 = vmatpush1.msra.mxu0 0.0
        %1541 = vmatprep.subr.mxu0 0.0
        %1542 = vmatpush1.msra.mxu0 0.0
        %1543 = vmatprep.subr.mxu0 0.0
        %1544 = vmatpush1.msra.mxu0 0.0
        %1545 = vmatprep.subr.mxu0 0.0
        %1546 = vmatpush1.msra.mxu0 0.0
        %1547 = vmatprep.subr.mxu0 0.0
        %1548 = vmatpush1.msra.mxu0 0.0
        %1549 = vmatprep.subr.mxu0 0.0
        %1550 = vmatpush1.msra.mxu0 0.0
        %1551 = vmatprep.subr.mxu0 0.0
        %1552 = vmatpush1.msra.mxu0 0.0
        %1553 = vmatprep.subr.mxu0 0.0
        %1554 = vmatpush1.msra.mxu0 0.0
        %1555 = vmatprep.subr.mxu0 0.0
        %1556 = vmatpush1.msra.mxu0 0.0
        %1557 = vmatprep.subr.mxu0 0.0
        %1558 = vmatpush1.msra.mxu0 0.0
        %1559 = vmatprep.subr.mxu0 0.0
        %1560 = vmatpush1.msra.mxu0 0.0
        %1561 = vmatprep.subr.mxu0 0.0
        %1562 = vmatpush1.msra.mxu0 0.0
        %1563 = vmatprep.subr.mxu0 0.0
        %1564 = vmatpush1.msra.mxu0 0.0
        %1565 = vmatprep.subr.mxu0 0.0
        %1566 = vmatpush1.msra.mxu0 0.0
        %1567 = vmatprep.subr.mxu0 0.0
        %1568 = vmatpush1.msra.mxu0 0.0
        %1569 = vmatprep.subr.mxu0 0.0
        %1570 = vmatpush1.msra.mxu0 0.0
        %1571 = vmatprep.subr.mxu0 0.0
        %1572 = vmatpush1.msra.mxu0 0.0
        %1573 = vmatprep.subr.mxu0 0.0
        %1574 = vmatpush1.msra.mxu0 0.0
        %1575 = vmatprep.mubr.f32.mxu0 0.0
        %1576 = vmatmul.mubr.f32.gmra.mrb[0].mxu0 %v1509
        %v1577 = vpop.f32.mrb[0].mxu0
        %v1578 = vadd.f32 0.0, %v1577
        %v1579 = vpop.f32.mrb[0].mxu0
        %1580 = vdwg.mxu0
        %v1582 = vsel %vm982, %v1098, 0
        %1584 = vmatprep.subr.mxu0 0.0
        %1585 = vmatpush1.msra.mxu0 %v354
        %1586 = vmatprep.subr.mxu0 0.0
        %1587 = vmatpush1.msra.mxu0 0.0
        %1588 = vmatprep.subr.mxu0 0.0
        %1589 = vmatpush1.msra.mxu0 0.0
        %1590 = vmatprep.subr.mxu0 0.0
        %1591 = vmatpush1.msra.mxu0 0.0
        %1592 = vmatprep.subr.mxu0 0.0
        %1593 = vmatpush1.msra.mxu0 0.0
        %1594 = vmatprep.subr.mxu0 0.0
        %1595 = vmatpush1.msra.mxu0 0.0
        %1596 = vmatprep.subr.mxu0 0.0
        %1597 = vmatpush1.msra.mxu0 0.0
        %1598 = vmatprep.subr.mxu0 0.0
        %1599 = vmatpush1.msra.mxu0 0.0
        %1600 = vmatprep.subr.mxu0 0.0
        %1601 = vmatpush1.msra.mxu0 0.0
        %1602 = vmatprep.subr.mxu0 0.0
        %1603 = vmatpush1.msra.mxu0 0.0
        %1604 = vmatprep.subr.mxu0 0.0
        %1605 = vmatpush1.msra.mxu0 0.0
        %1606 = vmatprep.subr.mxu0 0.0
        %1607 = vmatpush1.msra.mxu0 0.0
        %1608 = vmatprep.subr.mxu0 0.0
        %1609 = vmatpush1.msra.mxu0 0.0
        %1610 = vmatprep.subr.mxu0 0.0
        %1611 = vmatpush1.msra.mxu0 0.0
        %1612 = vmatprep.subr.mxu0 0.0
        %1613 = vmatpush1.msra.mxu0 0.0
        %1614 = vmatprep.subr.mxu0 0.0
        %1615 = vmatpush1.msra.mxu0 0.0
        %1616 = vmatprep.subr.mxu0 0.0
        %1617 = vmatpush1.msra.mxu0 0.0
        %1618 = vmatprep.subr.mxu0 0.0
        %1619 = vmatpush1.msra.mxu0 0.0
        %1620 = vmatprep.subr.mxu0 0.0
        %1621 = vmatpush1.msra.mxu0 0.0
        %1622 = vmatprep.subr.mxu0 0.0
        %1623 = vmatpush1.msra.mxu0 0.0
        %1624 = vmatprep.subr.mxu0 0.0
        %1625 = vmatpush1.msra.mxu0 0.0
        %1626 = vmatprep.subr.mxu0 0.0
        %1627 = vmatpush1.msra.mxu0 0.0
        %1628 = vmatprep.subr.mxu0 0.0
        %1629 = vmatpush1.msra.mxu0 0.0
        %1630 = vmatprep.subr.mxu0 0.0
        %1631 = vmatpush1.msra.mxu0 0.0
        %1632 = vmatprep.subr.mxu0 0.0
        %1633 = vmatpush1.msra.mxu0 0.0
        %1634 = vmatprep.subr.mxu0 0.0
        %1635 = vmatpush1.msra.mxu0 0.0
        %1636 = vmatprep.subr.mxu0 0.0
        %1637 = vmatpush1.msra.mxu0 0.0
        %1638 = vmatprep.subr.mxu0 0.0
        %1639 = vmatpush1.msra.mxu0 0.0
        %1640 = vmatprep.subr.mxu0 0.0
        %1641 = vmatpush1.msra.mxu0 0.0
        %1642 = vmatprep.subr.mxu0 0.0
        %1643 = vmatpush1.msra.mxu0 0.0
        %1644 = vmatprep.subr.mxu0 0.0
        %1645 = vmatpush1.msra.mxu0 0.0
        %1646 = vmatprep.subr.mxu0 0.0
        %1647 = vmatpush1.msra.mxu0 0.0
        %1648 = vmatprep.mubr.f32.mxu0 0.0
        %1649 = vmatmul.mubr.f32.gmra.mrb[0].mxu0 %v1582
        %v1650 = vpop.f32.mrb[0].mxu0
        %v1651 = vadd.f32 0.0, %v1650
        %v1652 = vpop.f32.mrb[0].mxu0
        %1653 = vdwg.mxu0
        %v1655 = vsel %vm982, %v1100, 0
        %1657 = vmatprep.subr.mxu0 0.0
        %1658 = vmatpush1.msra.mxu0 %v355
        %1659 = vmatprep.subr.mxu0 0.0
        %1660 = vmatpush1.msra.mxu0 0.0
        %1661 = vmatprep.subr.mxu0 0.0
        %1662 = vmatpush1.msra.mxu0 0.0
        %1663 = vmatprep.subr.mxu0 0.0
        %1664 = vmatpush1.msra.mxu0 0.0
        %1665 = vmatprep.subr.mxu0 0.0
        %1666 = vmatpush1.msra.mxu0 0.0
        %1667 = vmatprep.subr.mxu0 0.0
        %1668 = vmatpush1.msra.mxu0 0.0
        %1669 = vmatprep.subr.mxu0 0.0
        %1670 = vmatpush1.msra.mxu0 0.0
        %1671 = vmatprep.subr.mxu0 0.0
        %1672 = vmatpush1.msra.mxu0 0.0
        %1673 = vmatprep.subr.mxu0 0.0
        %1674 = vmatpush1.msra.mxu0 0.0
        %1675 = vmatprep.subr.mxu0 0.0
        %1676 = vmatpush1.msra.mxu0 0.0
        %1677 = vmatprep.subr.mxu0 0.0
        %1678 = vmatpush1.msra.mxu0 0.0
        %1679 = vmatprep.subr.mxu0 0.0
        %1680 = vmatpush1.msra.mxu0 0.0
        %1681 = vmatprep.subr.mxu0 0.0
        %1682 = vmatpush1.msra.mxu0 0.0
        %1683 = vmatprep.subr.mxu0 0.0
        %1684 = vmatpush1.msra.mxu0 0.0
        %1685 = vmatprep.subr.mxu0 0.0
        %1686 = vmatpush1.msra.mxu0 0.0
        %1687 = vmatprep.subr.mxu0 0.0
        %1688 = vmatpush1.msra.mxu0 0.0
        %1689 = vmatprep.subr.mxu0 0.0
        %1690 = vmatpush1.msra.mxu0 0.0
        %1691 = vmatprep.subr.mxu0 0.0
        %1692 = vmatpush1.msra.mxu0 0.0
        %1693 = vmatprep.subr.mxu0 0.0
        %1694 = vmatpush1.msra.mxu0 0.0
        %1695 = vmatprep.subr.mxu0 0.0
        %1696 = vmatpush1.msra.mxu0 0.0
        %1697 = vmatprep.subr.mxu0 0.0
        %1698 = vmatpush1.msra.mxu0 0.0
        %1699 = vmatprep.subr.mxu0 0.0
        %1700 = vmatpush1.msra.mxu0 0.0
        %1701 = vmatprep.subr.mxu0 0.0
        %1702 = vmatpush1.msra.mxu0 0.0
        %1703 = vmatprep.subr.mxu0 0.0
        %1704 = vmatpush1.msra.mxu0 0.0
        %1705 = vmatprep.subr.mxu0 0.0
        %1706 = vmatpush1.msra.mxu0 0.0
        %1707 = vmatprep.subr.mxu0 0.0
        %1708 = vmatpush1.msra.mxu0 0.0
        %1709 = vmatprep.subr.mxu0 0.0
        %1710 = vmatpush1.msra.mxu0 0.0
        %1711 = vmatprep.subr.mxu0 0.0
        %1712 = vmatpush1.msra.mxu0 0.0
        %1713 = vmatprep.subr.mxu0 0.0
        %1714 = vmatpush1.msra.mxu0 0.0
        %1715 = vmatprep.subr.mxu0 0.0
        %1716 = vmatpush1.msra.mxu0 0.0
        %1717 = vmatprep.subr.mxu0 0.0
        %1718 = vmatpush1.msra.mxu0 0.0
        %1719 = vmatprep.subr.mxu0 0.0
        %1720 = vmatpush1.msra.mxu0 0.0
        %1721 = vmatprep.mubr.f32.mxu0 0.0
        %1722 = vmatmul.mubr.f32.gmra.mrb[0].mxu0 %v1655
        %v1723 = vpop.f32.mrb[0].mxu0
        %v1724 = vadd.f32 0.0, %v1723
        %v1725 = vpop.f32.mrb[0].mxu0
        %1726 = vdwg.mxu0
        %v1728 = vsel %vm982, %v1102, 0
        %1730 = vmatprep.subr.mxu0 0.0
        %1731 = vmatpush1.msra.mxu0 %v356
        %1732 = vmatprep.subr.mxu0 0.0
        %1733 = vmatpush1.msra.mxu0 0.0
        %1734 = vmatprep.subr.mxu0 0.0
        %1735 = vmatpush1.msra.mxu0 0.0
        %1736 = vmatprep.subr.mxu0 0.0
        %1737 = vmatpush1.msra.mxu0 0.0
        %1738 = vmatprep.subr.mxu0 0.0
        %1739 = vmatpush1.msra.mxu0 0.0
        %1740 = vmatprep.subr.mxu0 0.0
        %1741 = vmatpush1.msra.mxu0 0.0
        %1742 = vmatprep.subr.mxu0 0.0
        %1743 = vmatpush1.msra.mxu0 0.0
        %1744 = vmatprep.subr.mxu0 0.0
        %1745 = vmatpush1.msra.mxu0 0.0
        %1746 = vmatprep.subr.mxu0 0.0
        %1747 = vmatpush1.msra.mxu0 0.0
        %1748 = vmatprep.subr.mxu0 0.0
        %1749 = vmatpush1.msra.mxu0 0.0
        %1750 = vmatprep.subr.mxu0 0.0
        %1751 = vmatpush1.msra.mxu0 0.0
        %1752 = vmatprep.subr.mxu0 0.0
        %1753 = vmatpush1.msra.mxu0 0.0
        %1754 = vmatprep.subr.mxu0 0.0
        %1755 = vmatpush1.msra.mxu0 0.0
        %1756 = vmatprep.subr.mxu0 0.0
        %1757 = vmatpush1.msra.mxu0 0.0
        %1758 = vmatprep.subr.mxu0 0.0
        %1759 = vmatpush1.msra.mxu0 0.0
        %1760 = vmatprep.subr.mxu0 0.0
        %1761 = vmatpush1.msra.mxu0 0.0
        %1762 = vmatprep.subr.mxu0 0.0
        %1763 = vmatpush1.msra.mxu0 0.0
        %1764 = vmatprep.subr.mxu0 0.0
        %1765 = vmatpush1.msra.mxu0 0.0
        %1766 = vmatprep.subr.mxu0 0.0
        %1767 = vmatpush1.msra.mxu0 0.0
        %1768 = vmatprep.subr.mxu0 0.0
        %1769 = vmatpush1.msra.mxu0 0.0
        %1770 = vmatprep.subr.mxu0 0.0
        %1771 = vmatpush1.msra.mxu0 0.0
        %1772 = vmatprep.subr.mxu0 0.0
        %1773 = vmatpush1.msra.mxu0 0.0
        %1774 = vmatprep.subr.mxu0 0.0
        %1775 = vmatpush1.msra.mxu0 0.0
        %1776 = vmatprep.subr.mxu0 0.0
        %1777 = vmatpush1.msra.mxu0 0.0
        %1778 = vmatprep.subr.mxu0 0.0
        %1779 = vmatpush1.msra.mxu0 0.0
        %1780 = vmatprep.subr.mxu0 0.0
        %1781 = vmatpush1.msra.mxu0 0.0
        %1782 = vmatprep.subr.mxu0 0.0
        %1783 = vmatpush1.msra.mxu0 0.0
        %1784 = vmatprep.subr.mxu0 0.0
        %1785 = vmatpush1.msra.mxu0 0.0
        %1786 = vmatprep.subr.mxu0 0.0
        %1787 = vmatpush1.msra.mxu0 0.0
        %1788 = vmatprep.subr.mxu0 0.0
        %1789 = vmatpush1.msra.mxu0 0.0
        %1790 = vmatprep.subr.mxu0 0.0
        %1791 = vmatpush1.msra.mxu0 0.0
        %1792 = vmatprep.subr.mxu0 0.0
        %1793 = vmatpush1.msra.mxu0 0.0
        %1794 = vmatprep.mubr.f32.mxu0 0.0
        %1795 = vmatmul.mubr.f32.gmra.mrb[0].mxu0 %v1728
        %v1796 = vpop.f32.mrb[0].mxu0
        %v1797 = vadd.f32 0.0, %v1796
        %v1798 = vpop.f32.mrb[0].mxu0
        %1799 = vdwg.mxu0
        %v1800 = vadd.f32 %v1208, %v1286
        %v1801 = vadd.f32 %v1209, %v1359
        %v1802 = vadd.f32 %v1210, %v1432
        %v1803 = vadd.f32 %v1211, %v1505
        %v1804 = vadd.f32 %v1212, %v1578
        %v1805 = vadd.f32 %v1213, %v1651
        %v1806 = vadd.f32 %v1214, %v1724
        %v1807 = vadd.f32 %v1215, %v1797
        %1808 = vst.msk [vmem:[#allocation4] sm:$0xff] %vm357, %v1800
        %1809 = vst.msk [vmem:[#allocation4 + $0x8] sm:$0xff] %vm357, %v1801
        %1810 = vst.msk [vmem:[#allocation4 + $0x10] sm:$0xff] %vm357, %v1802
        %1811 = vst.msk [vmem:[#allocation4 + $0x18] sm:$0xff] %vm357, %v1803
        %1812 = vst.msk [vmem:[#allocation4 + $0x20] sm:$0xff] %vm357, %v1804
        %1813 = vst.msk [vmem:[#allocation4 + $0x28] sm:$0xff] %vm357, %v1805
        %1814 = vst.msk [vmem:[#allocation4 + $0x30] sm:$0xff] %vm357, %v1806
        %1815 = vst.msk [vmem:[#allocation4 + $0x38] sm:$0xff] %vm357, %v1807
        %1816 = vst.msk [vmem:[#allocation2] sm:$0xff] %vm1151, %v1007
        %1817 = vst.msk [vmem:[#allocation2 + $0x8] sm:$0xff] %vm1151, %v1008
        %1818 = vst.msk [vmem:[#allocation2 + $0x10] sm:$0xff] %vm1151, %v1009
        %1819 = vst.msk [vmem:[#allocation2 + $0x18] sm:$0xff] %vm1151, %v1010
        %1820 = vst.msk [vmem:[#allocation2 + $0x20] sm:$0xff] %vm1151, %v1011
        %1821 = vst.msk [vmem:[#allocation2 + $0x28] sm:$0xff] %vm1151, %v1012
        %1822 = vst.msk [vmem:[#allocation2 + $0x30] sm:$0xff] %vm1151, %v1013
        %1823 = vst.msk [vmem:[#allocation2 + $0x38] sm:$0xff] %vm1151, %v1014
        %p1824 = scmp.eq.s32.totalorder %s30, 1
        // Predicated region
        $region49: #{encoder_layer.5} parent=31 // pred_check
          %p1825 = pneg %p1824
        $region50: #{encoder_layer.5} parent=31 // pred_check_branch
          %1827 = sbr.rel (%p1825) target = $region52
        $region51: #{encoder_layer.5} parent=31 // pred_region
          %v1828 = vld [vmem:[#allocation3] sm:$0xff]
          %v1829 = vld [vmem:[#allocation3 + $0x8] sm:$0xff]
          %v1830 = vld [vmem:[#allocation3 + $0x10] sm:$0xff]
          %v1831 = vld [vmem:[#allocation3 + $0x18] sm:$0xff]
          %v1832 = vld [vmem:[#allocation3 + $0x20] sm:$0xff]
          %v1833 = vld [vmem:[#allocation3 + $0x28] sm:$0xff]
          %v1834 = vld [vmem:[#allocation3 + $0x30] sm:$0xff]
          %v1835 = vld [vmem:[#allocation3 + $0x38] sm:$0xff]
          %v1836 = vrcp.pop %v1828
          %v1837 = vrcp.pop %v1829
          %v1838 = vrcp.pop %v1830
          %v1839 = vrcp.pop %v1831
          %v1840 = vrcp.pop %v1832
          %v1841 = vrcp.pop %v1833
          %v1842 = vrcp.pop %v1834
          %v1843 = vrcp.pop %v1835
          %v1844 = vld [vmem:[#allocation4] sm:$0xff]
          %v1845 = vld [vmem:[#allocation4 + $0x8] sm:$0xff]
          %v1846 = vld [vmem:[#allocation4 + $0x10] sm:$0xff]
          %v1847 = vld [vmem:[#allocation4 + $0x18] sm:$0xff]
          %v1848 = vld [vmem:[#allocation4 + $0x20] sm:$0xff]
          %v1849 = vld [vmem:[#allocation4 + $0x28] sm:$0xff]
          %v1850 = vld [vmem:[#allocation4 + $0x30] sm:$0xff]
          %v1851 = vld [vmem:[#allocation4 + $0x38] sm:$0xff]
          %1853 = vset.pattern.permute.xlu0 0
          %1854 = vperm.xlu0 %1853, %v1836
          %v1855 = vpop.permute.xlu0 %1854
          %1858 = vset.pattern.permute.xlu0 0
          %1859 = vperm.xlu0 %1858, %v1837
          %v1860 = vpop.permute.xlu0 %1859
          %1863 = vset.pattern.permute.xlu0 0
          %1864 = vperm.xlu0 %1863, %v1838
          %v1865 = vpop.permute.xlu0 %1864
          %1868 = vset.pattern.permute.xlu0 0
          %1869 = vperm.xlu0 %1868, %v1839
          %v1870 = vpop.permute.xlu0 %1869
          %1873 = vset.pattern.permute.xlu0 0
          %1874 = vperm.xlu0 %1873, %v1840
          %v1875 = vpop.permute.xlu0 %1874
          %1878 = vset.pattern.permute.xlu0 0
          %1879 = vperm.xlu0 %1878, %v1841
          %v1880 = vpop.permute.xlu0 %1879
          %1883 = vset.pattern.permute.xlu0 0
          %1884 = vperm.xlu0 %1883, %v1842
          %v1885 = vpop.permute.xlu0 %1884
          %1888 = vset.pattern.permute.xlu0 0
          %1889 = vperm.xlu0 %1888, %v1843
          %v1890 = vpop.permute.xlu0 %1889
          %v1892 = vmul.f32 %v1844, %v1855
          %v1893 = vmul.f32 %v1845, %v1860
          %v1894 = vmul.f32 %v1846, %v1865
          %v1895 = vmul.f32 %v1847, %v1870
          %v1896 = vmul.f32 %v1848, %v1875
          %v1897 = vmul.f32 %v1849, %v1880
          %v1898 = vmul.f32 %v1850, %v1885
          %v1899 = vmul.f32 %v1851, %v1890
          %1900 = vst.msk [vmem:[%s298] sm:$0xff] %vm357, %v1892
          %1901 = vst.msk [vmem:[%s298 + $0x8] sm:$0xff] %vm357, %v1893
          %1902 = vst.msk [vmem:[%s298 + $0x10] sm:$0xff] %vm357, %v1894
          %1903 = vst.msk [vmem:[%s298 + $0x18] sm:$0xff] %vm357, %v1895
          %1904 = vst.msk [vmem:[%s298 + $0x20] sm:$0xff] %vm357, %v1896
          %1905 = vst.msk [vmem:[%s298 + $0x28] sm:$0xff] %vm357, %v1897
          %1906 = vst.msk [vmem:[%s298 + $0x30] sm:$0xff] %vm357, %v1898
          %1907 = vst.msk [vmem:[%s298 + $0x38] sm:$0xff] %vm357, %v1899
        $region52: #{encoder_layer.5} parent=31 // pred_fallthru
          _
        %s1908 = sand.u32 %s136, 1
        %s1909 = scalar_lea.sflag [#allocation7], %s1908
        %s1910 = sand.u32 %s136, 1
        %s1911 = smul.addr %s1910, 64
        %s1912 = scalar_lea.vmem [#allocation11], %s1911
        // Predicated region
        $region53: #{encoder_layer.5} parent=31 // pred_check
          %p1913 = pneg %p146
        $region54: #{encoder_layer.5} parent=31 // pred_check_branch
          %1915 = sbr.rel (%p1913) target = $region56
        $region55: #{encoder_layer.5} parent=31 // pred_region
          %s1916 = smul.u32 8, %s28
          %s1918 = ssub.s32 1024, 1024
          %1919 = vsyncadd %s1909, %s1918
          %s1920 = smul.addr %s1916, 2
          %s1921 = sadd.s32 %s29, %s1920
          %s1922 = smul.addr %s1921, 128
          %s1923 = scalar_lea.hbm %s3, %s1922
          %s1924 = sshll.u32 %s1912, 4
          %s1925 = int_to_ptr.vmem [resolvable:$true] %s1924
          %1930 = dma.vmem_to_hbm [thread:$0]  %s1925, 1024, %s1923, %s1909, 128, 256, 8
        $region56: #{encoder_layer.5} parent=31 // pred_fallthru
          _
      $region32: #{encoder_layer.5} parent=5 // pred_fallthru
        _
      %p1931 = scmp.le.s32.totalorder 2, %s18
      // Predicated region
      $region57: #{encoder_layer.5} parent=5 // pred_check
        %p1932 = pneg %p1931
      $region58: #{encoder_layer.5} parent=5 // pred_check_branch
        %1934 = sbr.rel (%p1932) target = $region60
      $region59: #{encoder_layer.5} parent=5 // pred_region
        %s1935 = ssub.s32 %s18, 2
        // Predicated region
        $region61: #{encoder_layer.5} parent=59 // pred_check
          %p1936 = pneg %p152
        $region62: #{encoder_layer.5} parent=59 // pred_check_branch
          %1938 = sbr.rel (%p1936) target = $region64
        $region63: #{encoder_layer.5} parent=59 // pred_region
          %s1939 = sand.u32 %s137, 1
          %s1940 = scalar_lea.sflag [#allocation7], %s1939
          %s1941 = sand.u32 %s137, 1
          %s1942 = smul.addr %s1941, 64
          %s1943 = scalar_lea.vmem [#allocation11], %s1942
          %1944 = dma.done %s1940, 1024
        $region64: #{encoder_layer.5} parent=59 // pred_fallthru
          _
      $region60: #{encoder_layer.5} parent=5 // pred_fallthru
        _
    $region6: #{encoder_layer.5} parent=1 // loop_footer
      %s22 = sadd.s32 1, %s18
    $region7: #{encoder_layer.5} parent=1 // loop_footer_branch
      %17 = sbr.rel target = $region3
    $region8: #{encoder_layer.5} parent=1 // loop_exit
      _
    %1945 = vsyncpa [#allocation6], 1
    %s1946 = scalar_lea.sflag [#allocation6], 1
    %1947 = vsyncpa %s1946, 1
    %1948 = vsyncpa [#allocation9], 1
    %s1949 = scalar_lea.sflag [#allocation9], 1
    %1950 = vsyncpa %s1949, 1
    %1951 = vsyncpa [#allocation7], 1
    %s1952 = scalar_lea.sflag [#allocation7], 1
    %1953 = vsyncpa %s1952, 1

// kernel: encoder_layer.7
$region0: #{encoder_layer.7}
  #allocation0 [shape = 'u32[]', space=smem, size = 0x4, offset = 0x4, fixed_abs, tag = 'smem constant byte address 0x4 - core index']
  #allocation1 [shape = 'u32[144,128]{1,0:T(1,128)}', space=vmem, size = 0x12000, scoped, tag = 'internal scratch']
  #allocation2 [shape = 'f32[16,32]{1,0:T(8,128)}', space=vmem, size = 0x2000, scoped, tag = 'scratch operand']
  %s0 = inlined_call_operand.hbm [shape: f32[32,32], index: 0, kind: input, shape index: {}]
  %s1 = inlined_call_operand.hbm [shape: f32[32,256], index: 1, kind: input, shape index: {}]
  %s2 = inlined_call_operand.hbm [shape: f32[1,256], index: 2, kind: input, shape index: {}]
  %s3 = inlined_call_operand.hbm [shape: f32[256,32], index: 3, kind: input, shape index: {}]
  %s4 = inlined_call_operand.hbm [shape: f32[1,32], index: 4, kind: input, shape index: {}]
  %s5 = inlined_call_operand.hbm [shape: f32[1,32], index: 5, kind: input, shape index: {}]
  %s6 = inlined_call_operand.hbm [shape: f32[1,32], index: 6, kind: input, shape index: {}]
  %s7 = inlined_call_operand.hbm [shape: f32[32,32], index: 7, kind: output, shape index: {}]
  %s8 = sld [smem:[#allocation0]]
  $region97: #{encoder_layer.7} parent=0
    _
  %s10 = ssub.s32 1, %s8
  %s11 = scalar_select 0, %s10, %s8
  $region1: #{encoder_layer.7} parent=0
    #allocation3 [shape = 'u8[16384]{0}', space=vmem, size = 0x4000, scoped, tag = 'input window, operand 0']
    #allocation4 [shape = 's32[2]{0}', space=sflag, size = 0x8, scoped, tag = 'scoped memory for encoder_layer.7']
    #allocation5 [shape = 's32[2]{0}', space=sflag, size = 0x8, scoped, tag = 'scoped memory for encoder_layer.7']
    #allocation6 [shape = 'u8[32768]{0}', space=vmem, size = 0x8000, scoped, tag = 'input window, operand 1']
    #allocation7 [shape = 's32[2]{0}', space=sflag, size = 0x8, scoped, tag = 'scoped memory for encoder_layer.7']
    #allocation8 [shape = 'u8[1024]{0}', space=vmem, size = 0x400, scoped, tag = 'input window, operand 2']
    #allocation9 [shape = 'u8[131072]{0}', space=vmem, size = 0x20000, scoped, tag = 'input window, operand 3']
    #allocation10 [shape = 's32[2]{0}', space=sflag, size = 0x8, scoped, tag = 'scoped memory for encoder_layer.7']
    #allocation11 [shape = 'u8[512]{0}', space=vmem, size = 0x400, scoped, tag = 'input window, operand 4, single buffered']
    #allocation12 [shape = 'u8[512]{0}', space=vmem, size = 0x400, scoped, tag = 'input window, operand 5, single buffered']
    #allocation13 [shape = 's32[1]{0}', space=sflag, size = 0x4, scoped, tag = 'scoped memory for encoder_layer.7']
    #allocation14 [shape = 'u8[512]{0}', space=vmem, size = 0x400, scoped, tag = 'input window, operand 6, single buffered']
    #allocation15 [shape = 'u8[16384]{0}', space=vmem, size = 0x4000, scoped, tag = 'output window, operand 0']
    %12 = vsyncpa [#allocation4], 0
    %s13 = scalar_lea.sflag [#allocation4], 1
    %14 = vsyncpa %s13, 0
    %15 = vsyncpa [#allocation7], 0
    %s16 = scalar_lea.sflag [#allocation7], 1
    %17 = vsyncpa %s16, 0
    %18 = vsyncpa [#allocation10], 0
    %s19 = scalar_lea.sflag [#allocation10], 1
    %20 = vsyncpa %s19, 0
    %21 = vsyncpa [#allocation13], 0
    %22 = vsyncpa [#allocation5], 0
    %s23 = scalar_lea.sflag [#allocation5], 1
    %24 = vsyncpa %s23, 0
    loop: start=0, step=1, limit=6
    $region2: #{encoder_layer.7} parent=1 // loop_pre_header
      _
    $region3: #{encoder_layer.7} parent=1 // loop_header
      %s26 = sphi 0, %s30
      %p27 = scmp.ge.s32.totalorder %s26, 6
      %s33 = sphi 0, %s45
      %s34 = sphi 0, %s41
      %s35 = sphi 0, %s33
      %s36 = sphi 0, %s34
      %s37 = sphi 0, %s35
      %s38 = sphi 0, %s36
      %s48 = sphi 0, %s50
      %s51 = sphi 0, %s48
      %s52 = sphi 0, %s51
      %s68 = sphi 0, %s52
      %s74 = sphi 0, %s76
      %s77 = sphi 0, %s74
      %s78 = sphi 0, %s77
      %s94 = sphi 0, %s78
      %s100 = sphi 0, %s102
      %s103 = sphi 0, %s100
      %s104 = sphi 0, %s103
      %s120 = sphi 0, %s104
      %s126 = sphi 0, %s128
      %s129 = sphi 0, %s126
      %s130 = sphi 0, %s129
      %s146 = sphi 0, %s130
      %s150 = sphi 0, %s150
      %s152 = sphi 0, %s150
      %s153 = sphi 0, %s152
      %s167 = sphi 0, %s153
      %s171 = sphi 0, %s171
      %s173 = sphi 0, %s171
      %s174 = sphi 0, %s173
      %s188 = sphi 0, %s174
      %s192 = sphi 0, %s192
      %s194 = sphi 0, %s192
      %s195 = sphi 0, %s194
      %s209 = sphi 0, %s195
      %s215 = sphi 0, %s217
      %s218 = sphi 0, %s215
      %s219 = sphi 0, %s218
      %s235 = sphi 0, %s219
    $region4: #{encoder_layer.7} parent=1 // loop_header_branch
      %29 = sbr.rel (%p27) target = $region8
    $region5: #{encoder_layer.7} parent=1 // loop_body
      %s31 = ssub.s32 %s26, 1
      %s32 = ssub.s32 %s26, 2
      %s39 = sadd.s32 1, %s34
      %p40 = scmp.ge.s32.totalorder %s39, 2
      %s41 = scalar_select %p40, 0, %s39
      %s42 = sadd.s32 1, %s33
      %s43 = scalar_select %p40, %s42, %s33
      %p44 = scmp.ge.s32.totalorder %s43, 2
      %s45 = scalar_select %p44, 0, %s43
      %s46 = ssub.s32 %s33, %s45
      %p47 = scmp.eq.s32.totalorder %s46, 0
      %s49 = sadd.s32 %s48, 1
      %s50 = scalar_select %p47, %s48, %s49
      %p53 = pneg %p47
      %p54 = scmp.eq.s32.totalorder %s26, 3
      %p55 = por %p53, %p54
      %p56 = scmp.ne.s32.totalorder %s48, %s51
      %p57 = scmp.eq.s32.totalorder %s26, 0
      %p58 = por %p56, %p57
      %p59 = scmp.ne.s32.totalorder %s48, %s51
      %p60 = scmp.eq.s32.totalorder %s31, 3
      %p61 = por %p59, %p60
      %p62 = scmp.ne.s32.totalorder %s51, %s52
      %p63 = scmp.eq.s32.totalorder %s31, 0
      %p64 = por %p62, %p63
      %p65 = scmp.ne.s32.totalorder %s51, %s52
      %p66 = scmp.eq.s32.totalorder %s32, 3
      %p67 = por %p65, %p66
      %p69 = scmp.ne.s32.totalorder %s52, %s68
      %p70 = scmp.eq.s32.totalorder %s32, 0
      %p71 = por %p69, %p70
      %s72 = ssub.s32 %s34, %s41
      %p73 = scmp.eq.s32.totalorder %s72, 0
      %s75 = sadd.s32 %s74, 1
      %s76 = scalar_select %p73, %s74, %s75
      %p79 = pneg %p73
      %p80 = scmp.eq.s32.totalorder %s26, 3
      %p81 = por %p79, %p80
      %p82 = scmp.ne.s32.totalorder %s74, %s77
      %p83 = scmp.eq.s32.totalorder %s26, 0
      %p84 = por %p82, %p83
      %p85 = scmp.ne.s32.totalorder %s74, %s77
      %p86 = scmp.eq.s32.totalorder %s31, 3
      %p87 = por %p85, %p86
      %p88 = scmp.ne.s32.totalorder %s77, %s78
      %p89 = scmp.eq.s32.totalorder %s31, 0
      %p90 = por %p88, %p89
      %p91 = scmp.ne.s32.totalorder %s77, %s78
      %p92 = scmp.eq.s32.totalorder %s32, 3
      %p93 = por %p91, %p92
      %p95 = scmp.ne.s32.totalorder %s78, %s94
      %p96 = scmp.eq.s32.totalorder %s32, 0
      %p97 = por %p95, %p96
      %s98 = ssub.s32 %s34, %s41
      %p99 = scmp.eq.s32.totalorder %s98, 0
      %s101 = sadd.s32 %s100, 1
      %s102 = scalar_select %p99, %s100, %s101
      %p105 = pneg %p99
      %p106 = scmp.eq.s32.totalorder %s26, 3
      %p107 = por %p105, %p106
      %p108 = scmp.ne.s32.totalorder %s100, %s103
      %p109 = scmp.eq.s32.totalorder %s26, 0
      %p110 = por %p108, %p109
      %p111 = scmp.ne.s32.totalorder %s100, %s103
      %p112 = scmp.eq.s32.totalorder %s31, 3
      %p113 = por %p111, %p112
      %p114 = scmp.ne.s32.totalorder %s103, %s104
      %p115 = scmp.eq.s32.totalorder %s31, 0
      %p116 = por %p114, %p115
      %p117 = scmp.ne.s32.totalorder %s103, %s104
      %p118 = scmp.eq.s32.totalorder %s32, 3
      %p119 = por %p117, %p118
      %p121 = scmp.ne.s32.totalorder %s104, %s120
      %p122 = scmp.eq.s32.totalorder %s32, 0
      %p123 = por %p121, %p122
      %s124 = ssub.s32 %s34, %s41
      %p125 = scmp.eq.s32.totalorder %s124, 0
      %s127 = sadd.s32 %s126, 1
      %s128 = scalar_select %p125, %s126, %s127
      %p131 = pneg %p125
      %p132 = scmp.eq.s32.totalorder %s26, 3
      %p133 = por %p131, %p132
      %p134 = scmp.ne.s32.totalorder %s126, %s129
      %p135 = scmp.eq.s32.totalorder %s26, 0
      %p136 = por %p134, %p135
      %p137 = scmp.ne.s32.totalorder %s126, %s129
      %p138 = scmp.eq.s32.totalorder %s31, 3
      %p139 = por %p137, %p138
      %p140 = scmp.ne.s32.totalorder %s129, %s130
      %p141 = scmp.eq.s32.totalorder %s31, 0
      %p142 = por %p140, %p141
      %p143 = scmp.ne.s32.totalorder %s129, %s130
      %p144 = scmp.eq.s32.totalorder %s32, 3
      %p145 = por %p143, %p144
      %p147 = scmp.ne.s32.totalorder %s130, %s146
      %p148 = scmp.eq.s32.totalorder %s32, 0
      %p149 = por %p147, %p148
      %s151 = sadd.s32 %s150, 1
      %p154 = scmp.eq.s32.totalorder %s26, 3
      %p155 = scmp.ne.s32.totalorder %s150, %s152
      %p156 = scmp.eq.s32.totalorder %s26, 0
      %p157 = por %p155, %p156
      %p158 = scmp.ne.s32.totalorder %s150, %s152
      %p159 = scmp.eq.s32.totalorder %s31, 3
      %p160 = por %p158, %p159
      %p161 = scmp.ne.s32.totalorder %s152, %s153
      %p162 = scmp.eq.s32.totalorder %s31, 0
      %p163 = por %p161, %p162
      %p164 = scmp.ne.s32.totalorder %s152, %s153
      %p165 = scmp.eq.s32.totalorder %s32, 3
      %p166 = por %p164, %p165
      %p168 = scmp.ne.s32.totalorder %s153, %s167
      %p169 = scmp.eq.s32.totalorder %s32, 0
      %p170 = por %p168, %p169
      %s172 = sadd.s32 %s171, 1
      %p175 = scmp.eq.s32.totalorder %s26, 3
      %p176 = scmp.ne.s32.totalorder %s171, %s173
      %p177 = scmp.eq.s32.totalorder %s26, 0
      %p178 = por %p176, %p177
      %p179 = scmp.ne.s32.totalorder %s171, %s173
      %p180 = scmp.eq.s32.totalorder %s31, 3
      %p181 = por %p179, %p180
      %p182 = scmp.ne.s32.totalorder %s173, %s174
      %p183 = scmp.eq.s32.totalorder %s31, 0
      %p184 = por %p182, %p183
      %p185 = scmp.ne.s32.totalorder %s173, %s174
      %p186 = scmp.eq.s32.totalorder %s32, 3
      %p187 = por %p185, %p186
      %p189 = scmp.ne.s32.totalorder %s174, %s188
      %p190 = scmp.eq.s32.totalorder %s32, 0
      %p191 = por %p189, %p190
      %s193 = sadd.s32 %s192, 1
      %p196 = scmp.eq.s32.totalorder %s26, 3
      %p197 = scmp.ne.s32.totalorder %s192, %s194
      %p198 = scmp.eq.s32.totalorder %s26, 0
      %p199 = por %p197, %p198
      %p200 = scmp.ne.s32.totalorder %s192, %s194
      %p201 = scmp.eq.s32.totalorder %s31, 3
      %p202 = por %p200, %p201
      %p203 = scmp.ne.s32.totalorder %s194, %s195
      %p204 = scmp.eq.s32.totalorder %s31, 0
      %p205 = por %p203, %p204
      %p206 = scmp.ne.s32.totalorder %s194, %s195
      %p207 = scmp.eq.s32.totalorder %s32, 3
      %p208 = por %p206, %p207
      %p210 = scmp.ne.s32.totalorder %s195, %s209
      %p211 = scmp.eq.s32.totalorder %s32, 0
      %p212 = por %p210, %p211
      %s213 = ssub.s32 %s33, %s45
      %p214 = scmp.eq.s32.totalorder %s213, 0
      %s216 = sadd.s32 %s215, 1
      %s217 = scalar_select %p214, %s215, %s216
      %p220 = pneg %p214
      %p221 = scmp.eq.s32.totalorder %s26, 3
      %p222 = por %p220, %p221
      %p223 = scmp.ne.s32.totalorder %s215, %s218
      %p224 = scmp.eq.s32.totalorder %s26, 0
      %p225 = por %p223, %p224
      %p226 = scmp.ne.s32.totalorder %s215, %s218
      %p227 = scmp.eq.s32.totalorder %s31, 3
      %p228 = por %p226, %p227
      %p229 = scmp.ne.s32.totalorder %s218, %s219
      %p230 = scmp.eq.s32.totalorder %s31, 0
      %p231 = por %p229, %p230
      %p232 = scmp.ne.s32.totalorder %s218, %s219
      %p233 = scmp.eq.s32.totalorder %s32, 3
      %p234 = por %p232, %p233
      %p236 = scmp.ne.s32.totalorder %s219, %s235
      %p237 = scmp.eq.s32.totalorder %s32, 0
      %p238 = por %p236, %p237
      %p239 = scmp.le.s32.totalorder 1, %s26
      %p240 = scmp.lt.s32.totalorder %s26, 5
      %p241 = pnand %p239, %p240
      %p242 = pneg %p241
      // Predicated region
      $region9: #{encoder_layer.7} parent=5 // pred_check
        _
      $region10: #{encoder_layer.7} parent=5 // pred_check_branch
        %244 = sbr.rel (%p241) target = $region12
      $region11: #{encoder_layer.7} parent=5 // pred_region
        %s245 = ssub.s32 %s26, 1
        // Predicated region
        $region13: #{encoder_layer.7} parent=11 // pred_check
          %p246 = pneg %p163
        $region14: #{encoder_layer.7} parent=11 // pred_check_branch
          %248 = sbr.rel (%p246) target = $region16
        $region15: #{encoder_layer.7} parent=11 // pred_region
          %s250 = ssub.s32 16, 16
          %251 = vsyncadd [#allocation10], %s250
          %s253 = sshll.u32 [#allocation11], 4
          %s254 = int_to_ptr.vmem [resolvable:$true] %s253
          %256 = dma.hbm_to_vmem [thread:$0]  %s4, 16, %s254, [#allocation10]
        $region16: #{encoder_layer.7} parent=11 // pred_fallthru
          _
        // Predicated region
        $region17: #{encoder_layer.7} parent=11 // pred_check
          %p257 = pneg %p184
        $region18: #{encoder_layer.7} parent=11 // pred_check_branch
          %259 = sbr.rel (%p257) target = $region20
        $region19: #{encoder_layer.7} parent=11 // pred_region
          %s261 = ssub.s32 16, 16
          %262 = vsyncadd [#allocation13], %s261
          %s264 = sshll.u32 [#allocation12], 4
          %s265 = int_to_ptr.vmem [resolvable:$true] %s264
          %267 = dma.hbm_to_vmem [thread:$0]  %s5, 16, %s265, [#allocation13]
        $region20: #{encoder_layer.7} parent=11 // pred_fallthru
          _
        // Predicated region
        $region21: #{encoder_layer.7} parent=11 // pred_check
          %p268 = pneg %p205
        $region22: #{encoder_layer.7} parent=11 // pred_check_branch
          %270 = sbr.rel (%p268) target = $region24
        $region23: #{encoder_layer.7} parent=11 // pred_region
          %s272 = ssub.s32 16, 16
          %273 = vsyncadd [#allocation13], %s272
          %s275 = sshll.u32 [#allocation14], 4
          %s276 = int_to_ptr.vmem [resolvable:$true] %s275
          %278 = dma.hbm_to_vmem [thread:$0]  %s6, 16, %s276, [#allocation13]
        $region24: #{encoder_layer.7} parent=11 // pred_fallthru
          _
      $region12: #{encoder_layer.7} parent=5 // pred_fallthru
        _
      %p279 = scmp.lt.s32.totalorder %s26, 4
      // Predicated region
      $region25: #{encoder_layer.7} parent=5 // pred_check
        %p280 = pneg %p279
      $region26: #{encoder_layer.7} parent=5 // pred_check_branch
        %282 = sbr.rel (%p280) target = $region28
      $region27: #{encoder_layer.7} parent=5 // pred_region
        // Predicated region
        $region29: #{encoder_layer.7} parent=27 // pred_check
          %p283 = pneg %p58
        $region30: #{encoder_layer.7} parent=27 // pred_check_branch
          %285 = sbr.rel (%p283) target = $region32
        $region31: #{encoder_layer.7} parent=27 // pred_region
          %s286 = sand.u32 %s48, 1
          %s287 = scalar_lea.sflag [#allocation4], %s286
          %s288 = sand.u32 %s48, 1
          %s289 = smul.addr %s288, 16
          %s290 = scalar_lea.vmem [#allocation3], %s289
          %s291 = smul.u32 2, %s33
          %s293 = ssub.s32 256, 256
          %294 = vsyncadd %s287, %s293
          %s295 = smul.addr %s291, 128
          %s296 = scalar_lea.hbm %s0, %s295
          %s297 = sshll.u32 %s290, 4
          %s298 = int_to_ptr.vmem [resolvable:$true] %s297
          %303 = dma.hbm_to_vmem [thread:$0]  %s296, 256, %s298, %s287, 128, 128, 8
        $region32: #{encoder_layer.7} parent=27 // pred_fallthru
          _
        // Predicated region
        $region33: #{encoder_layer.7} parent=27 // pred_check
          %p304 = pneg %p84
        $region34: #{encoder_layer.7} parent=27 // pred_check_branch
          %306 = sbr.rel (%p304) target = $region36
        $region35: #{encoder_layer.7} parent=27 // pred_region
          %s307 = sand.u32 %s26, 1
          %s308 = scalar_lea.sflag [#allocation7], %s307
          %s309 = sand.u32 %s74, 1
          %s310 = smul.addr %s309, 32
          %s311 = scalar_lea.vmem [#allocation6], %s310
          %s313 = ssub.s32 512, 512
          %314 = vsyncadd %s308, %s313
          %s315 = smul.addr %s34, 128
          %s316 = scalar_lea.hbm %s1, %s315
          %s317 = sshll.u32 %s311, 4
          %s318 = int_to_ptr.vmem [resolvable:$true] %s317
          %323 = dma.hbm_to_vmem [thread:$0]  %s316, 512, %s318, %s308, 256, 128, 8
        $region36: #{encoder_layer.7} parent=27 // pred_fallthru
          _
        // Predicated region
        $region37: #{encoder_layer.7} parent=27 // pred_check
          %p324 = pneg %p110
        $region38: #{encoder_layer.7} parent=27 // pred_check_branch
          %326 = sbr.rel (%p324) target = $region40
        $region39: #{encoder_layer.7} parent=27 // pred_region
          %s327 = sand.u32 %s26, 1
          %s328 = scalar_lea.sflag [#allocation7], %s327
          %s329 = sand.u32 %s100, 1
          %s330 = scalar_lea.vmem [#allocation8], %s329
          %s332 = ssub.s32 16, 16
          %333 = vsyncadd %s328, %s332
          %s334 = smul.addr %s34, 16
          %s335 = scalar_lea.hbm %s2, %s334
          %s337 = sshll.u32 %s330, 4
          %s338 = int_to_ptr.vmem [resolvable:$true] %s337
          %340 = dma.hbm_to_vmem [thread:$0]  %s335, 16, %s338, %s328
        $region40: #{encoder_layer.7} parent=27 // pred_fallthru
          _
        // Predicated region
        $region41: #{encoder_layer.7} parent=27 // pred_check
          %p341 = pneg %p136
        $region42: #{encoder_layer.7} parent=27 // pred_check_branch
          %343 = sbr.rel (%p341) target = $region44
        $region43: #{encoder_layer.7} parent=27 // pred_region
          %s344 = sand.u32 %s26, 1
          %s345 = scalar_lea.sflag [#allocation10], %s344
          %s346 = sand.u32 %s126, 1
          %s347 = smul.addr %s346, 128
          %s348 = scalar_lea.vmem [#allocation9], %s347
          %s349 = smul.u32 16, %s34
          %s351 = ssub.s32 2048, 2048
          %352 = vsyncadd %s345, %s351
          %s353 = smul.addr %s349, 128
          %s354 = scalar_lea.hbm %s3, %s353
          %s355 = sshll.u32 %s348, 4
          %s356 = int_to_ptr.vmem [resolvable:$true] %s355
          %361 = dma.hbm_to_vmem [thread:$0]  %s354, 2048, %s356, %s345, 128, 128, 8
        $region44: #{encoder_layer.7} parent=27 // pred_fallthru
          _
      $region28: #{encoder_layer.7} parent=5 // pred_fallthru
        _
      %p362 = scmp.le.s32.totalorder 1, %s26
      %p363 = scmp.lt.s32.totalorder %s26, 5
      %p364 = pnand %p362, %p363
      %p365 = pneg %p364
      // Predicated region
      $region45: #{encoder_layer.7} parent=5 // pred_check
        _
      $region46: #{encoder_layer.7} parent=5 // pred_check_branch
        %367 = sbr.rel (%p364) target = $region48
      $region47: #{encoder_layer.7} parent=5 // pred_region
        %s368 = ssub.s32 %s26, 1
        %s369 = sand.u32 %s51, 1
        %s370 = scalar_lea.sflag [#allocation4], %s369
        %s371 = sand.u32 %s51, 1
        %s372 = smul.addr %s371, 16
        %s373 = scalar_lea.vmem [#allocation3], %s372
        // Predicated region
        $region49: #{encoder_layer.7} parent=47 // pred_check
          %p374 = pneg %p64
        $region50: #{encoder_layer.7} parent=47 // pred_check_branch
          %376 = sbr.rel (%p374) target = $region52
        $region51: #{encoder_layer.7} parent=47 // pred_region
          %377 = dma.done %s370, 256
        $region52: #{encoder_layer.7} parent=47 // pred_fallthru
          _
        %s378 = sand.u32 %s31, 1
        %s379 = scalar_lea.sflag [#allocation7], %s378
        %s380 = sand.u32 %s77, 1
        %s381 = smul.addr %s380, 32
        %s382 = scalar_lea.vmem [#allocation6], %s381
        // Predicated region
        $region53: #{encoder_layer.7} parent=47 // pred_check
          %p383 = pneg %p90
        $region54: #{encoder_layer.7} parent=47 // pred_check_branch
          %385 = sbr.rel (%p383) target = $region56
        $region55: #{encoder_layer.7} parent=47 // pred_region
          %386 = dma.done %s379, 512
        $region56: #{encoder_layer.7} parent=47 // pred_fallthru
          _
        %s387 = sand.u32 %s31, 1
        %s388 = scalar_lea.sflag [#allocation7], %s387
        %s389 = sand.u32 %s103, 1
        %s390 = scalar_lea.vmem [#allocation8], %s389
        // Predicated region
        $region57: #{encoder_layer.7} parent=47 // pred_check
          %p391 = pneg %p116
        $region58: #{encoder_layer.7} parent=47 // pred_check_branch
          %393 = sbr.rel (%p391) target = $region60
        $region59: #{encoder_layer.7} parent=47 // pred_region
          %394 = dma.done %s388, 16
        $region60: #{encoder_layer.7} parent=47 // pred_fallthru
          _
        %s395 = sand.u32 %s31, 1
        %s396 = scalar_lea.sflag [#allocation10], %s395
        %s397 = sand.u32 %s129, 1
        %s398 = smul.addr %s397, 128
        %s399 = scalar_lea.vmem [#allocation9], %s398
        // Predicated region
        $region61: #{encoder_layer.7} parent=47 // pred_check
          %p400 = pneg %p142
        $region62: #{encoder_layer.7} parent=47 // pred_check_branch
          %402 = sbr.rel (%p400) target = $region64
        $region63: #{encoder_layer.7} parent=47 // pred_region
          %403 = dma.done %s396, 2048
        $region64: #{encoder_layer.7} parent=47 // pred_fallthru
          _
        // Predicated region
        $region65: #{encoder_layer.7} parent=47 // pred_check
          %p404 = pneg %p163
        $region66: #{encoder_layer.7} parent=47 // pred_check_branch
          %406 = sbr.rel (%p404) target = $region68
        $region67: #{encoder_layer.7} parent=47 // pred_region
          %407 = dma.done [#allocation10], 16
        $region68: #{encoder_layer.7} parent=47 // pred_fallthru
          _
        // Predicated region
        $region69: #{encoder_layer.7} parent=47 // pred_check
          %p408 = pneg %p184
        $region70: #{encoder_layer.7} parent=47 // pred_check_branch
          %410 = sbr.rel (%p408) target = $region72
        $region71: #{encoder_layer.7} parent=47 // pred_region
          %411 = dma.done [#allocation13], 16
        $region72: #{encoder_layer.7} parent=47 // pred_fallthru
          _
        // Predicated region
        $region73: #{encoder_layer.7} parent=47 // pred_check
          %p412 = pneg %p205
        $region74: #{encoder_layer.7} parent=47 // pred_check_branch
          %414 = sbr.rel (%p412) target = $region76
        $region75: #{encoder_layer.7} parent=47 // pred_region
          %415 = dma.done [#allocation13], 16
        $region76: #{encoder_layer.7} parent=47 // pred_fallthru
          _
        %s416 = sand.u32 %s51, 1
        %s417 = scalar_lea.sflag [#allocation4], %s416
        %s418 = sand.u32 %s51, 1
        %s419 = smul.addr %s418, 16
        %s420 = scalar_lea.vmem [#allocation3], %s419
        %p421 = pneg %p64
        %p422 = pneg %p61
        %s423 = sand.u32 %s31, 1
        %s424 = scalar_lea.sflag [#allocation7], %s423
        %s425 = sand.u32 %s77, 1
        %s426 = smul.addr %s425, 32
        %s427 = scalar_lea.vmem [#allocation6], %s426
        %p428 = pneg %p90
        %p429 = pneg %p87
        %s430 = sand.u32 %s31, 1
        %s431 = scalar_lea.sflag [#allocation7], %s430
        %s432 = sand.u32 %s103, 1
        %s433 = scalar_lea.vmem [#allocation8], %s432
        %p434 = pneg %p116
        %p435 = pneg %p113
        %s436 = sand.u32 %s31, 1
        %s437 = scalar_lea.sflag [#allocation10], %s436
        %s438 = sand.u32 %s129, 1
        %s439 = smul.addr %s438, 128
        %s440 = scalar_lea.vmem [#allocation9], %s439
        %p441 = pneg %p142
        %p442 = pneg %p139
        %p443 = pneg %p163
        %p444 = pneg %p160
        %p445 = pneg %p184
        %p446 = pneg %p181
        %p447 = pneg %p205
        %p448 = pneg %p202
        %p449 = pneg %p231
        %p450 = pneg %p228
        %s451 = sand.u32 %s218, 1
        %s452 = scalar_lea.sflag [#allocation5], %s451
        %s453 = sand.u32 %s218, 1
        %s454 = smul.addr %s453, 16
        %s455 = scalar_lea.vmem [#allocation15], %s454
        %s456 = smul.u32 2, %s35
        %s457 = smul.u32 16, %s36
        %s458 = smul.u32 2, %s35
        %p459 = scmp.eq.s32.totalorder %s36, 0
        // Predicated region
        $region77: #{encoder_layer.7} parent=47 // pred_check
          %p460 = pneg %p459
        $region78: #{encoder_layer.7} parent=47 // pred_check_branch
          %462 = sbr.rel (%p460) target = $region80
        $region79: #{encoder_layer.7} parent=47 // pred_region
          %vm463 = vcmask 261120
          %464 = vst.msk [vmem:[#allocation2] sm:$0xff] %vm463, 0.0
          %465 = vst.msk [vmem:[#allocation2 + $0x8] sm:$0xff] %vm463, 0.0
        $region80: #{encoder_layer.7} parent=47 // pred_fallthru
          _
        %v466 = vld [vmem:[%s373] sm:$0xff]
        %v467 = vld [vmem:[%s373 + $0x8] sm:$0xff]
        %v468 = vld [vmem:[%s382] sm:$0xff]
        %v469 = vld [vmem:[%s382 + $0x8] sm:$0xff]
        %v470 = vld [vmem:[%s382 + $0x10] sm:$0xff]
        %v471 = vld [vmem:[%s382 + $0x18] sm:$0xff]
        %v472 = vld [vmem:[%s390] sm:$0x1]
        %v474 = vlaneseq
        %v475 = vshrl.u32 %v474, 7
        %v476 = vsub.s32 0, %v475
        %v477 = vrot.slane %v472, %v476
        %vm479 = vcmask 261120
        %v481 = vsel %vm479, %v466, 0
        %v484 = vsel %vm479, %v467, 0
        %486 = vmatprep.subr.mxu0 0.0
        %487 = vmatpush1.msra.mxu0 %v468
        %488 = vmatprep.subr.mxu0 0.0
        %489 = vmatpush1.msra.mxu0 %v469
        %490 = vmatprep.subr.mxu0 0.0
        %491 = vmatpush1.msra.mxu0 %v470
        %492 = vmatprep.subr.mxu0 0.0
        %493 = vmatpush1.msra.mxu0 %v471
        %494 = vmatprep.subr.mxu0 0.0
        %495 = vmatpush1.msra.mxu0 0.0
        %496 = vmatprep.subr.mxu0 0.0
        %497 = vmatpush1.msra.mxu0 0.0
        %498 = vmatprep.subr.mxu0 0.0
        %499 = vmatpush1.msra.mxu0 0.0
        %500 = vmatprep.subr.mxu0 0.0
        %501 = vmatpush1.msra.mxu0 0.0
        %502 = vmatprep.subr.mxu0 0.0
        %503 = vmatpush1.msra.mxu0 0.0
        %504 = vmatprep.subr.mxu0 0.0
        %505 = vmatpush1.msra.mxu0 0.0
        %506 = vmatprep.subr.mxu0 0.0
        %507 = vmatpush1.msra.mxu0 0.0
        %508 = vmatprep.subr.mxu0 0.0
        %509 = vmatpush1.msra.mxu0 0.0
        %510 = vmatprep.subr.mxu0 0.0
        %511 = vmatpush1.msra.mxu0 0.0
        %512 = vmatprep.subr.mxu0 0.0
        %513 = vmatpush1.msra.mxu0 0.0
        %514 = vmatprep.subr.mxu0 0.0
        %515 = vmatpush1.msra.mxu0 0.0
        %516 = vmatprep.subr.mxu0 0.0
        %517 = vmatpush1.msra.mxu0 0.0
        %518 = vmatprep.subr.mxu0 0.0
        %519 = vmatpush1.msra.mxu0 0.0
        %520 = vmatprep.subr.mxu0 0.0
        %521 = vmatpush1.msra.mxu0 0.0
        %522 = vmatprep.subr.mxu0 0.0
        %523 = vmatpush1.msra.mxu0 0.0
        %524 = vmatprep.subr.mxu0 0.0
        %525 = vmatpush1.msra.mxu0 0.0
        %526 = vmatprep.subr.mxu0 0.0
        %527 = vmatpush1.msra.mxu0 0.0
        %528 = vmatprep.subr.mxu0 0.0
        %529 = vmatpush1.msra.mxu0 0.0
        %530 = vmatprep.subr.mxu0 0.0
        %531 = vmatpush1.msra.mxu0 0.0
        %532 = vmatprep.subr.mxu0 0.0
        %533 = vmatpush1.msra.mxu0 0.0
        %534 = vmatprep.subr.mxu0 0.0
        %535 = vmatpush1.msra.mxu0 0.0
        %536 = vmatprep.subr.mxu0 0.0
        %537 = vmatpush1.msra.mxu0 0.0
        %538 = vmatprep.subr.mxu0 0.0
        %539 = vmatpush1.msra.mxu0 0.0
        %540 = vmatprep.subr.mxu0 0.0
        %541 = vmatpush1.msra.mxu0 0.0
        %542 = vmatprep.subr.mxu0 0.0
        %543 = vmatpush1.msra.mxu0 0.0
        %544 = vmatprep.subr.mxu0 0.0
        %545 = vmatpush1.msra.mxu0 0.0
        %546 = vmatprep.subr.mxu0 0.0
        %547 = vmatpush1.msra.mxu0 0.0
        %548 = vmatprep.subr.mxu0 0.0
        %549 = vmatpush1.msra.mxu0 0.0
        %550 = vmatprep.mubr.f32.mxu0 0.0
        %551 = vmatmul.mubr.f32.gmra.mrb[0].mxu0 %v481
        %v552 = vpop.f32.mrb[0].mxu0
        %v553 = vadd.f32 %v477, %v552
        %v554 = vpop.f32.mrb[0].mxu0
        %555 = vmatprep.mubr.f32.mxu0 0.0
        %556 = vmatmul.mubr.f32.gmra.mrb[0].mxu0 %v484
        %v557 = vpop.f32.mrb[0].mxu0
        %v558 = vadd.f32 %v477, %v557
        %v559 = vpop.f32.mrb[0].mxu0
        %560 = vdwg.mxu0
        %v561 = vmax.f32 %v553, 0.0
        %v562 = vmax.f32 %v558, 0.0
        %v563 = vld [vmem:[#allocation2] sm:$0xff]
        %v564 = vld [vmem:[#allocation2 + $0x8] sm:$0xff]
        %v565 = vld [vmem:[%s399] sm:$0xff]
        %v566 = vld [vmem:[%s399 + $0x8] sm:$0xff]
        %v567 = vld [vmem:[%s399 + $0x10] sm:$0xff]
        %v568 = vld [vmem:[%s399 + $0x18] sm:$0xff]
        %v569 = vld [vmem:[%s399 + $0x20] sm:$0xff]
        %v570 = vld [vmem:[%s399 + $0x28] sm:$0xff]
        %v571 = vld [vmem:[%s399 + $0x30] sm:$0xff]
        %v572 = vld [vmem:[%s399 + $0x38] sm:$0xff]
        %v573 = vld [vmem:[%s399 + $0x40] sm:$0xff]
        %v574 = vld [vmem:[%s399 + $0x48] sm:$0xff]
        %v575 = vld [vmem:[%s399 + $0x50] sm:$0xff]
        %v576 = vld [vmem:[%s399 + $0x58] sm:$0xff]
        %v577 = vld [vmem:[%s399 + $0x60] sm:$0xff]
        %v578 = vld [vmem:[%s399 + $0x68] sm:$0xff]
        %v579 = vld [vmem:[%s399 + $0x70] sm:$0xff]
        %v580 = vld [vmem:[%s399 + $0x78] sm:$0xff]
        %581 = vmatprep.subr.mxu0 0.0
        %582 = vmatpush1.msra.mxu0 %v565
        %583 = vmatprep.subr.mxu0 0.0
        %584 = vmatpush1.msra.mxu0 %v566
        %585 = vmatprep.subr.mxu0 0.0
        %586 = vmatpush1.msra.mxu0 %v567
        %587 = vmatprep.subr.mxu0 0.0
        %588 = vmatpush1.msra.mxu0 %v568
        %589 = vmatprep.subr.mxu0 0.0
        %590 = vmatpush1.msra.mxu0 %v569
        %591 = vmatprep.subr.mxu0 0.0
        %592 = vmatpush1.msra.mxu0 %v570
        %593 = vmatprep.subr.mxu0 0.0
        %594 = vmatpush1.msra.mxu0 %v571
        %595 = vmatprep.subr.mxu0 0.0
        %596 = vmatpush1.msra.mxu0 %v572
        %597 = vmatprep.subr.mxu0 0.0
        %598 = vmatpush1.msra.mxu0 %v573
        %599 = vmatprep.subr.mxu0 0.0
        %600 = vmatpush1.msra.mxu0 %v574
        %601 = vmatprep.subr.mxu0 0.0
        %602 = vmatpush1.msra.mxu0 %v575
        %603 = vmatprep.subr.mxu0 0.0
        %604 = vmatpush1.msra.mxu0 %v576
        %605 = vmatprep.subr.mxu0 0.0
        %606 = vmatpush1.msra.mxu0 %v577
        %607 = vmatprep.subr.mxu0 0.0
        %608 = vmatpush1.msra.mxu0 %v578
        %609 = vmatprep.subr.mxu0 0.0
        %610 = vmatpush1.msra.mxu0 %v579
        %611 = vmatprep.subr.mxu0 0.0
        %612 = vmatpush1.msra.mxu0 %v580
        %613 = vmatprep.subr.mxu0 0.0
        %614 = vmatpush1.msra.mxu0 0.0
        %615 = vmatprep.subr.mxu0 0.0
        %616 = vmatpush1.msra.mxu0 0.0
        %617 = vmatprep.subr.mxu0 0.0
        %618 = vmatpush1.msra.mxu0 0.0
        %619 = vmatprep.subr.mxu0 0.0
        %620 = vmatpush1.msra.mxu0 0.0
        %621 = vmatprep.subr.mxu0 0.0
        %622 = vmatpush1.msra.mxu0 0.0
        %623 = vmatprep.subr.mxu0 0.0
        %624 = vmatpush1.msra.mxu0 0.0
        %625 = vmatprep.subr.mxu0 0.0
        %626 = vmatpush1.msra.mxu0 0.0
        %627 = vmatprep.subr.mxu0 0.0
        %628 = vmatpush1.msra.mxu0 0.0
        %629 = vmatprep.subr.mxu0 0.0
        %630 = vmatpush1.msra.mxu0 0.0
        %631 = vmatprep.subr.mxu0 0.0
        %632 = vmatpush1.msra.mxu0 0.0
        %633 = vmatprep.subr.mxu0 0.0
        %634 = vmatpush1.msra.mxu0 0.0
        %635 = vmatprep.subr.mxu0 0.0
        %636 = vmatpush1.msra.mxu0 0.0
        %637 = vmatprep.subr.mxu0 0.0
        %638 = vmatpush1.msra.mxu0 0.0
        %639 = vmatprep.subr.mxu0 0.0
        %640 = vmatpush1.msra.mxu0 0.0
        %641 = vmatprep.subr.mxu0 0.0
        %642 = vmatpush1.msra.mxu0 0.0
        %643 = vmatprep.subr.mxu0 0.0
        %644 = vmatpush1.msra.mxu0 0.0
        %645 = vmatprep.mubr.f32.mxu0 0.0
        %646 = vmatmul.mubr.f32.gmra.mrb[0].mxu0 %v561
        %v647 = vpop.f32.mrb[0].mxu0
        %v648 = vadd.f32 0.0, %v647
        %v649 = vpop.f32.mrb[0].mxu0
        %650 = vmatprep.mubr.f32.mxu0 0.0
        %651 = vmatmul.mubr.f32.gmra.mrb[0].mxu0 %v562
        %v652 = vpop.f32.mrb[0].mxu0
        %v653 = vadd.f32 0.0, %v652
        %v654 = vpop.f32.mrb[0].mxu0
        %655 = vdwg.mxu0
        %v656 = vadd.f32 %v563, %v648
        %v657 = vadd.f32 %v564, %v653
        %658 = vst.msk [vmem:[#allocation2] sm:$0xff] %vm479, %v656
        %659 = vst.msk [vmem:[#allocation2 + $0x8] sm:$0xff] %vm479, %v657
        %p660 = scmp.eq.s32.totalorder %s36, 1
        // Predicated region
        $region81: #{encoder_layer.7} parent=47 // pred_check
          %p661 = pneg %p660
        $region82: #{encoder_layer.7} parent=47 // pred_check_branch
          %663 = sbr.rel (%p661) target = $region84
        $region83: #{encoder_layer.7} parent=47 // pred_region
          %v664 = vld [vmem:[#allocation2] sm:$0xff]
          %v665 = vld [vmem:[#allocation2 + $0x8] sm:$0xff]
          %v666 = vld [vmem:[#allocation11] sm:$0x1]
          %v668 = vlaneseq
          %v669 = vshrl.u32 %v668, 7
          %v670 = vsub.s32 0, %v669
          %v671 = vrot.slane %v666, %v670
          %v673 = vadd.f32 %v664, %v671
          %v674 = vadd.f32 %v665, %v671
          %v675 = vadd.f32 %v673, %v466
          %v676 = vadd.f32 %v674, %v467
          %v677 = vld [vmem:[#allocation12] sm:$0x1]
          %v678 = vld [vmem:[#allocation14] sm:$0x1]
          %v679 = vsel %vm479, %v675, 0.0
          %680 = vadd.xlane.f32.xlu0 %v679
          %v681 = vpop.xlane.xlu0 %680
          %v682 = vsel %vm479, %v676, 0.0
          %683 = vadd.xlane.f32.xlu0 %v682
          %v684 = vpop.xlane.xlu0 %683
          %v685 = vrcp.pop 32.0
          %v686 = vmul.f32 %v681, %v685
          %v687 = vmul.f32 %v684, %v685
          %v688 = vsub.f32 %v675, %v686
          %v689 = vsub.f32 %v676, %v687
          %v690 = vmul.f32 %v688, %v688
          %v691 = vmul.f32 %v689, %v689
          %v692 = vsel %vm479, %v690, 0.0
          %693 = vadd.xlane.f32.xlu0 %v692
          %v694 = vpop.xlane.xlu0 %693
          %v695 = vsel %vm479, %v691, 0.0
          %696 = vadd.xlane.f32.xlu0 %v695
          %v697 = vpop.xlane.xlu0 %696
          %v698 = vmul.f32 %v694, %v685
          %v699 = vmul.f32 %v697, %v685
          %v700 = vadd.f32 %v698, 1e-05
          %v701 = vadd.f32 %v699, 1e-05
          %v702 = vrsqrt.pop %v700
          %v703 = vrsqrt.pop %v701
          %v704 = vmul.f32 %v688, %v702
          %v705 = vmul.f32 %v689, %v703
          %v707 = vlaneseq
          %v708 = vshrl.u32 %v707, 7
          %v709 = vsub.s32 0, %v708
          %v710 = vrot.slane %v677, %v709
          %v712 = vmul.f32 %v704, %v710
          %v713 = vmul.f32 %v705, %v710
          %v715 = vlaneseq
          %v716 = vshrl.u32 %v715, 7
          %v717 = vsub.s32 0, %v716
          %v718 = vrot.slane %v678, %v717
          %v720 = vadd.f32 %v712, %v718
          %v721 = vadd.f32 %v713, %v718
          %722 = vst.msk [vmem:[%s455] sm:$0xff] %vm479, %v720
          %723 = vst.msk [vmem:[%s455 + $0x8] sm:$0xff] %vm479, %v721
        $region84: #{encoder_layer.7} parent=47 // pred_fallthru
          _
        %s724 = sand.u32 %s218, 1
        %s725 = scalar_lea.sflag [#allocation5], %s724
        %s726 = sand.u32 %s218, 1
        %s727 = smul.addr %s726, 16
        %s728 = scalar_lea.vmem [#allocation15], %s727
        // Predicated region
        $region85: #{encoder_layer.7} parent=47 // pred_check
          %p729 = pneg %p228
        $region86: #{encoder_layer.7} parent=47 // pred_check_branch
          %731 = sbr.rel (%p729) target = $region88
        $region87: #{encoder_layer.7} parent=47 // pred_region
          %s732 = smul.u32 2, %s35
          %s734 = ssub.s32 256, 256
          %735 = vsyncadd %s725, %s734
          %s736 = smul.addr %s732, 128
          %s737 = scalar_lea.hbm %s7, %s736
          %s738 = sshll.u32 %s728, 4
          %s739 = int_to_ptr.vmem [resolvable:$true] %s738
          %744 = dma.vmem_to_hbm [thread:$0]  %s739, 256, %s737, %s725, 128, 128, 8
        $region88: #{encoder_layer.7} parent=47 // pred_fallthru
          _
      $region48: #{encoder_layer.7} parent=5 // pred_fallthru
        _
      %p745 = scmp.le.s32.totalorder 2, %s26
      // Predicated region
      $region89: #{encoder_layer.7} parent=5 // pred_check
        %p746 = pneg %p745
      $region90: #{encoder_layer.7} parent=5 // pred_check_branch
        %748 = sbr.rel (%p746) target = $region92
      $region91: #{encoder_layer.7} parent=5 // pred_region
        %s749 = ssub.s32 %s26, 2
        // Predicated region
        $region93: #{encoder_layer.7} parent=91 // pred_check
          %p750 = pneg %p234
        $region94: #{encoder_layer.7} parent=91 // pred_check_branch
          %752 = sbr.rel (%p750) target = $region96
        $region95: #{encoder_layer.7} parent=91 // pred_region
          %s753 = sand.u32 %s219, 1
          %s754 = scalar_lea.sflag [#allocation5], %s753
          %s755 = sand.u32 %s219, 1
          %s756 = smul.addr %s755, 16
          %s757 = scalar_lea.vmem [#allocation15], %s756
          %758 = dma.done %s754, 256
        $region96: #{encoder_layer.7} parent=91 // pred_fallthru
          _
      $region92: #{encoder_layer.7} parent=5 // pred_fallthru
        _
    $region6: #{encoder_layer.7} parent=1 // loop_footer
      %s30 = sadd.s32 1, %s26
    $region7: #{encoder_layer.7} parent=1 // loop_footer_branch
      %25 = sbr.rel target = $region3
    $region8: #{encoder_layer.7} parent=1 // loop_exit
      _
    %759 = vsyncpa [#allocation4], 1
    %s760 = scalar_lea.sflag [#allocation4], 1
    %761 = vsyncpa %s760, 1
    %762 = vsyncpa [#allocation7], 1
    %s763 = scalar_lea.sflag [#allocation7], 1
    %764 = vsyncpa %s763, 1
    %765 = vsyncpa [#allocation10], 1
    %s766 = scalar_lea.sflag [#allocation10], 1
    %767 = vsyncpa %s766, 1
    %768 = vsyncpa [#allocation13], 1
    %769 = vsyncpa [#allocation5], 1
    %s770 = scalar_lea.sflag [#allocation5], 1
    %771 = vsyncpa %s770, 1

</llo_original>
